<compile_context>
chip_gen: v7x
topology: tpu7x:2x2x1
jax: 0.10.0
libtpu: 0.0.40
codegen_flags: <defaults>
</compile_context>

<pallas_src>
import math
import functools

import jax
import jax.numpy as jnp
from jax.experimental import pallas as pl
from jax.experimental.pallas import tpu as pltpu


# ----------------------------------------------------------------------------
# Fused kernel: all LSTM layers + multi-head attention (last query) + fc.
# ----------------------------------------------------------------------------
def fused_transformer_rnn_kernel(num_layers, num_heads, x_ref, *refs):
    """Argument layout (after x_ref):
         for each layer l: wih_T (Din_l,4H), whh_T (H,4H), bias (1,4H)
         wq, wk, wv (E,E), bq, bk, bv (1,E),
         wo (E,E), bo (1,E), wfc (E,O), bfc (1,O),
         ind (E,nH), ind_t (nH,E),
         out_ref (B,O), hseq_scr (B,T,H) [VMEM scratch]
    Weights may be bf16 (MXU operands); biases / elementwise math stay f32.
    """
    lstm_refs = refs[: 3 * num_layers]
    (wq_ref, wk_ref, wv_ref, bq_ref, bk_ref, bv_ref,
     wo_ref, bo_ref, wfc_ref, bfc_ref, ind_ref, indt_ref,
     out_ref, hseq_scr) = refs[3 * num_layers:]

    B, T, _ = x_ref.shape
    H = hseq_scr.shape[2]
    E = H
    nH = num_heads
    hd = E // nH
    scale = 1.0 / math.sqrt(hd)

    # ---------------- LSTM stack (activations stay in VMEM / vregs) ----------
    cur = x_ref[...]                                          # (B, T, Din)
    for l in range(num_layers):
        wih = lstm_refs[3 * l][...]                           # (Din_l, 4H)
        whh = lstm_refs[3 * l + 1][...]                       # (H, 4H)
        bias = lstm_refs[3 * l + 2][...]                      # (1, 4H) f32
        din = wih.shape[0]

        # Hoisted input projection: one big matmul instead of T tiny ones.
        xflat = cur.reshape(B * T, din)
        xproj = jnp.dot(xflat.astype(wih.dtype), wih,
                        preferred_element_type=jnp.float32) + bias   # (B*T, 4H)
        xproj = xproj.reshape(B, T, 4 * H)

        h = jnp.zeros((B, H), jnp.float32)
        c = jnp.zeros((B, H), jnp.float32)
        # Sequential recurrence: only h @ whh remains per step.
        # TODO(synk): could hold whh in MXU weight regs across steps via
        # pltpu.matmul_push_rhs/acc_lhs/pop if the bundle dump shows RHS pushes
        # on the critical path.
        for t in range(T):
            gates = xproj[:, t, :] + jnp.dot(h.astype(whh.dtype), whh,
                                             preferred_element_type=jnp.float32)
            i = jax.nn.sigmoid(gates[:, 0 * H:1 * H])
            f = jax.nn.sigmoid(gates[:, 1 * H:2 * H])
            g = jnp.tanh(gates[:, 2 * H:3 * H])
            o = jax.nn.sigmoid(gates[:, 3 * H:4 * H])
            c = f * c + i * g
            h = o * jnp.tanh(c)
            hseq_scr[:, t, :] = h
        cur = hseq_scr[...]                                   # (B, T, H)

    # ---------------- Multi-head self-attention, last query row only --------
    hseq = cur                                                # (B, T, E)
    wq = wq_ref[...]; wk = wk_ref[...]; wv = wv_ref[...]
    ind = ind_ref[...]                                        # (E, nH)
    ind_t = indt_ref[...]                                     # (nH, E)

    h2 = hseq.reshape(B * T, E).astype(wk.dtype)
    k = jnp.dot(h2, wk, preferred_element_type=jnp.float32) + bk_ref[...]   # (B*T, E)
    v = jnp.dot(h2, wv, preferred_element_type=jnp.float32) + bv_ref[...]   # (B*T, E)

    q_last = hseq[:, T - 1, :]                                # (B, E)
    q = (jnp.dot(q_last.astype(wq.dtype), wq,
                 preferred_element_type=jnp.float32) + bq_ref[...]) * scale  # (B, E)

    k3 = k.reshape(B, T, E)
    v3 = v.reshape(B, T, E)

    # Per-head scores via elementwise product + group-sum matmul (no head loop).
    qk = jnp.expand_dims(q, 1) * k3                           # (B, T, E)
    s = jnp.dot(qk.reshape(B * T, E).astype(ind.dtype), ind,
                preferred_element_type=jnp.float32).reshape(B, T, nH)

    # Softmax over keys (T axis), per (batch, head).
    m = jnp.max(s, axis=1, keepdims=True)
    p = jnp.exp(s - m)
    denom = jnp.sum(p, axis=1, keepdims=True)
    p = p / denom                                             # (B, T, nH)

    # Broadcast head probabilities back to E lanes, weight V, reduce over T.
    pe = jnp.dot(p.reshape(B * T, nH).astype(ind_t.dtype), ind_t,
                 preferred_element_type=jnp.float32).reshape(B, T, E)
    ctx = jnp.sum(pe * v3, axis=1)                            # (B, E)

    wo = wo_ref[...]
    attn = jnp.dot(ctx.astype(wo.dtype), wo,
                   preferred_element_type=jnp.float32) + bo_ref[...]         # (B, E)

    wfc = wfc_ref[...]
    out = jnp.dot(attn.astype(wfc.dtype), wfc,
                  preferred_element_type=jnp.float32) + bfc_ref[...]         # (B, O)
    out_ref[...] = out.astype(out_ref.dtype)


# ----------------------------------------------------------------------------
# One-time parameter preparation (transposes, bias sums, head indicator, casts)
# ----------------------------------------------------------------------------
def prepare_params(params, num_heads, use_bf16=False):
    """Produce kernel-ready weights ONCE so the per-call graph has no
    transpose/slice ops. use_bf16=True casts MXU operands to bfloat16
    (f32 accumulate) — the preferred path on v6e / v7x."""
    wdt = jnp.bfloat16 if use_bf16 else jnp.float32
    prep = {"lstm": [], "num_heads": num_heads}
    for (wih, whh, bih, bhh) in params["lstm"]:
        prep["lstm"].append((
            jnp.asarray(wih.T, wdt),
            jnp.asarray(whh.T, wdt),
            jnp.asarray((bih + bhh)[None, :], jnp.float32),
        ))
    E = params["out_proj_w"].shape[0]
    ipw, ipb = params["in_proj_w"], params["in_proj_b"]
    prep["wq"] = jnp.asarray(ipw[0:E].T, wdt)
    prep["wk"] = jnp.asarray(ipw[E:2 * E].T, wdt)
    prep["wv"] = jnp.asarray(ipw[2 * E:3 * E].T, wdt)
    prep["bq"] = jnp.asarray(ipb[0:E][None, :], jnp.float32)
    prep["bk"] = jnp.asarray(ipb[E:2 * E][None, :], jnp.float32)
    prep["bv"] = jnp.asarray(ipb[2 * E:3 * E][None, :], jnp.float32)
    prep["wo"] = jnp.asarray(params["out_proj_w"].T, wdt)
    prep["bo"] = jnp.asarray(params["out_proj_b"][None, :], jnp.float32)
    prep["wfc"] = jnp.asarray(params["fc_w"].T, wdt)
    prep["bfc"] = jnp.asarray(params["fc_b"][None, :], jnp.float32)

    hd = E // num_heads
    lane = jnp.arange(E)[:, None] // hd                        # (E, 1)
    head = jnp.arange(num_heads)[None, :]                      # (1, nH)
    ind = (lane == head).astype(wdt)                           # (E, nH)
    prep["ind"] = ind
    prep["ind_t"] = jnp.asarray(ind.T)                         # (nH, E)
    return prep


# ----------------------------------------------------------------------------
# Forward wrapper: ONE pallas_call, whole arrays resident in VMEM, no grid.
# Total footprint (weights + activations + scratch) is a few tens of KB,
# far below VMEM on v5e/v6e (128 MiB) and v7x (64 MiB) — no tiling needed.
# ----------------------------------------------------------------------------
def transformer_rnn_forward(x, prep):
    num_layers = len(prep["lstm"])
    num_heads = prep["num_heads"]
    B, T, _ = x.shape
    H = prep["lstm"][-1][1].shape[0]       # whh_T has shape (H, 4H)
    O = prep["wfc"].shape[1]

    args = [x]
    for (wih, whh, b) in prep["lstm"]:
        args += [wih, whh, b]
    args += [prep["wq"], prep["wk"], prep["wv"],
             prep["bq"], prep["bk"], prep["bv"],
             prep["wo"], prep["bo"], prep["wfc"], prep["bfc"],
             prep["ind"], prep["ind_t"]]

    vmem = pl.BlockSpec(memory_space=pltpu.MemorySpace.VMEM)
    return pl.pallas_call(
        functools.partial(fused_transformer_rnn_kernel, num_layers, num_heads),
        out_shape=jax.ShapeDtypeStruct((B, O), jnp.float32),
        in_specs=[vmem] * len(args),
        out_specs=vmem,
        scratch_shapes=[pltpu.VMEM((B, T, H), jnp.float32)],
    )(*args)


# ----------------------------------------------------------------------------
# Pure-JAX reference (mirrors PyTorch semantics) for verification
# ----------------------------------------------------------------------------
def lstm_layer_ref(x, wih, whh, bih, bhh):
    B, T, _ = x.shape
    H = whh.shape[1]

    def step(carry, xt):
        h, c = carry
        gates = xt @ wih.T + h @ whh.T + bih + bhh
        i = jax.nn.sigmoid(gates[:, 0 * H:1 * H])
        f = jax.nn.sigmoid(gates[:, 1 * H:2 * H])
        g = jnp.tanh(gates[:, 2 * H:3 * H])
        o = jax.nn.sigmoid(gates[:, 3 * H:4 * H])
        c = f * c + i * g
        h = o * jnp.tanh(c)
        return (h, c), h

    init = (jnp.zeros((B, H), jnp.float32), jnp.zeros((B, H), jnp.float32))
    _, hs = jax.lax.scan(step, init, jnp.swapaxes(x, 0, 1))
    return jnp.swapaxes(hs, 0, 1)


def transformer_rnn_ref(x, params, num_heads):
    h = x
    for (wih, whh, bih, bhh) in params["lstm"]:
        h = lstm_layer_ref(h, wih, whh, bih, bhh)
    B, T, E = h.shape
    hd = E // num_heads
    wq, wk, wv = (params["in_proj_w"][0:E],
                  params["in_proj_w"][E:2 * E],
                  params["in_proj_w"][2 * E:3 * E])
    bq, bk, bv = (params["in_proj_b"][0:E],
                  params["in_proj_b"][E:2 * E],
                  params["in_proj_b"][2 * E:3 * E])
    q = (h @ wq.T + bq).reshape(B, T, num_heads, hd).transpose(0, 2, 1, 3)
    k = (h @ wk.T + bk).reshape(B, T, num_heads, hd).transpose(0, 2, 1, 3)
    v = (h @ wv.T + bv).reshape(B, T, num_heads, hd).transpose(0, 2, 1, 3)
    s = (q @ jnp.swapaxes(k, -1, -2)) / math.sqrt(hd)
    p = jax.nn.softmax(s, axis=-1)
    ctx = (p @ v).transpose(0, 2, 1, 3).reshape(B, T, E)
    attn = ctx @ params["out_proj_w"].T + params["out_proj_b"]
    last = attn[:, -1, :]
    return last @ params["fc_w"].T + params["fc_b"]


# ----------------------------------------------------------------------------
# Deterministic parameter init (PyTorch-like uniform ranges)
# ----------------------------------------------------------------------------
def init_params(key, input_size, hidden_size, num_layers, output_size):
    params = {"lstm": []}
    s = 1.0 / math.sqrt(hidden_size)
    for l in range(num_layers):
        in_l = input_size if l == 0 else hidden_size
        key, k1, k2, k3, k4 = jax.random.split(key, 5)
        params["lstm"].append((
            jax.random.uniform(k1, (4 * hidden_size, in_l), jnp.float32, -s, s),
            jax.random.uniform(k2, (4 * hidden_size, hidden_size), jnp.float32, -s, s),
            jax.random.uniform(k3, (4 * hidden_size,), jnp.float32, -s, s),
            jax.random.uniform(k4, (4 * hidden_size,), jnp.float32, -s, s),
        ))
    E = hidden_size
    key, k1, k2, k3, k4 = jax.random.split(key, 5)
    se = 1.0 / math.sqrt(E)
    params["in_proj_w"] = jax.random.uniform(k1, (3 * E, E), jnp.float32, -se, se)
    params["in_proj_b"] = jnp.zeros((3 * E,), jnp.float32)
    params["out_proj_w"] = jax.random.uniform(k2, (E, E), jnp.float32, -se, se)
    params["out_proj_b"] = jnp.zeros((E,), jnp.float32)
    params["fc_w"] = jax.random.uniform(k3, (output_size, E), jnp.float32, -se, se)
    params["fc_b"] = jax.random.uniform(k4, (output_size,), jnp.float32, -se, se)
    return params


# ----------------------------------------------------------------------------
if __name__ == "__main__":
    B, T = 2, 8
    input_size, hidden_size, num_layers, num_heads, output_size = 16, 32, 2, 4, 8

    key = jax.random.PRNGKey(0)
    kx, kp = jax.random.split(key)
    x = jax.random.normal(kx, (B, T, input_size), jnp.float32)
    params = init_params(kp, input_size, hidden_size, num_layers, output_size)

    ref = jax.block_until_ready(transformer_rnn_ref(x, params, num_heads))

    # Exact f32-MXU path (tight tolerance).
    prep_f32 = prepare_params(params, num_heads, use_bf16=False)
    out_f32 = jax.block_until_ready(transformer_rnn_forward(x, prep_f32))
    assert out_f32.shape == (B, output_size)
    assert jnp.allclose(out_f32, ref, atol=5e-3, rtol=5e-3), (out_f32, ref)

    # bf16-MXU-operand / f32-accumulate path (perf path on v6e/v7x).
    prep_bf16 = prepare_params(params, num_heads, use_bf16=True)
    out_bf16 = jax.block_until_ready(transformer_rnn_forward(x, prep_bf16))
    assert out_bf16.shape == (B, output_size)
    assert jnp.allclose(out_bf16, ref, atol=3e-2, rtol=3e-2), (out_bf16, ref)

    print("KERNEL_OK")
</pallas_src>

<mosaic_0001>
module attributes {stable_mosaic.version = 11 : i64} {
  func.func @fused_transformer_rnn_kernel(%arg0: memref<2x8x16xf32, #tpu.memory_space<vmem>>, %arg1: memref<16x128xf32, #tpu.memory_space<vmem>>, %arg2: memref<32x128xf32, #tpu.memory_space<vmem>>, %arg3: memref<1x128xf32, #tpu.memory_space<vmem>>, %arg4: memref<32x128xf32, #tpu.memory_space<vmem>>, %arg5: memref<32x128xf32, #tpu.memory_space<vmem>>, %arg6: memref<1x128xf32, #tpu.memory_space<vmem>>, %arg7: memref<32x32xf32, #tpu.memory_space<vmem>>, %arg8: memref<32x32xf32, #tpu.memory_space<vmem>>, %arg9: memref<32x32xf32, #tpu.memory_space<vmem>>, %arg10: memref<1x32xf32, #tpu.memory_space<vmem>>, %arg11: memref<1x32xf32, #tpu.memory_space<vmem>>, %arg12: memref<1x32xf32, #tpu.memory_space<vmem>>, %arg13: memref<32x32xf32, #tpu.memory_space<vmem>>, %arg14: memref<1x32xf32, #tpu.memory_space<vmem>>, %arg15: memref<32x8xf32, #tpu.memory_space<vmem>>, %arg16: memref<1x8xf32, #tpu.memory_space<vmem>>, %arg17: memref<32x4xf32, #tpu.memory_space<vmem>>, %arg18: memref<4x32xf32, #tpu.memory_space<vmem>>, %arg19: memref<2x8xf32, #tpu.memory_space<vmem>>, %arg20: memref<2x8x32xf32, #tpu.memory_space<vmem>>) attributes {dimension_semantics = [], scalar_prefetch = 0 : i64, scratch_operands = 1 : i64, tpu.core_type = #tpu.core_type<tc>} {
    %c0 = arith.constant 0 : index
    %c0_0 = arith.constant 0 : index
    %c0_1 = arith.constant 0 : index
    %0 = vector.load %arg0[%c0, %c0_0, %c0_1] : memref<2x8x16xf32, #tpu.memory_space<vmem>>, vector<2x8x16xf32>
    %c0_2 = arith.constant 0 : index
    %c0_3 = arith.constant 0 : index
    %1 = vector.load %arg1[%c0_2, %c0_3] : memref<16x128xf32, #tpu.memory_space<vmem>>, vector<16x128xf32>
    %c0_4 = arith.constant 0 : index
    %c0_5 = arith.constant 0 : index
    %2 = vector.load %arg2[%c0_4, %c0_5] : memref<32x128xf32, #tpu.memory_space<vmem>>, vector<32x128xf32>
    %c0_6 = arith.constant 0 : index
    %c0_7 = arith.constant 0 : index
    %3 = vector.load %arg3[%c0_6, %c0_7] : memref<1x128xf32, #tpu.memory_space<vmem>>, vector<1x128xf32>
    %4 = vector.shape_cast %0 : vector<2x8x16xf32> to vector<16x16xf32>
    %cst = arith.constant dense<0.000000e+00> : vector<16x128xf32>
    %5 = tpu.matmul %4, %1, %cst {dimension_numbers = #tpu.dot_dimension_numbers<[1], [0], [0], [1], [0, 0, 1, 1], [], []>} : vector<16x16xf32>, vector<16x128xf32>, vector<16x128xf32> -> vector<16x128xf32>
    %6 = vector.broadcast %3 : vector<1x128xf32> to vector<16x128xf32>
    %7 = arith.addf %5, %6 : vector<16x128xf32>
    %8 = vector.shape_cast %7 : vector<16x128xf32> to vector<2x8x128xf32>
    %cst_8 = arith.constant 0.000000e+00 : f32
    %9 = vector.broadcast %cst_8 : f32 to vector<2x32xf32>
    %cst_9 = arith.constant 0.000000e+00 : f32
    %10 = vector.broadcast %cst_9 : f32 to vector<2x32xf32>
    %11 = vector.extract_strided_slice %8 {offsets = [0, 0, 0], sizes = [2, 1, 128], strides = [1, 1, 1]} : vector<2x8x128xf32> to vector<2x1x128xf32>
    %12 = vector.shape_cast %11 : vector<2x1x128xf32> to vector<2x128xf32>
    %cst_10 = arith.constant dense<0.000000e+00> : vector<2x128xf32>
    %13 = tpu.matmul %9, %2, %cst_10 {dimension_numbers = #tpu.dot_dimension_numbers<[1], [0], [0], [1], [0, 0, 1, 1], [], []>} : vector<2x32xf32>, vector<32x128xf32>, vector<2x128xf32> -> vector<2x128xf32>
    %14 = arith.addf %12, %13 : vector<2x128xf32>
    %15 = vector.extract_strided_slice %14 {offsets = [0, 0], sizes = [2, 32], strides = [1, 1]} : vector<2x128xf32> to vector<2x32xf32>
    %16 = arith.negf %15 : vector<2x32xf32>
    %17 = math.exp %16 : vector<2x32xf32>
    %cst_11 = arith.constant 1.000000e+00 : f32
    %18 = vector.broadcast %cst_11 : f32 to vector<2x32xf32>
    %19 = arith.addf %18, %17 : vector<2x32xf32>
    %20 = arith.divf %18, %19 : vector<2x32xf32>
    %21 = vector.extract_strided_slice %14 {offsets = [0, 32], sizes = [2, 32], strides = [1, 1]} : vector<2x128xf32> to vector<2x32xf32>
    %22 = arith.negf %21 : vector<2x32xf32>
    %23 = math.exp %22 : vector<2x32xf32>
    %cst_12 = arith.constant 1.000000e+00 : f32
    %24 = vector.broadcast %cst_12 : f32 to vector<2x32xf32>
    %25 = arith.addf %24, %23 : vector<2x32xf32>
    %26 = arith.divf %24, %25 : vector<2x32xf32>
    %27 = vector.extract_strided_slice %14 {offsets = [0, 64], sizes = [2, 32], strides = [1, 1]} : vector<2x128xf32> to vector<2x32xf32>
    %28 = math.tanh %27 : vector<2x32xf32>
    %29 = vector.extract_strided_slice %14 {offsets = [0, 96], sizes = [2, 32], strides = [1, 1]} : vector<2x128xf32> to vector<2x32xf32>
    %30 = arith.negf %29 : vector<2x32xf32>
    %31 = math.exp %30 : vector<2x32xf32>
    %cst_13 = arith.constant 1.000000e+00 : f32
    %32 = vector.broadcast %cst_13 : f32 to vector<2x32xf32>
    %33 = arith.addf %32, %31 : vector<2x32xf32>
    %34 = arith.divf %32, %33 : vector<2x32xf32>
    %35 = arith.mulf %26, %10 : vector<2x32xf32>
    %36 = arith.mulf %20, %28 : vector<2x32xf32>
    %37 = arith.addf %35, %36 : vector<2x32xf32>
    %38 = math.tanh %37 : vector<2x32xf32>
    %39 = arith.mulf %34, %38 : vector<2x32xf32>
    %c0_14 = arith.constant 0 : index
    %c0_15 = arith.constant 0 : index
    %c0_16 = arith.constant 0 : index
    %40 = vector.load %arg20[%c0_14, %c0_15, %c0_16] : memref<2x8x32xf32, #tpu.memory_space<vmem>>, vector<2x1x32xf32>
    %41 = vector.shape_cast %40 : vector<2x1x32xf32> to vector<2x32xf32>
    %42 = vector.shape_cast %39 : vector<2x32xf32> to vector<2x1x32xf32>
    tpu.vector_store %arg20[%c0_14, %c0_15, %c0_16], %42 {strides = array<i32>} : memref<2x8x32xf32, #tpu.memory_space<vmem>>, vector<2x1x32xf32>,
    %43 = vector.extract_strided_slice %8 {offsets = [0, 1, 0], sizes = [2, 1, 128], strides = [1, 1, 1]} : vector<2x8x128xf32> to vector<2x1x128xf32>
    %44 = vector.shape_cast %43 : vector<2x1x128xf32> to vector<2x128xf32>
    %cst_17 = arith.constant dense<0.000000e+00> : vector<2x128xf32>
    %45 = tpu.matmul %39, %2, %cst_17 {dimension_numbers = #tpu.dot_dimension_numbers<[1], [0], [0], [1], [0, 0, 1, 1], [], []>} : vector<2x32xf32>, vector<32x128xf32>, vector<2x128xf32> -> vector<2x128xf32>
    %46 = arith.addf %44, %45 : vector<2x128xf32>
    %47 = vector.extract_strided_slice %46 {offsets = [0, 0], sizes = [2, 32], strides = [1, 1]} : vector<2x128xf32> to vector<2x32xf32>
    %48 = arith.negf %47 : vector<2x32xf32>
    %49 = math.exp %48 : vector<2x32xf32>
    %cst_18 = arith.constant 1.000000e+00 : f32
    %50 = vector.broadcast %cst_18 : f32 to vector<2x32xf32>
    %51 = arith.addf %50, %49 : vector<2x32xf32>
    %52 = arith.divf %50, %51 : vector<2x32xf32>
    %53 = vector.extract_strided_slice %46 {offsets = [0, 32], sizes = [2, 32], strides = [1, 1]} : vector<2x128xf32> to vector<2x32xf32>
    %54 = arith.negf %53 : vector<2x32xf32>
    %55 = math.exp %54 : vector<2x32xf32>
    %cst_19 = arith.constant 1.000000e+00 : f32
    %56 = vector.broadcast %cst_19 : f32 to vector<2x32xf32>
    %57 = arith.addf %56, %55 : vector<2x32xf32>
    %58 = arith.divf %56, %57 : vector<2x32xf32>
    %59 = vector.extract_strided_slice %46 {offsets = [0, 64], sizes = [2, 32], strides = [1, 1]} : vector<2x128xf32> to vector<2x32xf32>
    %60 = math.tanh %59 : vector<2x32xf32>
    %61 = vector.extract_strided_slice %46 {offsets = [0, 96], sizes = [2, 32], strides = [1, 1]} : vector<2x128xf32> to vector<2x32xf32>
    %62 = arith.negf %61 : vector<2x32xf32>
    %63 = math.exp %62 : vector<2x32xf32>
    %cst_20 = arith.constant 1.000000e+00 : f32
    %64 = vector.broadcast %cst_20 : f32 to vector<2x32xf32>
    %65 = arith.addf %64, %63 : vector<2x32xf32>
    %66 = arith.divf %64, %65 : vector<2x32xf32>
    %67 = arith.mulf %58, %37 : vector<2x32xf32>
    %68 = arith.mulf %52, %60 : vector<2x32xf32>
    %69 = arith.addf %67, %68 : vector<2x32xf32>
    %70 = math.tanh %69 : vector<2x32xf32>
    %71 = arith.mulf %66, %70 : vector<2x32xf32>
    %c0_21 = arith.constant 0 : index
    %c1 = arith.constant 1 : index
    %c0_22 = arith.constant 0 : index
    %72 = vector.load %arg20[%c0_21, %c1, %c0_22] : memref<2x8x32xf32, #tpu.memory_space<vmem>>, vector<2x1x32xf32>
    %73 = vector.shape_cast %72 : vector<2x1x32xf32> to vector<2x32xf32>
    %74 = vector.shape_cast %71 : vector<2x32xf32> to vector<2x1x32xf32>
    tpu.vector_store %arg20[%c0_21, %c1, %c0_22], %74 {strides = array<i32>} : memref<2x8x32xf32, #tpu.memory_space<vmem>>, vector<2x1x32xf32>,
    %75 = vector.extract_strided_slice %8 {offsets = [0, 2, 0], sizes = [2, 1, 128], strides = [1, 1, 1]} : vector<2x8x128xf32> to vector<2x1x128xf32>
    %76 = vector.shape_cast %75 : vector<2x1x128xf32> to vector<2x128xf32>
    %cst_23 = arith.constant dense<0.000000e+00> : vector<2x128xf32>
    %77 = tpu.matmul %71, %2, %cst_23 {dimension_numbers = #tpu.dot_dimension_numbers<[1], [0], [0], [1], [0, 0, 1, 1], [], []>} : vector<2x32xf32>, vector<32x128xf32>, vector<2x128xf32> -> vector<2x128xf32>
    %78 = arith.addf %76, %77 : vector<2x128xf32>
    %79 = vector.extract_strided_slice %78 {offsets = [0, 0], sizes = [2, 32], strides = [1, 1]} : vector<2x128xf32> to vector<2x32xf32>
    %80 = arith.negf %79 : vector<2x32xf32>
    %81 = math.exp %80 : vector<2x32xf32>
    %cst_24 = arith.constant 1.000000e+00 : f32
    %82 = vector.broadcast %cst_24 : f32 to vector<2x32xf32>
    %83 = arith.addf %82, %81 : vector<2x32xf32>
    %84 = arith.divf %82, %83 : vector<2x32xf32>
    %85 = vector.extract_strided_slice %78 {offsets = [0, 32], sizes = [2, 32], strides = [1, 1]} : vector<2x128xf32> to vector<2x32xf32>
    %86 = arith.negf %85 : vector<2x32xf32>
    %87 = math.exp %86 : vector<2x32xf32>
    %cst_25 = arith.constant 1.000000e+00 : f32
    %88 = vector.broadcast %cst_25 : f32 to vector<2x32xf32>
    %89 = arith.addf %88, %87 : vector<2x32xf32>
    %90 = arith.divf %88, %89 : vector<2x32xf32>
    %91 = vector.extract_strided_slice %78 {offsets = [0, 64], sizes = [2, 32], strides = [1, 1]} : vector<2x128xf32> to vector<2x32xf32>
    %92 = math.tanh %91 : vector<2x32xf32>
    %93 = vector.extract_strided_slice %78 {offsets = [0, 96], sizes = [2, 32], strides = [1, 1]} : vector<2x128xf32> to vector<2x32xf32>
    %94 = arith.negf %93 : vector<2x32xf32>
    %95 = math.exp %94 : vector<2x32xf32>
    %cst_26 = arith.constant 1.000000e+00 : f32
    %96 = vector.broadcast %cst_26 : f32 to vector<2x32xf32>
    %97 = arith.addf %96, %95 : vector<2x32xf32>
    %98 = arith.divf %96, %97 : vector<2x32xf32>
    %99 = arith.mulf %90, %69 : vector<2x32xf32>
    %100 = arith.mulf %84, %92 : vector<2x32xf32>
    %101 = arith.addf %99, %100 : vector<2x32xf32>
    %102 = math.tanh %101 : vector<2x32xf32>
    %103 = arith.mulf %98, %102 : vector<2x32xf32>
    %c0_27 = arith.constant 0 : index
    %c2 = arith.constant 2 : index
    %c0_28 = arith.constant 0 : index
    %104 = vector.load %arg20[%c0_27, %c2, %c0_28] : memref<2x8x32xf32, #tpu.memory_space<vmem>>, vector<2x1x32xf32>
    %105 = vector.shape_cast %104 : vector<2x1x32xf32> to vector<2x32xf32>
    %106 = vector.shape_cast %103 : vector<2x32xf32> to vector<2x1x32xf32>
    tpu.vector_store %arg20[%c0_27, %c2, %c0_28], %106 {strides = array<i32>} : memref<2x8x32xf32, #tpu.memory_space<vmem>>, vector<2x1x32xf32>,
    %107 = vector.extract_strided_slice %8 {offsets = [0, 3, 0], sizes = [2, 1, 128], strides = [1, 1, 1]} : vector<2x8x128xf32> to vector<2x1x128xf32>
    %108 = vector.shape_cast %107 : vector<2x1x128xf32> to vector<2x128xf32>
    %cst_29 = arith.constant dense<0.000000e+00> : vector<2x128xf32>
    %109 = tpu.matmul %103, %2, %cst_29 {dimension_numbers = #tpu.dot_dimension_numbers<[1], [0], [0], [1], [0, 0, 1, 1], [], []>} : vector<2x32xf32>, vector<32x128xf32>, vector<2x128xf32> -> vector<2x128xf32>
    %110 = arith.addf %108, %109 : vector<2x128xf32>
    %111 = vector.extract_strided_slice %110 {offsets = [0, 0], sizes = [2, 32], strides = [1, 1]} : vector<2x128xf32> to vector<2x32xf32>
    %112 = arith.negf %111 : vector<2x32xf32>
    %113 = math.exp %112 : vector<2x32xf32>
    %cst_30 = arith.constant 1.000000e+00 : f32
    %114 = vector.broadcast %cst_30 : f32 to vector<2x32xf32>
    %115 = arith.addf %114, %113 : vector<2x32xf32>
    %116 = arith.divf %114, %115 : vector<2x32xf32>
    %117 = vector.extract_strided_slice %110 {offsets = [0, 32], sizes = [2, 32], strides = [1, 1]} : vector<2x128xf32> to vector<2x32xf32>
    %118 = arith.negf %117 : vector<2x32xf32>
    %119 = math.exp %118 : vector<2x32xf32>
    %cst_31 = arith.constant 1.000000e+00 : f32
    %120 = vector.broadcast %cst_31 : f32 to vector<2x32xf32>
    %121 = arith.addf %120, %119 : vector<2x32xf32>
    %122 = arith.divf %120, %121 : vector<2x32xf32>
    %123 = vector.extract_strided_slice %110 {offsets = [0, 64], sizes = [2, 32], strides = [1, 1]} : vector<2x128xf32> to vector<2x32xf32>
    %124 = math.tanh %123 : vector<2x32xf32>
    %125 = vector.extract_strided_slice %110 {offsets = [0, 96], sizes = [2, 32], strides = [1, 1]} : vector<2x128xf32> to vector<2x32xf32>
    %126 = arith.negf %125 : vector<2x32xf32>
    %127 = math.exp %126 : vector<2x32xf32>
    %cst_32 = arith.constant 1.000000e+00 : f32
    %128 = vector.broadcast %cst_32 : f32 to vector<2x32xf32>
    %129 = arith.addf %128, %127 : vector<2x32xf32>
    %130 = arith.divf %128, %129 : vector<2x32xf32>
    %131 = arith.mulf %122, %101 : vector<2x32xf32>
    %132 = arith.mulf %116, %124 : vector<2x32xf32>
    %133 = arith.addf %131, %132 : vector<2x32xf32>
    %134 = math.tanh %133 : vector<2x32xf32>
    %135 = arith.mulf %130, %134 : vector<2x32xf32>
    %c0_33 = arith.constant 0 : index
    %c3 = arith.constant 3 : index
    %c0_34 = arith.constant 0 : index
    %136 = vector.load %arg20[%c0_33, %c3, %c0_34] : memref<2x8x32xf32, #tpu.memory_space<vmem>>, vector<2x1x32xf32>
    %137 = vector.shape_cast %136 : vector<2x1x32xf32> to vector<2x32xf32>
    %138 = vector.shape_cast %135 : vector<2x32xf32> to vector<2x1x32xf32>
    tpu.vector_store %arg20[%c0_33, %c3, %c0_34], %138 {strides = array<i32>} : memref<2x8x32xf32, #tpu.memory_space<vmem>>, vector<2x1x32xf32>,
    %139 = vector.extract_strided_slice %8 {offsets = [0, 4, 0], sizes = [2, 1, 128], strides = [1, 1, 1]} : vector<2x8x128xf32> to vector<2x1x128xf32>
    %140 = vector.shape_cast %139 : vector<2x1x128xf32> to vector<2x128xf32>
    %cst_35 = arith.constant dense<0.000000e+00> : vector<2x128xf32>
    %141 = tpu.matmul %135, %2, %cst_35 {dimension_numbers = #tpu.dot_dimension_numbers<[1], [0], [0], [1], [0, 0, 1, 1], [], []>} : vector<2x32xf32>, vector<32x128xf32>, vector<2x128xf32> -> vector<2x128xf32>
    %142 = arith.addf %140, %141 : vector<2x128xf32>
    %143 = vector.extract_strided_slice %142 {offsets = [0, 0], sizes = [2, 32], strides = [1, 1]} : vector<2x128xf32> to vector<2x32xf32>
    %144 = arith.negf %143 : vector<2x32xf32>
    %145 = math.exp %144 : vector<2x32xf32>
    %cst_36 = arith.constant 1.000000e+00 : f32
    %146 = vector.broadcast %cst_36 : f32 to vector<2x32xf32>
    %147 = arith.addf %146, %145 : vector<2x32xf32>
    %148 = arith.divf %146, %147 : vector<2x32xf32>
    %149 = vector.extract_strided_slice %142 {offsets = [0, 32], sizes = [2, 32], strides = [1, 1]} : vector<2x128xf32> to vector<2x32xf32>
    %150 = arith.negf %149 : vector<2x32xf32>
    %151 = math.exp %150 : vector<2x32xf32>
    %cst_37 = arith.constant 1.000000e+00 : f32
    %152 = vector.broadcast %cst_37 : f32 to vector<2x32xf32>
    %153 = arith.addf %152, %151 : vector<2x32xf32>
    %154 = arith.divf %152, %153 : vector<2x32xf32>
    %155 = vector.extract_strided_slice %142 {offsets = [0, 64], sizes = [2, 32], strides = [1, 1]} : vector<2x128xf32> to vector<2x32xf32>
    %156 = math.tanh %155 : vector<2x32xf32>
    %157 = vector.extract_strided_slice %142 {offsets = [0, 96], sizes = [2, 32], strides = [1, 1]} : vector<2x128xf32> to vector<2x32xf32>
    %158 = arith.negf %157 : vector<2x32xf32>
    %159 = math.exp %158 : vector<2x32xf32>
    %cst_38 = arith.constant 1.000000e+00 : f32
    %160 = vector.broadcast %cst_38 : f32 to vector<2x32xf32>
    %161 = arith.addf %160, %159 : vector<2x32xf32>
    %162 = arith.divf %160, %161 : vector<2x32xf32>
    %163 = arith.mulf %154, %133 : vector<2x32xf32>
    %164 = arith.mulf %148, %156 : vector<2x32xf32>
    %165 = arith.addf %163, %164 : vector<2x32xf32>
    %166 = math.tanh %165 : vector<2x32xf32>
    %167 = arith.mulf %162, %166 : vector<2x32xf32>
    %c0_39 = arith.constant 0 : index
    %c4 = arith.constant 4 : index
    %c0_40 = arith.constant 0 : index
    %168 = vector.load %arg20[%c0_39, %c4, %c0_40] : memref<2x8x32xf32, #tpu.memory_space<vmem>>, vector<2x1x32xf32>
    %169 = vector.shape_cast %168 : vector<2x1x32xf32> to vector<2x32xf32>
    %170 = vector.shape_cast %167 : vector<2x32xf32> to vector<2x1x32xf32>
    tpu.vector_store %arg20[%c0_39, %c4, %c0_40], %170 {strides = array<i32>} : memref<2x8x32xf32, #tpu.memory_space<vmem>>, vector<2x1x32xf32>,
    %171 = vector.extract_strided_slice %8 {offsets = [0, 5, 0], sizes = [2, 1, 128], strides = [1, 1, 1]} : vector<2x8x128xf32> to vector<2x1x128xf32>
    %172 = vector.shape_cast %171 : vector<2x1x128xf32> to vector<2x128xf32>
    %cst_41 = arith.constant dense<0.000000e+00> : vector<2x128xf32>
    %173 = tpu.matmul %167, %2, %cst_41 {dimension_numbers = #tpu.dot_dimension_numbers<[1], [0], [0], [1], [0, 0, 1, 1], [], []>} : vector<2x32xf32>, vector<32x128xf32>, vector<2x128xf32> -> vector<2x128xf32>
    %174 = arith.addf %172, %173 : vector<2x128xf32>
    %175 = vector.extract_strided_slice %174 {offsets = [0, 0], sizes = [2, 32], strides = [1, 1]} : vector<2x128xf32> to vector<2x32xf32>
    %176 = arith.negf %175 : vector<2x32xf32>
    %177 = math.exp %176 : vector<2x32xf32>
    %cst_42 = arith.constant 1.000000e+00 : f32
    %178 = vector.broadcast %cst_42 : f32 to vector<2x32xf32>
    %179 = arith.addf %178, %177 : vector<2x32xf32>
    %180 = arith.divf %178, %179 : vector<2x32xf32>
    %181 = vector.extract_strided_slice %174 {offsets = [0, 32], sizes = [2, 32], strides = [1, 1]} : vector<2x128xf32> to vector<2x32xf32>
    %182 = arith.negf %181 : vector<2x32xf32>
    %183 = math.exp %182 : vector<2x32xf32>
    %cst_43 = arith.constant 1.000000e+00 : f32
    %184 = vector.broadcast %cst_43 : f32 to vector<2x32xf32>
    %185 = arith.addf %184, %183 : vector<2x32xf32>
    %186 = arith.divf %184, %185 : vector<2x32xf32>
    %187 = vector.extract_strided_slice %174 {offsets = [0, 64], sizes = [2, 32], strides = [1, 1]} : vector<2x128xf32> to vector<2x32xf32>
    %188 = math.tanh %187 : vector<2x32xf32>
    %189 = vector.extract_strided_slice %174 {offsets = [0, 96], sizes = [2, 32], strides = [1, 1]} : vector<2x128xf32> to vector<2x32xf32>
    %190 = arith.negf %189 : vector<2x32xf32>
    %191 = math.exp %190 : vector<2x32xf32>
    %cst_44 = arith.constant 1.000000e+00 : f32
    %192 = vector.broadcast %cst_44 : f32 to vector<2x32xf32>
    %193 = arith.addf %192, %191 : vector<2x32xf32>
    %194 = arith.divf %192, %193 : vector<2x32xf32>
    %195 = arith.mulf %186, %165 : vector<2x32xf32>
    %196 = arith.mulf %180, %188 : vector<2x32xf32>
    %197 = arith.addf %195, %196 : vector<2x32xf32>
    %198 = math.tanh %197 : vector<2x32xf32>
    %199 = arith.mulf %194, %198 : vector<2x32xf32>
    %c0_45 = arith.constant 0 : index
    %c5 = arith.constant 5 : index
    %c0_46 = arith.constant 0 : index
    %200 = vector.load %arg20[%c0_45, %c5, %c0_46] : memref<2x8x32xf32, #tpu.memory_space<vmem>>, vector<2x1x32xf32>
    %201 = vector.shape_cast %200 : vector<2x1x32xf32> to vector<2x32xf32>
    %202 = vector.shape_cast %199 : vector<2x32xf32> to vector<2x1x32xf32>
    tpu.vector_store %arg20[%c0_45, %c5, %c0_46], %202 {strides = array<i32>} : memref<2x8x32xf32, #tpu.memory_space<vmem>>, vector<2x1x32xf32>,
    %203 = vector.extract_strided_slice %8 {offsets = [0, 6, 0], sizes = [2, 1, 128], strides = [1, 1, 1]} : vector<2x8x128xf32> to vector<2x1x128xf32>
    %204 = vector.shape_cast %203 : vector<2x1x128xf32> to vector<2x128xf32>
    %cst_47 = arith.constant dense<0.000000e+00> : vector<2x128xf32>
    %205 = tpu.matmul %199, %2, %cst_47 {dimension_numbers = #tpu.dot_dimension_numbers<[1], [0], [0], [1], [0, 0, 1, 1], [], []>} : vector<2x32xf32>, vector<32x128xf32>, vector<2x128xf32> -> vector<2x128xf32>
    %206 = arith.addf %204, %205 : vector<2x128xf32>
    %207 = vector.extract_strided_slice %206 {offsets = [0, 0], sizes = [2, 32], strides = [1, 1]} : vector<2x128xf32> to vector<2x32xf32>
    %208 = arith.negf %207 : vector<2x32xf32>
    %209 = math.exp %208 : vector<2x32xf32>
    %cst_48 = arith.constant 1.000000e+00 : f32
    %210 = vector.broadcast %cst_48 : f32 to vector<2x32xf32>
    %211 = arith.addf %210, %209 : vector<2x32xf32>
    %212 = arith.divf %210, %211 : vector<2x32xf32>
    %213 = vector.extract_strided_slice %206 {offsets = [0, 32], sizes = [2, 32], strides = [1, 1]} : vector<2x128xf32> to vector<2x32xf32>
    %214 = arith.negf %213 : vector<2x32xf32>
    %215 = math.exp %214 : vector<2x32xf32>
    %cst_49 = arith.constant 1.000000e+00 : f32
    %216 = vector.broadcast %cst_49 : f32 to vector<2x32xf32>
    %217 = arith.addf %216, %215 : vector<2x32xf32>
    %218 = arith.divf %216, %217 : vector<2x32xf32>
    %219 = vector.extract_strided_slice %206 {offsets = [0, 64], sizes = [2, 32], strides = [1, 1]} : vector<2x128xf32> to vector<2x32xf32>
    %220 = math.tanh %219 : vector<2x32xf32>
    %221 = vector.extract_strided_slice %206 {offsets = [0, 96], sizes = [2, 32], strides = [1, 1]} : vector<2x128xf32> to vector<2x32xf32>
    %222 = arith.negf %221 : vector<2x32xf32>
    %223 = math.exp %222 : vector<2x32xf32>
    %cst_50 = arith.constant 1.000000e+00 : f32
    %224 = vector.broadcast %cst_50 : f32 to vector<2x32xf32>
    %225 = arith.addf %224, %223 : vector<2x32xf32>
    %226 = arith.divf %224, %225 : vector<2x32xf32>
    %227 = arith.mulf %218, %197 : vector<2x32xf32>
    %228 = arith.mulf %212, %220 : vector<2x32xf32>
    %229 = arith.addf %227, %228 : vector<2x32xf32>
    %230 = math.tanh %229 : vector<2x32xf32>
    %231 = arith.mulf %226, %230 : vector<2x32xf32>
    %c0_51 = arith.constant 0 : index
    %c6 = arith.constant 6 : index
    %c0_52 = arith.constant 0 : index
    %232 = vector.load %arg20[%c0_51, %c6, %c0_52] : memref<2x8x32xf32, #tpu.memory_space<vmem>>, vector<2x1x32xf32>
    %233 = vector.shape_cast %232 : vector<2x1x32xf32> to vector<2x32xf32>
    %234 = vector.shape_cast %231 : vector<2x32xf32> to vector<2x1x32xf32>
    tpu.vector_store %arg20[%c0_51, %c6, %c0_52], %234 {strides = array<i32>} : memref<2x8x32xf32, #tpu.memory_space<vmem>>, vector<2x1x32xf32>,
    %235 = vector.extract_strided_slice %8 {offsets = [0, 7, 0], sizes = [2, 1, 128], strides = [1, 1, 1]} : vector<2x8x128xf32> to vector<2x1x128xf32>
    %236 = vector.shape_cast %235 : vector<2x1x128xf32> to vector<2x128xf32>
    %cst_53 = arith.constant dense<0.000000e+00> : vector<2x128xf32>
    %237 = tpu.matmul %231, %2, %cst_53 {dimension_numbers = #tpu.dot_dimension_numbers<[1], [0], [0], [1], [0, 0, 1, 1], [], []>} : vector<2x32xf32>, vector<32x128xf32>, vector<2x128xf32> -> vector<2x128xf32>
    %238 = arith.addf %236, %237 : vector<2x128xf32>
    %239 = vector.extract_strided_slice %238 {offsets = [0, 0], sizes = [2, 32], strides = [1, 1]} : vector<2x128xf32> to vector<2x32xf32>
    %240 = arith.negf %239 : vector<2x32xf32>
    %241 = math.exp %240 : vector<2x32xf32>
    %cst_54 = arith.constant 1.000000e+00 : f32
    %242 = vector.broadcast %cst_54 : f32 to vector<2x32xf32>
    %243 = arith.addf %242, %241 : vector<2x32xf32>
    %244 = arith.divf %242, %243 : vector<2x32xf32>
    %245 = vector.extract_strided_slice %238 {offsets = [0, 32], sizes = [2, 32], strides = [1, 1]} : vector<2x128xf32> to vector<2x32xf32>
    %246 = arith.negf %245 : vector<2x32xf32>
    %247 = math.exp %246 : vector<2x32xf32>
    %cst_55 = arith.constant 1.000000e+00 : f32
    %248 = vector.broadcast %cst_55 : f32 to vector<2x32xf32>
    %249 = arith.addf %248, %247 : vector<2x32xf32>
    %250 = arith.divf %248, %249 : vector<2x32xf32>
    %251 = vector.extract_strided_slice %238 {offsets = [0, 64], sizes = [2, 32], strides = [1, 1]} : vector<2x128xf32> to vector<2x32xf32>
    %252 = math.tanh %251 : vector<2x32xf32>
    %253 = vector.extract_strided_slice %238 {offsets = [0, 96], sizes = [2, 32], strides = [1, 1]} : vector<2x128xf32> to vector<2x32xf32>
    %254 = arith.negf %253 : vector<2x32xf32>
    %255 = math.exp %254 : vector<2x32xf32>
    %cst_56 = arith.constant 1.000000e+00 : f32
    %256 = vector.broadcast %cst_56 : f32 to vector<2x32xf32>
    %257 = arith.addf %256, %255 : vector<2x32xf32>
    %258 = arith.divf %256, %257 : vector<2x32xf32>
    %259 = arith.mulf %250, %229 : vector<2x32xf32>
    %260 = arith.mulf %244, %252 : vector<2x32xf32>
    %261 = arith.addf %259, %260 : vector<2x32xf32>
    %262 = math.tanh %261 : vector<2x32xf32>
    %263 = arith.mulf %258, %262 : vector<2x32xf32>
    %c0_57 = arith.constant 0 : index
    %c7 = arith.constant 7 : index
    %c0_58 = arith.constant 0 : index
    %264 = vector.load %arg20[%c0_57, %c7, %c0_58] : memref<2x8x32xf32, #tpu.memory_space<vmem>>, vector<2x1x32xf32>
    %265 = vector.shape_cast %264 : vector<2x1x32xf32> to vector<2x32xf32>
    %266 = vector.shape_cast %263 : vector<2x32xf32> to vector<2x1x32xf32>
    tpu.vector_store %arg20[%c0_57, %c7, %c0_58], %266 {strides = array<i32>} : memref<2x8x32xf32, #tpu.memory_space<vmem>>, vector<2x1x32xf32>,
    %c0_59 = arith.constant 0 : index
    %c0_60 = arith.constant 0 : index
    %c0_61 = arith.constant 0 : index
    %267 = vector.load %arg20[%c0_59, %c0_60, %c0_61] : memref<2x8x32xf32, #tpu.memory_space<vmem>>, vector<2x8x32xf32>
    %c0_62 = arith.constant 0 : index
    %c0_63 = arith.constant 0 : index
    %268 = vector.load %arg4[%c0_62, %c0_63] : memref<32x128xf32, #tpu.memory_space<vmem>>, vector<32x128xf32>
    %c0_64 = arith.constant 0 : index
    %c0_65 = arith.constant 0 : index
    %269 = vector.load %arg5[%c0_64, %c0_65] : memref<32x128xf32, #tpu.memory_space<vmem>>, vector<32x128xf32>
    %c0_66 = arith.constant 0 : index
    %c0_67 = arith.constant 0 : index
    %270 = vector.load %arg6[%c0_66, %c0_67] : memref<1x128xf32, #tpu.memory_space<vmem>>, vector<1x128xf32>
    %271 = vector.shape_cast %267 : vector<2x8x32xf32> to vector<16x32xf32>
    %cst_68 = arith.constant dense<0.000000e+00> : vector<16x128xf32>
    %272 = tpu.matmul %271, %268, %cst_68 {dimension_numbers = #tpu.dot_dimension_numbers<[1], [0], [0], [1], [0, 0, 1, 1], [], []>} : vector<16x32xf32>, vector<32x128xf32>, vector<16x128xf32> -> vector<16x128xf32>
    %273 = vector.broadcast %270 : vector<1x128xf32> to vector<16x128xf32>
    %274 = arith.addf %272, %273 : vector<16x128xf32>
    %275 = vector.shape_cast %274 : vector<16x128xf32> to vector<2x8x128xf32>
    %cst_69 = arith.constant 0.000000e+00 : f32
    %276 = vector.broadcast %cst_69 : f32 to vector<2x32xf32>
    %cst_70 = arith.constant 0.000000e+00 : f32
    %277 = vector.broadcast %cst_70 : f32 to vector<2x32xf32>
    %278 = vector.extract_strided_slice %275 {offsets = [0, 0, 0], sizes = [2, 1, 128], strides = [1, 1, 1]} : vector<2x8x128xf32> to vector<2x1x128xf32>
    %279 = vector.shape_cast %278 : vector<2x1x128xf32> to vector<2x128xf32>
    %cst_71 = arith.constant dense<0.000000e+00> : vector<2x128xf32>
    %280 = tpu.matmul %276, %269, %cst_71 {dimension_numbers = #tpu.dot_dimension_numbers<[1], [0], [0], [1], [0, 0, 1, 1], [], []>} : vector<2x32xf32>, vector<32x128xf32>, vector<2x128xf32> -> vector<2x128xf32>
    %281 = arith.addf %279, %280 : vector<2x128xf32>
    %282 = vector.extract_strided_slice %281 {offsets = [0, 0], sizes = [2, 32], strides = [1, 1]} : vector<2x128xf32> to vector<2x32xf32>
    %283 = arith.negf %282 : vector<2x32xf32>
    %284 = math.exp %283 : vector<2x32xf32>
    %cst_72 = arith.constant 1.000000e+00 : f32
    %285 = vector.broadcast %cst_72 : f32 to vector<2x32xf32>
    %286 = arith.addf %285, %284 : vector<2x32xf32>
    %287 = arith.divf %285, %286 : vector<2x32xf32>
    %288 = vector.extract_strided_slice %281 {offsets = [0, 32], sizes = [2, 32], strides = [1, 1]} : vector<2x128xf32> to vector<2x32xf32>
    %289 = arith.negf %288 : vector<2x32xf32>
    %290 = math.exp %289 : vector<2x32xf32>
    %cst_73 = arith.constant 1.000000e+00 : f32
    %291 = vector.broadcast %cst_73 : f32 to vector<2x32xf32>
    %292 = arith.addf %291, %290 : vector<2x32xf32>
    %293 = arith.divf %291, %292 : vector<2x32xf32>
    %294 = vector.extract_strided_slice %281 {offsets = [0, 64], sizes = [2, 32], strides = [1, 1]} : vector<2x128xf32> to vector<2x32xf32>
    %295 = math.tanh %294 : vector<2x32xf32>
    %296 = vector.extract_strided_slice %281 {offsets = [0, 96], sizes = [2, 32], strides = [1, 1]} : vector<2x128xf32> to vector<2x32xf32>
    %297 = arith.negf %296 : vector<2x32xf32>
    %298 = math.exp %297 : vector<2x32xf32>
    %cst_74 = arith.constant 1.000000e+00 : f32
    %299 = vector.broadcast %cst_74 : f32 to vector<2x32xf32>
    %300 = arith.addf %299, %298 : vector<2x32xf32>
    %301 = arith.divf %299, %300 : vector<2x32xf32>
    %302 = arith.mulf %293, %277 : vector<2x32xf32>
    %303 = arith.mulf %287, %295 : vector<2x32xf32>
    %304 = arith.addf %302, %303 : vector<2x32xf32>
    %305 = math.tanh %304 : vector<2x32xf32>
    %306 = arith.mulf %301, %305 : vector<2x32xf32>
    %c0_75 = arith.constant 0 : index
    %c0_76 = arith.constant 0 : index
    %c0_77 = arith.constant 0 : index
    %307 = vector.load %arg20[%c0_75, %c0_76, %c0_77] : memref<2x8x32xf32, #tpu.memory_space<vmem>>, vector<2x1x32xf32>
    %308 = vector.shape_cast %307 : vector<2x1x32xf32> to vector<2x32xf32>
    %309 = vector.shape_cast %306 : vector<2x32xf32> to vector<2x1x32xf32>
    tpu.vector_store %arg20[%c0_75, %c0_76, %c0_77], %309 {strides = array<i32>} : memref<2x8x32xf32, #tpu.memory_space<vmem>>, vector<2x1x32xf32>,
    %310 = vector.extract_strided_slice %275 {offsets = [0, 1, 0], sizes = [2, 1, 128], strides = [1, 1, 1]} : vector<2x8x128xf32> to vector<2x1x128xf32>
    %311 = vector.shape_cast %310 : vector<2x1x128xf32> to vector<2x128xf32>
    %cst_78 = arith.constant dense<0.000000e+00> : vector<2x128xf32>
    %312 = tpu.matmul %306, %269, %cst_78 {dimension_numbers = #tpu.dot_dimension_numbers<[1], [0], [0], [1], [0, 0, 1, 1], [], []>} : vector<2x32xf32>, vector<32x128xf32>, vector<2x128xf32> -> vector<2x128xf32>
    %313 = arith.addf %311, %312 : vector<2x128xf32>
    %314 = vector.extract_strided_slice %313 {offsets = [0, 0], sizes = [2, 32], strides = [1, 1]} : vector<2x128xf32> to vector<2x32xf32>
    %315 = arith.negf %314 : vector<2x32xf32>
    %316 = math.exp %315 : vector<2x32xf32>
    %cst_79 = arith.constant 1.000000e+00 : f32
    %317 = vector.broadcast %cst_79 : f32 to vector<2x32xf32>
    %318 = arith.addf %317, %316 : vector<2x32xf32>
    %319 = arith.divf %317, %318 : vector<2x32xf32>
    %320 = vector.extract_strided_slice %313 {offsets = [0, 32], sizes = [2, 32], strides = [1, 1]} : vector<2x128xf32> to vector<2x32xf32>
    %321 = arith.negf %320 : vector<2x32xf32>
    %322 = math.exp %321 : vector<2x32xf32>
    %cst_80 = arith.constant 1.000000e+00 : f32
    %323 = vector.broadcast %cst_80 : f32 to vector<2x32xf32>
    %324 = arith.addf %323, %322 : vector<2x32xf32>
    %325 = arith.divf %323, %324 : vector<2x32xf32>
    %326 = vector.extract_strided_slice %313 {offsets = [0, 64], sizes = [2, 32], strides = [1, 1]} : vector<2x128xf32> to vector<2x32xf32>
    %327 = math.tanh %326 : vector<2x32xf32>
    %328 = vector.extract_strided_slice %313 {offsets = [0, 96], sizes = [2, 32], strides = [1, 1]} : vector<2x128xf32> to vector<2x32xf32>
    %329 = arith.negf %328 : vector<2x32xf32>
    %330 = math.exp %329 : vector<2x32xf32>
    %cst_81 = arith.constant 1.000000e+00 : f32
    %331 = vector.broadcast %cst_81 : f32 to vector<2x32xf32>
    %332 = arith.addf %331, %330 : vector<2x32xf32>
    %333 = arith.divf %331, %332 : vector<2x32xf32>
    %334 = arith.mulf %325, %304 : vector<2x32xf32>
    %335 = arith.mulf %319, %327 : vector<2x32xf32>
    %336 = arith.addf %334, %335 : vector<2x32xf32>
    %337 = math.tanh %336 : vector<2x32xf32>
    %338 = arith.mulf %333, %337 : vector<2x32xf32>
    %c0_82 = arith.constant 0 : index
    %c1_83 = arith.constant 1 : index
    %c0_84 = arith.constant 0 : index
    %339 = vector.load %arg20[%c0_82, %c1_83, %c0_84] : memref<2x8x32xf32, #tpu.memory_space<vmem>>, vector<2x1x32xf32>
    %340 = vector.shape_cast %339 : vector<2x1x32xf32> to vector<2x32xf32>
    %341 = vector.shape_cast %338 : vector<2x32xf32> to vector<2x1x32xf32>
    tpu.vector_store %arg20[%c0_82, %c1_83, %c0_84], %341 {strides = array<i32>} : memref<2x8x32xf32, #tpu.memory_space<vmem>>, vector<2x1x32xf32>,
    %342 = vector.extract_strided_slice %275 {offsets = [0, 2, 0], sizes = [2, 1, 128], strides = [1, 1, 1]} : vector<2x8x128xf32> to vector<2x1x128xf32>
    %343 = vector.shape_cast %342 : vector<2x1x128xf32> to vector<2x128xf32>
    %cst_85 = arith.constant dense<0.000000e+00> : vector<2x128xf32>
    %344 = tpu.matmul %338, %269, %cst_85 {dimension_numbers = #tpu.dot_dimension_numbers<[1], [0], [0], [1], [0, 0, 1, 1], [], []>} : vector<2x32xf32>, vector<32x128xf32>, vector<2x128xf32> -> vector<2x128xf32>
    %345 = arith.addf %343, %344 : vector<2x128xf32>
    %346 = vector.extract_strided_slice %345 {offsets = [0, 0], sizes = [2, 32], strides = [1, 1]} : vector<2x128xf32> to vector<2x32xf32>
    %347 = arith.negf %346 : vector<2x32xf32>
    %348 = math.exp %347 : vector<2x32xf32>
    %cst_86 = arith.constant 1.000000e+00 : f32
    %349 = vector.broadcast %cst_86 : f32 to vector<2x32xf32>
    %350 = arith.addf %349, %348 : vector<2x32xf32>
    %351 = arith.divf %349, %350 : vector<2x32xf32>
    %352 = vector.extract_strided_slice %345 {offsets = [0, 32], sizes = [2, 32], strides = [1, 1]} : vector<2x128xf32> to vector<2x32xf32>
    %353 = arith.negf %352 : vector<2x32xf32>
    %354 = math.exp %353 : vector<2x32xf32>
    %cst_87 = arith.constant 1.000000e+00 : f32
    %355 = vector.broadcast %cst_87 : f32 to vector<2x32xf32>
    %356 = arith.addf %355, %354 : vector<2x32xf32>
    %357 = arith.divf %355, %356 : vector<2x32xf32>
    %358 = vector.extract_strided_slice %345 {offsets = [0, 64], sizes = [2, 32], strides = [1, 1]} : vector<2x128xf32> to vector<2x32xf32>
    %359 = math.tanh %358 : vector<2x32xf32>
    %360 = vector.extract_strided_slice %345 {offsets = [0, 96], sizes = [2, 32], strides = [1, 1]} : vector<2x128xf32> to vector<2x32xf32>
    %361 = arith.negf %360 : vector<2x32xf32>
    %362 = math.exp %361 : vector<2x32xf32>
    %cst_88 = arith.constant 1.000000e+00 : f32
    %363 = vector.broadcast %cst_88 : f32 to vector<2x32xf32>
    %364 = arith.addf %363, %362 : vector<2x32xf32>
    %365 = arith.divf %363, %364 : vector<2x32xf32>
    %366 = arith.mulf %357, %336 : vector<2x32xf32>
    %367 = arith.mulf %351, %359 : vector<2x32xf32>
    %368 = arith.addf %366, %367 : vector<2x32xf32>
    %369 = math.tanh %368 : vector<2x32xf32>
    %370 = arith.mulf %365, %369 : vector<2x32xf32>
    %c0_89 = arith.constant 0 : index
    %c2_90 = arith.constant 2 : index
    %c0_91 = arith.constant 0 : index
    %371 = vector.load %arg20[%c0_89, %c2_90, %c0_91] : memref<2x8x32xf32, #tpu.memory_space<vmem>>, vector<2x1x32xf32>
    %372 = vector.shape_cast %371 : vector<2x1x32xf32> to vector<2x32xf32>
    %373 = vector.shape_cast %370 : vector<2x32xf32> to vector<2x1x32xf32>
    tpu.vector_store %arg20[%c0_89, %c2_90, %c0_91], %373 {strides = array<i32>} : memref<2x8x32xf32, #tpu.memory_space<vmem>>, vector<2x1x32xf32>,
    %374 = vector.extract_strided_slice %275 {offsets = [0, 3, 0], sizes = [2, 1, 128], strides = [1, 1, 1]} : vector<2x8x128xf32> to vector<2x1x128xf32>
    %375 = vector.shape_cast %374 : vector<2x1x128xf32> to vector<2x128xf32>
    %cst_92 = arith.constant dense<0.000000e+00> : vector<2x128xf32>
    %376 = tpu.matmul %370, %269, %cst_92 {dimension_numbers = #tpu.dot_dimension_numbers<[1], [0], [0], [1], [0, 0, 1, 1], [], []>} : vector<2x32xf32>, vector<32x128xf32>, vector<2x128xf32> -> vector<2x128xf32>
    %377 = arith.addf %375, %376 : vector<2x128xf32>
    %378 = vector.extract_strided_slice %377 {offsets = [0, 0], sizes = [2, 32], strides = [1, 1]} : vector<2x128xf32> to vector<2x32xf32>
    %379 = arith.negf %378 : vector<2x32xf32>
    %380 = math.exp %379 : vector<2x32xf32>
    %cst_93 = arith.constant 1.000000e+00 : f32
    %381 = vector.broadcast %cst_93 : f32 to vector<2x32xf32>
    %382 = arith.addf %381, %380 : vector<2x32xf32>
    %383 = arith.divf %381, %382 : vector<2x32xf32>
    %384 = vector.extract_strided_slice %377 {offsets = [0, 32], sizes = [2, 32], strides = [1, 1]} : vector<2x128xf32> to vector<2x32xf32>
    %385 = arith.negf %384 : vector<2x32xf32>
    %386 = math.exp %385 : vector<2x32xf32>
    %cst_94 = arith.constant 1.000000e+00 : f32
    %387 = vector.broadcast %cst_94 : f32 to vector<2x32xf32>
    %388 = arith.addf %387, %386 : vector<2x32xf32>
    %389 = arith.divf %387, %388 : vector<2x32xf32>
    %390 = vector.extract_strided_slice %377 {offsets = [0, 64], sizes = [2, 32], strides = [1, 1]} : vector<2x128xf32> to vector<2x32xf32>
    %391 = math.tanh %390 : vector<2x32xf32>
    %392 = vector.extract_strided_slice %377 {offsets = [0, 96], sizes = [2, 32], strides = [1, 1]} : vector<2x128xf32> to vector<2x32xf32>
    %393 = arith.negf %392 : vector<2x32xf32>
    %394 = math.exp %393 : vector<2x32xf32>
    %cst_95 = arith.constant 1.000000e+00 : f32
    %395 = vector.broadcast %cst_95 : f32 to vector<2x32xf32>
    %396 = arith.addf %395, %394 : vector<2x32xf32>
    %397 = arith.divf %395, %396 : vector<2x32xf32>
    %398 = arith.mulf %389, %368 : vector<2x32xf32>
    %399 = arith.mulf %383, %391 : vector<2x32xf32>
    %400 = arith.addf %398, %399 : vector<2x32xf32>
    %401 = math.tanh %400 : vector<2x32xf32>
    %402 = arith.mulf %397, %401 : vector<2x32xf32>
    %c0_96 = arith.constant 0 : index
    %c3_97 = arith.constant 3 : index
    %c0_98 = arith.constant 0 : index
    %403 = vector.load %arg20[%c0_96, %c3_97, %c0_98] : memref<2x8x32xf32, #tpu.memory_space<vmem>>, vector<2x1x32xf32>
    %404 = vector.shape_cast %403 : vector<2x1x32xf32> to vector<2x32xf32>
    %405 = vector.shape_cast %402 : vector<2x32xf32> to vector<2x1x32xf32>
    tpu.vector_store %arg20[%c0_96, %c3_97, %c0_98], %405 {strides = array<i32>} : memref<2x8x32xf32, #tpu.memory_space<vmem>>, vector<2x1x32xf32>,
    %406 = vector.extract_strided_slice %275 {offsets = [0, 4, 0], sizes = [2, 1, 128], strides = [1, 1, 1]} : vector<2x8x128xf32> to vector<2x1x128xf32>
    %407 = vector.shape_cast %406 : vector<2x1x128xf32> to vector<2x128xf32>
    %cst_99 = arith.constant dense<0.000000e+00> : vector<2x128xf32>
    %408 = tpu.matmul %402, %269, %cst_99 {dimension_numbers = #tpu.dot_dimension_numbers<[1], [0], [0], [1], [0, 0, 1, 1], [], []>} : vector<2x32xf32>, vector<32x128xf32>, vector<2x128xf32> -> vector<2x128xf32>
    %409 = arith.addf %407, %408 : vector<2x128xf32>
    %410 = vector.extract_strided_slice %409 {offsets = [0, 0], sizes = [2, 32], strides = [1, 1]} : vector<2x128xf32> to vector<2x32xf32>
    %411 = arith.negf %410 : vector<2x32xf32>
    %412 = math.exp %411 : vector<2x32xf32>
    %cst_100 = arith.constant 1.000000e+00 : f32
    %413 = vector.broadcast %cst_100 : f32 to vector<2x32xf32>
    %414 = arith.addf %413, %412 : vector<2x32xf32>
    %415 = arith.divf %413, %414 : vector<2x32xf32>
    %416 = vector.extract_strided_slice %409 {offsets = [0, 32], sizes = [2, 32], strides = [1, 1]} : vector<2x128xf32> to vector<2x32xf32>
    %417 = arith.negf %416 : vector<2x32xf32>
    %418 = math.exp %417 : vector<2x32xf32>
    %cst_101 = arith.constant 1.000000e+00 : f32
    %419 = vector.broadcast %cst_101 : f32 to vector<2x32xf32>
    %420 = arith.addf %419, %418 : vector<2x32xf32>
    %421 = arith.divf %419, %420 : vector<2x32xf32>
    %422 = vector.extract_strided_slice %409 {offsets = [0, 64], sizes = [2, 32], strides = [1, 1]} : vector<2x128xf32> to vector<2x32xf32>
    %423 = math.tanh %422 : vector<2x32xf32>
    %424 = vector.extract_strided_slice %409 {offsets = [0, 96], sizes = [2, 32], strides = [1, 1]} : vector<2x128xf32> to vector<2x32xf32>
    %425 = arith.negf %424 : vector<2x32xf32>
    %426 = math.exp %425 : vector<2x32xf32>
    %cst_102 = arith.constant 1.000000e+00 : f32
    %427 = vector.broadcast %cst_102 : f32 to vector<2x32xf32>
    %428 = arith.addf %427, %426 : vector<2x32xf32>
    %429 = arith.divf %427, %428 : vector<2x32xf32>
    %430 = arith.mulf %421, %400 : vector<2x32xf32>
    %431 = arith.mulf %415, %423 : vector<2x32xf32>
    %432 = arith.addf %430, %431 : vector<2x32xf32>
    %433 = math.tanh %432 : vector<2x32xf32>
    %434 = arith.mulf %429, %433 : vector<2x32xf32>
    %c0_103 = arith.constant 0 : index
    %c4_104 = arith.constant 4 : index
    %c0_105 = arith.constant 0 : index
    %435 = vector.load %arg20[%c0_103, %c4_104, %c0_105] : memref<2x8x32xf32, #tpu.memory_space<vmem>>, vector<2x1x32xf32>
    %436 = vector.shape_cast %435 : vector<2x1x32xf32> to vector<2x32xf32>
    %437 = vector.shape_cast %434 : vector<2x32xf32> to vector<2x1x32xf32>
    tpu.vector_store %arg20[%c0_103, %c4_104, %c0_105], %437 {strides = array<i32>} : memref<2x8x32xf32, #tpu.memory_space<vmem>>, vector<2x1x32xf32>,
    %438 = vector.extract_strided_slice %275 {offsets = [0, 5, 0], sizes = [2, 1, 128], strides = [1, 1, 1]} : vector<2x8x128xf32> to vector<2x1x128xf32>
    %439 = vector.shape_cast %438 : vector<2x1x128xf32> to vector<2x128xf32>
    %cst_106 = arith.constant dense<0.000000e+00> : vector<2x128xf32>
    %440 = tpu.matmul %434, %269, %cst_106 {dimension_numbers = #tpu.dot_dimension_numbers<[1], [0], [0], [1], [0, 0, 1, 1], [], []>} : vector<2x32xf32>, vector<32x128xf32>, vector<2x128xf32> -> vector<2x128xf32>
    %441 = arith.addf %439, %440 : vector<2x128xf32>
    %442 = vector.extract_strided_slice %441 {offsets = [0, 0], sizes = [2, 32], strides = [1, 1]} : vector<2x128xf32> to vector<2x32xf32>
    %443 = arith.negf %442 : vector<2x32xf32>
    %444 = math.exp %443 : vector<2x32xf32>
    %cst_107 = arith.constant 1.000000e+00 : f32
    %445 = vector.broadcast %cst_107 : f32 to vector<2x32xf32>
    %446 = arith.addf %445, %444 : vector<2x32xf32>
    %447 = arith.divf %445, %446 : vector<2x32xf32>
    %448 = vector.extract_strided_slice %441 {offsets = [0, 32], sizes = [2, 32], strides = [1, 1]} : vector<2x128xf32> to vector<2x32xf32>
    %449 = arith.negf %448 : vector<2x32xf32>
    %450 = math.exp %449 : vector<2x32xf32>
    %cst_108 = arith.constant 1.000000e+00 : f32
    %451 = vector.broadcast %cst_108 : f32 to vector<2x32xf32>
    %452 = arith.addf %451, %450 : vector<2x32xf32>
    %453 = arith.divf %451, %452 : vector<2x32xf32>
    %454 = vector.extract_strided_slice %441 {offsets = [0, 64], sizes = [2, 32], strides = [1, 1]} : vector<2x128xf32> to vector<2x32xf32>
    %455 = math.tanh %454 : vector<2x32xf32>
    %456 = vector.extract_strided_slice %441 {offsets = [0, 96], sizes = [2, 32], strides = [1, 1]} : vector<2x128xf32> to vector<2x32xf32>
    %457 = arith.negf %456 : vector<2x32xf32>
    %458 = math.exp %457 : vector<2x32xf32>
    %cst_109 = arith.constant 1.000000e+00 : f32
    %459 = vector.broadcast %cst_109 : f32 to vector<2x32xf32>
    %460 = arith.addf %459, %458 : vector<2x32xf32>
    %461 = arith.divf %459, %460 : vector<2x32xf32>
    %462 = arith.mulf %453, %432 : vector<2x32xf32>
    %463 = arith.mulf %447, %455 : vector<2x32xf32>
    %464 = arith.addf %462, %463 : vector<2x32xf32>
    %465 = math.tanh %464 : vector<2x32xf32>
    %466 = arith.mulf %461, %465 : vector<2x32xf32>
    %c0_110 = arith.constant 0 : index
    %c5_111 = arith.constant 5 : index
    %c0_112 = arith.constant 0 : index
    %467 = vector.load %arg20[%c0_110, %c5_111, %c0_112] : memref<2x8x32xf32, #tpu.memory_space<vmem>>, vector<2x1x32xf32>
    %468 = vector.shape_cast %467 : vector<2x1x32xf32> to vector<2x32xf32>
    %469 = vector.shape_cast %466 : vector<2x32xf32> to vector<2x1x32xf32>
    tpu.vector_store %arg20[%c0_110, %c5_111, %c0_112], %469 {strides = array<i32>} : memref<2x8x32xf32, #tpu.memory_space<vmem>>, vector<2x1x32xf32>,
    %470 = vector.extract_strided_slice %275 {offsets = [0, 6, 0], sizes = [2, 1, 128], strides = [1, 1, 1]} : vector<2x8x128xf32> to vector<2x1x128xf32>
    %471 = vector.shape_cast %470 : vector<2x1x128xf32> to vector<2x128xf32>
    %cst_113 = arith.constant dense<0.000000e+00> : vector<2x128xf32>
    %472 = tpu.matmul %466, %269, %cst_113 {dimension_numbers = #tpu.dot_dimension_numbers<[1], [0], [0], [1], [0, 0, 1, 1], [], []>} : vector<2x32xf32>, vector<32x128xf32>, vector<2x128xf32> -> vector<2x128xf32>
    %473 = arith.addf %471, %472 : vector<2x128xf32>
    %474 = vector.extract_strided_slice %473 {offsets = [0, 0], sizes = [2, 32], strides = [1, 1]} : vector<2x128xf32> to vector<2x32xf32>
    %475 = arith.negf %474 : vector<2x32xf32>
    %476 = math.exp %475 : vector<2x32xf32>
    %cst_114 = arith.constant 1.000000e+00 : f32
    %477 = vector.broadcast %cst_114 : f32 to vector<2x32xf32>
    %478 = arith.addf %477, %476 : vector<2x32xf32>
    %479 = arith.divf %477, %478 : vector<2x32xf32>
    %480 = vector.extract_strided_slice %473 {offsets = [0, 32], sizes = [2, 32], strides = [1, 1]} : vector<2x128xf32> to vector<2x32xf32>
    %481 = arith.negf %480 : vector<2x32xf32>
    %482 = math.exp %481 : vector<2x32xf32>
    %cst_115 = arith.constant 1.000000e+00 : f32
    %483 = vector.broadcast %cst_115 : f32 to vector<2x32xf32>
    %484 = arith.addf %483, %482 : vector<2x32xf32>
    %485 = arith.divf %483, %484 : vector<2x32xf32>
    %486 = vector.extract_strided_slice %473 {offsets = [0, 64], sizes = [2, 32], strides = [1, 1]} : vector<2x128xf32> to vector<2x32xf32>
    %487 = math.tanh %486 : vector<2x32xf32>
    %488 = vector.extract_strided_slice %473 {offsets = [0, 96], sizes = [2, 32], strides = [1, 1]} : vector<2x128xf32> to vector<2x32xf32>
    %489 = arith.negf %488 : vector<2x32xf32>
    %490 = math.exp %489 : vector<2x32xf32>
    %cst_116 = arith.constant 1.000000e+00 : f32
    %491 = vector.broadcast %cst_116 : f32 to vector<2x32xf32>
    %492 = arith.addf %491, %490 : vector<2x32xf32>
    %493 = arith.divf %491, %492 : vector<2x32xf32>
    %494 = arith.mulf %485, %464 : vector<2x32xf32>
    %495 = arith.mulf %479, %487 : vector<2x32xf32>
    %496 = arith.addf %494, %495 : vector<2x32xf32>
    %497 = math.tanh %496 : vector<2x32xf32>
    %498 = arith.mulf %493, %497 : vector<2x32xf32>
    %c0_117 = arith.constant 0 : index
    %c6_118 = arith.constant 6 : index
    %c0_119 = arith.constant 0 : index
    %499 = vector.load %arg20[%c0_117, %c6_118, %c0_119] : memref<2x8x32xf32, #tpu.memory_space<vmem>>, vector<2x1x32xf32>
    %500 = vector.shape_cast %499 : vector<2x1x32xf32> to vector<2x32xf32>
    %501 = vector.shape_cast %498 : vector<2x32xf32> to vector<2x1x32xf32>
    tpu.vector_store %arg20[%c0_117, %c6_118, %c0_119], %501 {strides = array<i32>} : memref<2x8x32xf32, #tpu.memory_space<vmem>>, vector<2x1x32xf32>,
    %502 = vector.extract_strided_slice %275 {offsets = [0, 7, 0], sizes = [2, 1, 128], strides = [1, 1, 1]} : vector<2x8x128xf32> to vector<2x1x128xf32>
    %503 = vector.shape_cast %502 : vector<2x1x128xf32> to vector<2x128xf32>
    %cst_120 = arith.constant dense<0.000000e+00> : vector<2x128xf32>
    %504 = tpu.matmul %498, %269, %cst_120 {dimension_numbers = #tpu.dot_dimension_numbers<[1], [0], [0], [1], [0, 0, 1, 1], [], []>} : vector<2x32xf32>, vector<32x128xf32>, vector<2x128xf32> -> vector<2x128xf32>
    %505 = arith.addf %503, %504 : vector<2x128xf32>
    %506 = vector.extract_strided_slice %505 {offsets = [0, 0], sizes = [2, 32], strides = [1, 1]} : vector<2x128xf32> to vector<2x32xf32>
    %507 = arith.negf %506 : vector<2x32xf32>
    %508 = math.exp %507 : vector<2x32xf32>
    %cst_121 = arith.constant 1.000000e+00 : f32
    %509 = vector.broadcast %cst_121 : f32 to vector<2x32xf32>
    %510 = arith.addf %509, %508 : vector<2x32xf32>
    %511 = arith.divf %509, %510 : vector<2x32xf32>
    %512 = vector.extract_strided_slice %505 {offsets = [0, 32], sizes = [2, 32], strides = [1, 1]} : vector<2x128xf32> to vector<2x32xf32>
    %513 = arith.negf %512 : vector<2x32xf32>
    %514 = math.exp %513 : vector<2x32xf32>
    %cst_122 = arith.constant 1.000000e+00 : f32
    %515 = vector.broadcast %cst_122 : f32 to vector<2x32xf32>
    %516 = arith.addf %515, %514 : vector<2x32xf32>
    %517 = arith.divf %515, %516 : vector<2x32xf32>
    %518 = vector.extract_strided_slice %505 {offsets = [0, 64], sizes = [2, 32], strides = [1, 1]} : vector<2x128xf32> to vector<2x32xf32>
    %519 = math.tanh %518 : vector<2x32xf32>
    %520 = vector.extract_strided_slice %505 {offsets = [0, 96], sizes = [2, 32], strides = [1, 1]} : vector<2x128xf32> to vector<2x32xf32>
    %521 = arith.negf %520 : vector<2x32xf32>
    %522 = math.exp %521 : vector<2x32xf32>
    %cst_123 = arith.constant 1.000000e+00 : f32
    %523 = vector.broadcast %cst_123 : f32 to vector<2x32xf32>
    %524 = arith.addf %523, %522 : vector<2x32xf32>
    %525 = arith.divf %523, %524 : vector<2x32xf32>
    %526 = arith.mulf %517, %496 : vector<2x32xf32>
    %527 = arith.mulf %511, %519 : vector<2x32xf32>
    %528 = arith.addf %526, %527 : vector<2x32xf32>
    %529 = math.tanh %528 : vector<2x32xf32>
    %530 = arith.mulf %525, %529 : vector<2x32xf32>
    %c0_124 = arith.constant 0 : index
    %c7_125 = arith.constant 7 : index
    %c0_126 = arith.constant 0 : index
    %531 = vector.load %arg20[%c0_124, %c7_125, %c0_126] : memref<2x8x32xf32, #tpu.memory_space<vmem>>, vector<2x1x32xf32>
    %532 = vector.shape_cast %531 : vector<2x1x32xf32> to vector<2x32xf32>
    %533 = vector.shape_cast %530 : vector<2x32xf32> to vector<2x1x32xf32>
    tpu.vector_store %arg20[%c0_124, %c7_125, %c0_126], %533 {strides = array<i32>} : memref<2x8x32xf32, #tpu.memory_space<vmem>>, vector<2x1x32xf32>,
    %c0_127 = arith.constant 0 : index
    %c0_128 = arith.constant 0 : index
    %c0_129 = arith.constant 0 : index
    %534 = vector.load %arg20[%c0_127, %c0_128, %c0_129] : memref<2x8x32xf32, #tpu.memory_space<vmem>>, vector<2x8x32xf32>
    %c0_130 = arith.constant 0 : index
    %c0_131 = arith.constant 0 : index
    %535 = vector.load %arg7[%c0_130, %c0_131] : memref<32x32xf32, #tpu.memory_space<vmem>>, vector<32x32xf32>
    %c0_132 = arith.constant 0 : index
    %c0_133 = arith.constant 0 : index
    %536 = vector.load %arg8[%c0_132, %c0_133] : memref<32x32xf32, #tpu.memory_space<vmem>>, vector<32x32xf32>
    %c0_134 = arith.constant 0 : index
    %c0_135 = arith.constant 0 : index
    %537 = vector.load %arg9[%c0_134, %c0_135] : memref<32x32xf32, #tpu.memory_space<vmem>>, vector<32x32xf32>
    %c0_136 = arith.constant 0 : index
    %c0_137 = arith.constant 0 : index
    %538 = vector.load %arg17[%c0_136, %c0_137] : memref<32x4xf32, #tpu.memory_space<vmem>>, vector<32x4xf32>
    %c0_138 = arith.constant 0 : index
    %c0_139 = arith.constant 0 : index
    %539 = vector.load %arg18[%c0_138, %c0_139] : memref<4x32xf32, #tpu.memory_space<vmem>>, vector<4x32xf32>
    %540 = vector.shape_cast %534 : vector<2x8x32xf32> to vector<16x32xf32>
    %cst_140 = arith.constant dense<0.000000e+00> : vector<16x32xf32>
    %541 = tpu.matmul %540, %536, %cst_140 {dimension_numbers = #tpu.dot_dimension_numbers<[1], [0], [0], [1], [0, 0, 1, 1], [], []>} : vector<16x32xf32>, vector<32x32xf32>, vector<16x32xf32> -> vector<16x32xf32>
    %c0_141 = arith.constant 0 : index
    %c0_142 = arith.constant 0 : index
    %542 = vector.load %arg11[%c0_141, %c0_142] : memref<1x32xf32, #tpu.memory_space<vmem>>, vector<1x32xf32>
    %543 = vector.broadcast %542 : vector<1x32xf32> to vector<16x32xf32>
    %544 = arith.addf %541, %543 : vector<16x32xf32>
    %cst_143 = arith.constant dense<0.000000e+00> : vector<16x32xf32>
    %545 = tpu.matmul %540, %537, %cst_143 {dimension_numbers = #tpu.dot_dimension_numbers<[1], [0], [0], [1], [0, 0, 1, 1], [], []>} : vector<16x32xf32>, vector<32x32xf32>, vector<16x32xf32> -> vector<16x32xf32>
    %c0_144 = arith.constant 0 : index
    %c0_145 = arith.constant 0 : index
    %546 = vector.load %arg12[%c0_144, %c0_145] : memref<1x32xf32, #tpu.memory_space<vmem>>, vector<1x32xf32>
    %547 = vector.broadcast %546 : vector<1x32xf32> to vector<16x32xf32>
    %548 = arith.addf %545, %547 : vector<16x32xf32>
    %549 = vector.extract_strided_slice %534 {offsets = [0, 7, 0], sizes = [2, 1, 32], strides = [1, 1, 1]} : vector<2x8x32xf32> to vector<2x1x32xf32>
    %550 = vector.shape_cast %549 : vector<2x1x32xf32> to vector<2x32xf32>
    %cst_146 = arith.constant dense<0.000000e+00> : vector<2x32xf32>
    %551 = tpu.matmul %550, %535, %cst_146 {dimension_numbers = #tpu.dot_dimension_numbers<[1], [0], [0], [1], [0, 0, 1, 1], [], []>} : vector<2x32xf32>, vector<32x32xf32>, vector<2x32xf32> -> vector<2x32xf32>
    %c0_147 = arith.constant 0 : index
    %c0_148 = arith.constant 0 : index
    %552 = vector.load %arg10[%c0_147, %c0_148] : memref<1x32xf32, #tpu.memory_space<vmem>>, vector<1x32xf32>
    %553 = vector.broadcast %552 : vector<1x32xf32> to vector<2x32xf32>
    %554 = arith.addf %551, %553 : vector<2x32xf32>
    %cst_149 = arith.constant 0.353553385 : f32
    %555 = vector.broadcast %cst_149 : f32 to vector<2x32xf32>
    %556 = arith.mulf %554, %555 : vector<2x32xf32>
    %557 = vector.shape_cast %544 : vector<16x32xf32> to vector<2x8x32xf32>
    %558 = vector.shape_cast %548 : vector<16x32xf32> to vector<2x8x32xf32>
    %559 = vector.shape_cast %556 : vector<2x32xf32> to vector<2x1x32xf32>
    %560 = vector.broadcast %559 : vector<2x1x32xf32> to vector<2x8x32xf32>
    %561 = arith.mulf %560, %557 : vector<2x8x32xf32>
    %562 = vector.shape_cast %561 : vector<2x8x32xf32> to vector<16x32xf32>
    %cst_150 = arith.constant dense<0.000000e+00> : vector<16x4xf32>
    %563 = tpu.matmul %562, %538, %cst_150 {dimension_numbers = #tpu.dot_dimension_numbers<[1], [0], [0], [1], [0, 0, 1, 1], [], []>} : vector<16x32xf32>, vector<32x4xf32>, vector<16x4xf32> -> vector<16x4xf32>
    %564 = vector.shape_cast %563 : vector<16x4xf32> to vector<2x8x4xf32>
    %cst_151 = arith.constant dense<0xFF800000> : vector<2x4xf32>
    %565 = vector.multi_reduction <maximumf>, %564, %cst_151 [1] : vector<2x8x4xf32> to vector<2x4xf32>
    %566 = vector.shape_cast %565 : vector<2x4xf32> to vector<2x1x4xf32>
    %567 = vector.broadcast %566 : vector<2x1x4xf32> to vector<2x8x4xf32>
    %568 = arith.subf %564, %567 : vector<2x8x4xf32>
    %569 = math.exp %568 : vector<2x8x4xf32>
    %cst_152 = arith.constant dense<0.000000e+00> : vector<2x4xf32>
    %570 = vector.multi_reduction <add>, %569, %cst_152 [1] : vector<2x8x4xf32> to vector<2x4xf32>
    %571 = vector.shape_cast %570 : vector<2x4xf32> to vector<2x1x4xf32>
    %572 = vector.broadcast %571 : vector<2x1x4xf32> to vector<2x8x4xf32>
    %573 = arith.divf %569, %572 : vector<2x8x4xf32>
    %574 = vector.shape_cast %573 : vector<2x8x4xf32> to vector<16x4xf32>
    %cst_153 = arith.constant dense<0.000000e+00> : vector<16x32xf32>
    %575 = tpu.matmul %574, %539, %cst_153 {dimension_numbers = #tpu.dot_dimension_numbers<[1], [0], [0], [1], [0, 0, 1, 1], [], []>} : vector<16x4xf32>, vector<4x32xf32>, vector<16x32xf32> -> vector<16x32xf32>
    %576 = vector.shape_cast %575 : vector<16x32xf32> to vector<2x8x32xf32>
    %577 = arith.mulf %576, %558 : vector<2x8x32xf32>
    %cst_154 = arith.constant dense<0.000000e+00> : vector<2x32xf32>
    %578 = vector.multi_reduction <add>, %577, %cst_154 [1] : vector<2x8x32xf32> to vector<2x32xf32>
    %c0_155 = arith.constant 0 : index
    %c0_156 = arith.constant 0 : index
    %579 = vector.load %arg13[%c0_155, %c0_156] : memref<32x32xf32, #tpu.memory_space<vmem>>, vector<32x32xf32>
    %cst_157 = arith.constant dense<0.000000e+00> : vector<2x32xf32>
    %580 = tpu.matmul %578, %579, %cst_157 {dimension_numbers = #tpu.dot_dimension_numbers<[1], [0], [0], [1], [0, 0, 1, 1], [], []>} : vector<2x32xf32>, vector<32x32xf32>, vector<2x32xf32> -> vector<2x32xf32>
    %c0_158 = arith.constant 0 : index
    %c0_159 = arith.constant 0 : index
    %581 = vector.load %arg14[%c0_158, %c0_159] : memref<1x32xf32, #tpu.memory_space<vmem>>, vector<1x32xf32>
    %582 = vector.broadcast %581 : vector<1x32xf32> to vector<2x32xf32>
    %583 = arith.addf %580, %582 : vector<2x32xf32>
    %c0_160 = arith.constant 0 : index
    %c0_161 = arith.constant 0 : index
    %584 = vector.load %arg15[%c0_160, %c0_161] : memref<32x8xf32, #tpu.memory_space<vmem>>, vector<32x8xf32>
    %cst_162 = arith.constant dense<0.000000e+00> : vector<2x8xf32>
    %585 = tpu.matmul %583, %584, %cst_162 {dimension_numbers = #tpu.dot_dimension_numbers<[1], [0], [0], [1], [0, 0, 1, 1], [], []>} : vector<2x32xf32>, vector<32x8xf32>, vector<2x8xf32> -> vector<2x8xf32>
    %c0_163 = arith.constant 0 : index
    %c0_164 = arith.constant 0 : index
    %586 = vector.load %arg16[%c0_163, %c0_164] : memref<1x8xf32, #tpu.memory_space<vmem>>, vector<1x8xf32>
    %587 = vector.broadcast %586 : vector<1x8xf32> to vector<2x8xf32>
    %588 = arith.addf %585, %587 : vector<2x8xf32>
    %c0_165 = arith.constant 0 : index
    %c0_166 = arith.constant 0 : index
    %589 = vector.load %arg19[%c0_165, %c0_166] : memref<2x8xf32, #tpu.memory_space<vmem>>, vector<2x8xf32>
    tpu.vector_store %arg19[%c0_165, %c0_166], %588 {strides = array<i32>} : memref<2x8xf32, #tpu.memory_space<vmem>>, vector<2x8xf32>,
    return
  }
}

</mosaic_0001>

<llo_original>
// kernel: tpu_custom_call.1
$region0: #{tpu_custom_call.1}
  #allocation0 [shape = 'u32[]', space=smem, size = 0x4, offset = 0x4, fixed_abs, tag = 'smem constant byte address 0x4 - core index']
  #allocation1 [shape = 'u32[144,128]{1,0:T(1,128)}', space=vmem, size = 0x12000, scoped, tag = 'internal scratch']
  #allocation2 [shape = 'f32[2,8,32]{2,1,0:T(8,128)}', space=vmem, size = 0x2000, scoped, tag = 'scratch operand']
  %s0 = inlined_call_operand.hbm [shape: f32[2,8,16], index: 0, kind: input, shape index: {}]
  %s1 = inlined_call_operand.hbm [shape: f32[16,128], index: 1, kind: input, shape index: {}]
  %s2 = inlined_call_operand.vmem [shape: f32[32,128], index: 2, kind: input, shape index: {}]
  %s3 = inlined_call_operand.vmem [shape: f32[1,128], index: 3, kind: input, shape index: {}]
  %s4 = inlined_call_operand.vmem [shape: f32[32,128], index: 4, kind: input, shape index: {}]
  %s5 = inlined_call_operand.hbm [shape: f32[32,128], index: 5, kind: input, shape index: {}]
  %s6 = inlined_call_operand.hbm [shape: f32[1,128], index: 6, kind: input, shape index: {}]
  %s7 = inlined_call_operand.vmem [shape: f32[32,32], index: 7, kind: input, shape index: {}]
  %s8 = inlined_call_operand.hbm [shape: f32[32,32], index: 8, kind: input, shape index: {}]
  %s9 = inlined_call_operand.hbm [shape: f32[32,32], index: 9, kind: input, shape index: {}]
  %s10 = inlined_call_operand.hbm [shape: f32[1,32], index: 10, kind: input, shape index: {}]
  %s11 = inlined_call_operand.vmem [shape: f32[1,32], index: 11, kind: input, shape index: {}]
  %s12 = inlined_call_operand.vmem [shape: f32[1,32], index: 12, kind: input, shape index: {}]
  %s13 = inlined_call_operand.hbm [shape: f32[32,32], index: 13, kind: input, shape index: {}]
  %s14 = inlined_call_operand.vmem [shape: f32[1,32], index: 14, kind: input, shape index: {}]
  %s15 = inlined_call_operand.vmem [shape: f32[32,8], index: 15, kind: input, shape index: {}]
  %s16 = inlined_call_operand.vmem [shape: f32[1,8], index: 16, kind: input, shape index: {}]
  %s17 = inlined_call_operand.vmem [shape: f32[32,4], index: 17, kind: input, shape index: {}]
  %s18 = inlined_call_operand.vmem [shape: f32[4,32], index: 18, kind: input, shape index: {}]
  %s19 = inlined_call_operand.hbm [shape: f32[2,8], index: 19, kind: output, shape index: {}]
  %s20 = sld [smem:[#allocation0]]
  $region118: #{tpu_custom_call.1} parent=0
    _
  %s22 = ssub.s32 1, %s20
  %s23 = scalar_select 0, %s22, %s20
  $region1: #{tpu_custom_call.1} parent=0
    #allocation3 [shape = 'u8[8192]{0}', space=vmem, size = 0x2000, scoped, tag = 'input window, operand 0, single buffered']
    #allocation4 [shape = 's32[1]{0}', space=sflag, size = 0x4, scoped, tag = 'scoped memory for tpu_custom_call.1']
    #allocation5 [shape = 's32[1]{0}', space=sflag, size = 0x4, scoped, tag = 'scoped memory for tpu_custom_call.1']
    #allocation6 [shape = 'u8[8192]{0}', space=vmem, size = 0x2000, scoped, tag = 'input window, operand 1, single buffered']
    #allocation7 [shape = 's32[1]{0}', space=sflag, size = 0x4, scoped, tag = 'scoped memory for tpu_custom_call.1']
    #allocation8 [shape = 'u8[16384]{0}', space=vmem, size = 0x4000, scoped, tag = 'input window, operand 5, single buffered']
    #allocation9 [shape = 'u8[512]{0}', space=vmem, size = 0x400, scoped, tag = 'input window, operand 6, single buffered']
    #allocation10 [shape = 's32[1]{0}', space=sflag, size = 0x4, scoped, tag = 'scoped memory for tpu_custom_call.1']
    #allocation11 [shape = 'u8[16384]{0}', space=vmem, size = 0x4000, scoped, tag = 'input window, operand 8, single buffered']
    #allocation12 [shape = 'u8[16384]{0}', space=vmem, size = 0x4000, scoped, tag = 'input window, operand 9, single buffered']
    #allocation13 [shape = 's32[1]{0}', space=sflag, size = 0x4, scoped, tag = 'scoped memory for tpu_custom_call.1']
    #allocation14 [shape = 'u8[512]{0}', space=vmem, size = 0x400, scoped, tag = 'input window, operand 10, single buffered']
    #allocation15 [shape = 'u8[16384]{0}', space=vmem, size = 0x4000, scoped, tag = 'input window, operand 13, single buffered']
    #allocation16 [shape = 's32[1]{0}', space=sflag, size = 0x4, scoped, tag = 'scoped memory for tpu_custom_call.1']
    #allocation17 [shape = 'u8[1024]{0}', space=vmem, size = 0x400, scoped, tag = 'output window, operand 0, single buffered']
    %24 = vsyncpa [#allocation4], 0
    %25 = vsyncpa [#allocation7], 0
    %26 = vsyncpa [#allocation10], 0
    %27 = vsyncpa [#allocation13], 0
    %28 = vsyncpa [#allocation16], 0
    %29 = vsyncpa [#allocation5], 0
    // Predicated region
    $region2: #{tpu_custom_call.1} parent=1 // pred_check
      _
    $region3: #{tpu_custom_call.1} parent=1 // pred_check_branch
      %31 = sbr.rel (0) target = $region5
    $region4: #{tpu_custom_call.1} parent=1 // pred_region
      %s33 = ssub.s32 256, 256
      %34 = vsyncadd [#allocation4], %s33
      %s35 = sshll.u32 [#allocation3], 4
      %s36 = int_to_ptr.vmem [resolvable:$true] %s35
      %41 = dma.hbm_to_vmem [thread:$0]  %s0, 256, %s36, [#allocation4], 128, 128, 8
    $region5: #{tpu_custom_call.1} parent=1 // pred_fallthru
      _
    // Predicated region
    $region6: #{tpu_custom_call.1} parent=1 // pred_check
      _
    $region7: #{tpu_custom_call.1} parent=1 // pred_check_branch
      %43 = sbr.rel (0) target = $region9
    $region8: #{tpu_custom_call.1} parent=1 // pred_region
      %s45 = ssub.s32 256, 256
      %46 = vsyncadd [#allocation7], %s45
      %s47 = sshll.u32 [#allocation6], 4
      %s48 = int_to_ptr.vmem [resolvable:$true] %s47
      %53 = dma.hbm_to_vmem [thread:$0]  %s1, 256, %s48, [#allocation7], 128, 128, 8
    $region9: #{tpu_custom_call.1} parent=1 // pred_fallthru
      _
    // Predicated region
    $region10: #{tpu_custom_call.1} parent=1 // pred_check
      _
    $region11: #{tpu_custom_call.1} parent=1 // pred_check_branch
      %55 = sbr.rel (0) target = $region13
    $region12: #{tpu_custom_call.1} parent=1 // pred_region
      _
    $region13: #{tpu_custom_call.1} parent=1 // pred_fallthru
      _
    // Predicated region
    $region14: #{tpu_custom_call.1} parent=1 // pred_check
      _
    $region15: #{tpu_custom_call.1} parent=1 // pred_check_branch
      %57 = sbr.rel (0) target = $region17
    $region16: #{tpu_custom_call.1} parent=1 // pred_region
      _
    $region17: #{tpu_custom_call.1} parent=1 // pred_fallthru
      _
    // Predicated region
    $region18: #{tpu_custom_call.1} parent=1 // pred_check
      _
    $region19: #{tpu_custom_call.1} parent=1 // pred_check_branch
      %59 = sbr.rel (0) target = $region21
    $region20: #{tpu_custom_call.1} parent=1 // pred_region
      _
    $region21: #{tpu_custom_call.1} parent=1 // pred_fallthru
      _
    // Predicated region
    $region22: #{tpu_custom_call.1} parent=1 // pred_check
      _
    $region23: #{tpu_custom_call.1} parent=1 // pred_check_branch
      %61 = sbr.rel (0) target = $region25
    $region24: #{tpu_custom_call.1} parent=1 // pred_region
      %s63 = ssub.s32 512, 512
      %64 = vsyncadd [#allocation7], %s63
      %s65 = sshll.u32 [#allocation8], 4
      %s66 = int_to_ptr.vmem [resolvable:$true] %s65
      %71 = dma.hbm_to_vmem [thread:$0]  %s5, 512, %s66, [#allocation7], 128, 128, 8
    $region25: #{tpu_custom_call.1} parent=1 // pred_fallthru
      _
    // Predicated region
    $region26: #{tpu_custom_call.1} parent=1 // pred_check
      _
    $region27: #{tpu_custom_call.1} parent=1 // pred_check_branch
      %73 = sbr.rel (0) target = $region29
    $region28: #{tpu_custom_call.1} parent=1 // pred_region
      %s75 = ssub.s32 16, 16
      %76 = vsyncadd [#allocation10], %s75
      %s78 = sshll.u32 [#allocation9], 4
      %s79 = int_to_ptr.vmem [resolvable:$true] %s78
      %81 = dma.hbm_to_vmem [thread:$0]  %s6, 16, %s79, [#allocation10]
    $region29: #{tpu_custom_call.1} parent=1 // pred_fallthru
      _
    // Predicated region
    $region30: #{tpu_custom_call.1} parent=1 // pred_check
      _
    $region31: #{tpu_custom_call.1} parent=1 // pred_check_branch
      %83 = sbr.rel (0) target = $region33
    $region32: #{tpu_custom_call.1} parent=1 // pred_region
      _
    $region33: #{tpu_custom_call.1} parent=1 // pred_fallthru
      _
    // Predicated region
    $region34: #{tpu_custom_call.1} parent=1 // pred_check
      _
    $region35: #{tpu_custom_call.1} parent=1 // pred_check_branch
      %85 = sbr.rel (0) target = $region37
    $region36: #{tpu_custom_call.1} parent=1 // pred_region
      %s87 = ssub.s32 512, 512
      %88 = vsyncadd [#allocation10], %s87
      %s89 = sshll.u32 [#allocation11], 4
      %s90 = int_to_ptr.vmem [resolvable:$true] %s89
      %95 = dma.hbm_to_vmem [thread:$0]  %s8, 512, %s90, [#allocation10], 128, 128, 8
    $region37: #{tpu_custom_call.1} parent=1 // pred_fallthru
      _
    // Predicated region
    $region38: #{tpu_custom_call.1} parent=1 // pred_check
      _
    $region39: #{tpu_custom_call.1} parent=1 // pred_check_branch
      %97 = sbr.rel (0) target = $region41
    $region40: #{tpu_custom_call.1} parent=1 // pred_region
      %s99 = ssub.s32 512, 512
      %100 = vsyncadd [#allocation13], %s99
      %s101 = sshll.u32 [#allocation12], 4
      %s102 = int_to_ptr.vmem [resolvable:$true] %s101
      %107 = dma.hbm_to_vmem [thread:$0]  %s9, 512, %s102, [#allocation13], 128, 128, 8
    $region41: #{tpu_custom_call.1} parent=1 // pred_fallthru
      _
    // Predicated region
    $region42: #{tpu_custom_call.1} parent=1 // pred_check
      _
    $region43: #{tpu_custom_call.1} parent=1 // pred_check_branch
      %109 = sbr.rel (0) target = $region45
    $region44: #{tpu_custom_call.1} parent=1 // pred_region
      %s111 = ssub.s32 16, 16
      %112 = vsyncadd [#allocation13], %s111
      %s114 = sshll.u32 [#allocation14], 4
      %s115 = int_to_ptr.vmem [resolvable:$true] %s114
      %117 = dma.hbm_to_vmem [thread:$0]  %s10, 16, %s115, [#allocation13]
    $region45: #{tpu_custom_call.1} parent=1 // pred_fallthru
      _
    // Predicated region
    $region46: #{tpu_custom_call.1} parent=1 // pred_check
      _
    $region47: #{tpu_custom_call.1} parent=1 // pred_check_branch
      %119 = sbr.rel (0) target = $region49
    $region48: #{tpu_custom_call.1} parent=1 // pred_region
      _
    $region49: #{tpu_custom_call.1} parent=1 // pred_fallthru
      _
    // Predicated region
    $region50: #{tpu_custom_call.1} parent=1 // pred_check
      _
    $region51: #{tpu_custom_call.1} parent=1 // pred_check_branch
      %121 = sbr.rel (0) target = $region53
    $region52: #{tpu_custom_call.1} parent=1 // pred_region
      _
    $region53: #{tpu_custom_call.1} parent=1 // pred_fallthru
      _
    // Predicated region
    $region54: #{tpu_custom_call.1} parent=1 // pred_check
      _
    $region55: #{tpu_custom_call.1} parent=1 // pred_check_branch
      %123 = sbr.rel (0) target = $region57
    $region56: #{tpu_custom_call.1} parent=1 // pred_region
      %s125 = ssub.s32 512, 512
      %126 = vsyncadd [#allocation16], %s125
      %s127 = sshll.u32 [#allocation15], 4
      %s128 = int_to_ptr.vmem [resolvable:$true] %s127
      %133 = dma.hbm_to_vmem [thread:$0]  %s13, 512, %s128, [#allocation16], 128, 128, 8
    $region57: #{tpu_custom_call.1} parent=1 // pred_fallthru
      _
    // Predicated region
    $region58: #{tpu_custom_call.1} parent=1 // pred_check
      _
    $region59: #{tpu_custom_call.1} parent=1 // pred_check_branch
      %135 = sbr.rel (0) target = $region61
    $region60: #{tpu_custom_call.1} parent=1 // pred_region
      _
    $region61: #{tpu_custom_call.1} parent=1 // pred_fallthru
      _
    // Predicated region
    $region62: #{tpu_custom_call.1} parent=1 // pred_check
      _
    $region63: #{tpu_custom_call.1} parent=1 // pred_check_branch
      %137 = sbr.rel (0) target = $region65
    $region64: #{tpu_custom_call.1} parent=1 // pred_region
      _
    $region65: #{tpu_custom_call.1} parent=1 // pred_fallthru
      _
    // Predicated region
    $region66: #{tpu_custom_call.1} parent=1 // pred_check
      _
    $region67: #{tpu_custom_call.1} parent=1 // pred_check_branch
      %139 = sbr.rel (0) target = $region69
    $region68: #{tpu_custom_call.1} parent=1 // pred_region
      _
    $region69: #{tpu_custom_call.1} parent=1 // pred_fallthru
      _
    // Predicated region
    $region70: #{tpu_custom_call.1} parent=1 // pred_check
      _
    $region71: #{tpu_custom_call.1} parent=1 // pred_check_branch
      %141 = sbr.rel (0) target = $region73
    $region72: #{tpu_custom_call.1} parent=1 // pred_region
      _
    $region73: #{tpu_custom_call.1} parent=1 // pred_fallthru
      _
    // Predicated region
    $region74: #{tpu_custom_call.1} parent=1 // pred_check
      _
    $region75: #{tpu_custom_call.1} parent=1 // pred_check_branch
      %143 = sbr.rel (0) target = $region77
    $region76: #{tpu_custom_call.1} parent=1 // pred_region
      _
    $region77: #{tpu_custom_call.1} parent=1 // pred_fallthru
      _
    // Predicated region
    $region78: #{tpu_custom_call.1} parent=1 // pred_check
      _
    $region79: #{tpu_custom_call.1} parent=1 // pred_check_branch
      %145 = sbr.rel (0) target = $region81
    $region80: #{tpu_custom_call.1} parent=1 // pred_region
      %146 = dma.done [#allocation4], 256
    $region81: #{tpu_custom_call.1} parent=1 // pred_fallthru
      _
    // Predicated region
    $region82: #{tpu_custom_call.1} parent=1 // pred_check
      _
    $region83: #{tpu_custom_call.1} parent=1 // pred_check_branch
      %148 = sbr.rel (0) target = $region85
    $region84: #{tpu_custom_call.1} parent=1 // pred_region
      %149 = dma.done [#allocation7], 256
    $region85: #{tpu_custom_call.1} parent=1 // pred_fallthru
      _
    // Predicated region
    $region86: #{tpu_custom_call.1} parent=1 // pred_check
      _
    $region87: #{tpu_custom_call.1} parent=1 // pred_check_branch
      %151 = sbr.rel (0) target = $region89
    $region88: #{tpu_custom_call.1} parent=1 // pred_region
      %152 = dma.done [#allocation7], 512
    $region89: #{tpu_custom_call.1} parent=1 // pred_fallthru
      _
    // Predicated region
    $region90: #{tpu_custom_call.1} parent=1 // pred_check
      _
    $region91: #{tpu_custom_call.1} parent=1 // pred_check_branch
      %154 = sbr.rel (0) target = $region93
    $region92: #{tpu_custom_call.1} parent=1 // pred_region
      %155 = dma.done [#allocation10], 16
    $region93: #{tpu_custom_call.1} parent=1 // pred_fallthru
      _
    // Predicated region
    $region94: #{tpu_custom_call.1} parent=1 // pred_check
      _
    $region95: #{tpu_custom_call.1} parent=1 // pred_check_branch
      %157 = sbr.rel (0) target = $region97
    $region96: #{tpu_custom_call.1} parent=1 // pred_region
      %158 = dma.done [#allocation10], 512
    $region97: #{tpu_custom_call.1} parent=1 // pred_fallthru
      _
    // Predicated region
    $region98: #{tpu_custom_call.1} parent=1 // pred_check
      _
    $region99: #{tpu_custom_call.1} parent=1 // pred_check_branch
      %160 = sbr.rel (0) target = $region101
    $region100: #{tpu_custom_call.1} parent=1 // pred_region
      %161 = dma.done [#allocation13], 512
    $region101: #{tpu_custom_call.1} parent=1 // pred_fallthru
      _
    // Predicated region
    $region102: #{tpu_custom_call.1} parent=1 // pred_check
      _
    $region103: #{tpu_custom_call.1} parent=1 // pred_check_branch
      %163 = sbr.rel (0) target = $region105
    $region104: #{tpu_custom_call.1} parent=1 // pred_region
      %164 = dma.done [#allocation13], 16
    $region105: #{tpu_custom_call.1} parent=1 // pred_fallthru
      _
    // Predicated region
    $region106: #{tpu_custom_call.1} parent=1 // pred_check
      _
    $region107: #{tpu_custom_call.1} parent=1 // pred_check_branch
      %166 = sbr.rel (0) target = $region109
    $region108: #{tpu_custom_call.1} parent=1 // pred_region
      %167 = dma.done [#allocation16], 512
    $region109: #{tpu_custom_call.1} parent=1 // pred_fallthru
      _
    %v168 = vld [vmem:[#allocation3] sm:$0xff]
    %v169 = vld [vmem:[#allocation3 + $0x8] sm:$0xff]
    %v170 = vld [vmem:[#allocation6] sm:$0xff]
    %v171 = vld [vmem:[#allocation6 + $0x8] sm:$0xff]
    %v172 = vld [vmem:[%s2] sm:$0xff]
    %v173 = vld [vmem:[%s2 + $0x8] sm:$0xff]
    %v174 = vld [vmem:[%s2 + $0x10] sm:$0xff]
    %v175 = vld [vmem:[%s2 + $0x18] sm:$0xff]
    %v176 = vld [vmem:[%s3] sm:$0x1]
    %v178 = vlaneseq
    %v179 = vshrl.u32 %v178, 7
    %v180 = vsub.s32 0, %v179
    %v181 = vrot.slane %v176, %v180
    %vm183 = vcmask 130048
    %v185 = vsel %vm183, %v168, 0
    %v188 = vsel %vm183, %v169, 0
    %190 = vmatprep.subr.mxu0 0.0
    %191 = vmatpush1.msra.mxu0 %v170
    %192 = vmatprep.subr.mxu0 0.0
    %193 = vmatpush1.msra.mxu0 %v171
    %194 = vmatprep.subr.mxu0 0.0
    %195 = vmatpush1.msra.mxu0 0.0
    %196 = vmatprep.subr.mxu0 0.0
    %197 = vmatpush1.msra.mxu0 0.0
    %198 = vmatprep.subr.mxu0 0.0
    %199 = vmatpush1.msra.mxu0 0.0
    %200 = vmatprep.subr.mxu0 0.0
    %201 = vmatpush1.msra.mxu0 0.0
    %202 = vmatprep.subr.mxu0 0.0
    %203 = vmatpush1.msra.mxu0 0.0
    %204 = vmatprep.subr.mxu0 0.0
    %205 = vmatpush1.msra.mxu0 0.0
    %206 = vmatprep.subr.mxu0 0.0
    %207 = vmatpush1.msra.mxu0 0.0
    %208 = vmatprep.subr.mxu0 0.0
    %209 = vmatpush1.msra.mxu0 0.0
    %210 = vmatprep.subr.mxu0 0.0
    %211 = vmatpush1.msra.mxu0 0.0
    %212 = vmatprep.subr.mxu0 0.0
    %213 = vmatpush1.msra.mxu0 0.0
    %214 = vmatprep.subr.mxu0 0.0
    %215 = vmatpush1.msra.mxu0 0.0
    %216 = vmatprep.subr.mxu0 0.0
    %217 = vmatpush1.msra.mxu0 0.0
    %218 = vmatprep.subr.mxu0 0.0
    %219 = vmatpush1.msra.mxu0 0.0
    %220 = vmatprep.subr.mxu0 0.0
    %221 = vmatpush1.msra.mxu0 0.0
    %222 = vmatprep.subr.mxu0 0.0
    %223 = vmatpush1.msra.mxu0 0.0
    %224 = vmatprep.subr.mxu0 0.0
    %225 = vmatpush1.msra.mxu0 0.0
    %226 = vmatprep.subr.mxu0 0.0
    %227 = vmatpush1.msra.mxu0 0.0
    %228 = vmatprep.subr.mxu0 0.0
    %229 = vmatpush1.msra.mxu0 0.0
    %230 = vmatprep.subr.mxu0 0.0
    %231 = vmatpush1.msra.mxu0 0.0
    %232 = vmatprep.subr.mxu0 0.0
    %233 = vmatpush1.msra.mxu0 0.0
    %234 = vmatprep.subr.mxu0 0.0
    %235 = vmatpush1.msra.mxu0 0.0
    %236 = vmatprep.subr.mxu0 0.0
    %237 = vmatpush1.msra.mxu0 0.0
    %238 = vmatprep.subr.mxu0 0.0
    %239 = vmatpush1.msra.mxu0 0.0
    %240 = vmatprep.subr.mxu0 0.0
    %241 = vmatpush1.msra.mxu0 0.0
    %242 = vmatprep.subr.mxu0 0.0
    %243 = vmatpush1.msra.mxu0 0.0
    %244 = vmatprep.subr.mxu0 0.0
    %245 = vmatpush1.msra.mxu0 0.0
    %246 = vmatprep.subr.mxu0 0.0
    %247 = vmatpush1.msra.mxu0 0.0
    %248 = vmatprep.subr.mxu0 0.0
    %249 = vmatpush1.msra.mxu0 0.0
    %250 = vmatprep.subr.mxu0 0.0
    %251 = vmatpush1.msra.mxu0 0.0
    %252 = vmatprep.subr.mxu0 0.0
    %253 = vmatpush1.msra.mxu0 0.0
    %254 = vmatprep.mubr.f32.mxu0 0.0
    %255 = vmatmul.mubr.f32.gmra.mrb[0].mxu0 %v185
    %v256 = vpop.f32.mrb[0].mxu0
    %v257 = vadd.f32 %v181, %v256
    %v258 = vpop.f32.mrb[0].mxu0
    %259 = vmatprep.mubr.f32.mxu0 0.0
    %260 = vmatmul.mubr.f32.gmra.mrb[0].mxu0 %v188
    %v261 = vpop.f32.mrb[0].mxu0
    %v262 = vadd.f32 %v181, %v261
    %v263 = vpop.f32.mrb[0].mxu0
    %264 = vdwg.mxu0
    %vm265 = vcmask 261120
    %v267 = vsel %vm265, 0.0, 0
    %269 = vmatprep.subr.mxu0 0.0
    %270 = vmatpush1.msra.mxu0 %v172
    %271 = vmatprep.subr.mxu0 0.0
    %272 = vmatpush1.msra.mxu0 %v173
    %273 = vmatprep.subr.mxu0 0.0
    %274 = vmatpush1.msra.mxu0 %v174
    %275 = vmatprep.subr.mxu0 0.0
    %276 = vmatpush1.msra.mxu0 %v175
    %277 = vmatprep.subr.mxu0 0.0
    %278 = vmatpush1.msra.mxu0 0.0
    %279 = vmatprep.subr.mxu0 0.0
    %280 = vmatpush1.msra.mxu0 0.0
    %281 = vmatprep.subr.mxu0 0.0
    %282 = vmatpush1.msra.mxu0 0.0
    %283 = vmatprep.subr.mxu0 0.0
    %284 = vmatpush1.msra.mxu0 0.0
    %285 = vmatprep.subr.mxu0 0.0
    %286 = vmatpush1.msra.mxu0 0.0
    %287 = vmatprep.subr.mxu0 0.0
    %288 = vmatpush1.msra.mxu0 0.0
    %289 = vmatprep.subr.mxu0 0.0
    %290 = vmatpush1.msra.mxu0 0.0
    %291 = vmatprep.subr.mxu0 0.0
    %292 = vmatpush1.msra.mxu0 0.0
    %293 = vmatprep.subr.mxu0 0.0
    %294 = vmatpush1.msra.mxu0 0.0
    %295 = vmatprep.subr.mxu0 0.0
    %296 = vmatpush1.msra.mxu0 0.0
    %297 = vmatprep.subr.mxu0 0.0
    %298 = vmatpush1.msra.mxu0 0.0
    %299 = vmatprep.subr.mxu0 0.0
    %300 = vmatpush1.msra.mxu0 0.0
    %301 = vmatprep.subr.mxu0 0.0
    %302 = vmatpush1.msra.mxu0 0.0
    %303 = vmatprep.subr.mxu0 0.0
    %304 = vmatpush1.msra.mxu0 0.0
    %305 = vmatprep.subr.mxu0 0.0
    %306 = vmatpush1.msra.mxu0 0.0
    %307 = vmatprep.subr.mxu0 0.0
    %308 = vmatpush1.msra.mxu0 0.0
    %309 = vmatprep.subr.mxu0 0.0
    %310 = vmatpush1.msra.mxu0 0.0
    %311 = vmatprep.subr.mxu0 0.0
    %312 = vmatpush1.msra.mxu0 0.0
    %313 = vmatprep.subr.mxu0 0.0
    %314 = vmatpush1.msra.mxu0 0.0
    %315 = vmatprep.subr.mxu0 0.0
    %316 = vmatpush1.msra.mxu0 0.0
    %317 = vmatprep.subr.mxu0 0.0
    %318 = vmatpush1.msra.mxu0 0.0
    %319 = vmatprep.subr.mxu0 0.0
    %320 = vmatpush1.msra.mxu0 0.0
    %321 = vmatprep.subr.mxu0 0.0
    %322 = vmatpush1.msra.mxu0 0.0
    %323 = vmatprep.subr.mxu0 0.0
    %324 = vmatpush1.msra.mxu0 0.0
    %325 = vmatprep.subr.mxu0 0.0
    %326 = vmatpush1.msra.mxu0 0.0
    %327 = vmatprep.subr.mxu0 0.0
    %328 = vmatpush1.msra.mxu0 0.0
    %329 = vmatprep.subr.mxu0 0.0
    %330 = vmatpush1.msra.mxu0 0.0
    %331 = vmatprep.subr.mxu0 0.0
    %332 = vmatpush1.msra.mxu0 0.0
    %333 = vmatprep.mubr.f32.mxu0 0.0
    %334 = vmatmul.mubr.f32.gmra.mrb[0].mxu0 %v267
    %v335 = vpop.f32.mrb[0].mxu0
    %v336 = vadd.f32 0.0, %v335
    %v337 = vpop.f32.mrb[0].mxu0
    %338 = vdwg.mxu0
    %v340 = vrot.slane %v336, 1
    %v343 = vadd.f32 %v257, %v336
    %v344 = vadd.f32 %v262, %v340
    %v345 = vxor.u32 %v343, 2147483648
    %v346 = vxor.u32 %v344, 2147483648
    %v347 = vmul.f32 %v345, 1.442695
    %v348 = vpow.pop %v347
    %v349 = vmul.f32 %v346, 1.442695
    %v350 = vpow.pop %v349
    %v351 = vadd.f32 %v348, 1.0
    %v352 = vadd.f32 %v350, 1.0
    %v353 = vrcp.pop %v351
    %v354 = vmul.f32 1.0, %v353
    %v355 = vrcp.pop %v352
    %v356 = vmul.f32 1.0, %v355
    %v357 = vtanh.pop %v343
    %v358 = vtanh.pop %v344
    %v359 = vmul.f32 %v354, 0.0
    %v360 = vmul.f32 %v356, 0.0
    %363 = vrot.lane.b32.xlu0 %v357, 64
    %v364 = vpop.permute.xlu0 %363
    %365 = vrot.lane.b32.xlu0 %v358, 64
    %v366 = vpop.permute.xlu0 %365
    %v369 = vmul.f32 %v354, %v364
    %v370 = vmul.f32 %v356, %v366
    %373 = vrot.lane.b32.xlu0 %v369, 32
    %v374 = vpop.permute.xlu0 %373
    %375 = vrot.lane.b32.xlu0 %v370, 32
    %v376 = vpop.permute.xlu0 %375
    %v379 = vadd.f32 %v359, %v374
    %v380 = vadd.f32 %v360, %v376
    %v381 = vtanh.pop %v379
    %v382 = vtanh.pop %v380
    %385 = vrot.lane.b32.xlu0 %v381, 64
    %v386 = vpop.permute.xlu0 %385
    %387 = vrot.lane.b32.xlu0 %v382, 64
    %v388 = vpop.permute.xlu0 %387
    %v391 = vmul.f32 %v354, %v386
    %v392 = vmul.f32 %v356, %v388
    %395 = vrot.lane.b32.xlu0 %v391, 32
    %v396 = vpop.permute.xlu0 %395
    %397 = vrot.lane.b32.xlu0 %v392, 32
    %v398 = vpop.permute.xlu0 %397
    %vm401 = vcmask 253952
    %402 = vst.msk [vmem:[#allocation2] sm:$0x1] %vm401, %v396
    %403 = vst.msk [vmem:[#allocation2 + $0x8] sm:$0x1] %vm401, %v398
    %v404 = vrot.slane %v392, 7
    %vm405 = vcmask 1041409
    %v406 = vsel %vm405, %v404, %v391
    %407 = vrot.lane.b32.xlu0 %v406, 32
    %v408 = vpop.permute.xlu0 %407
    %v409 = vsel %vm265, %v408, 0
    %411 = vmatprep.subr.mxu0 0.0
    %412 = vmatpush1.msra.mxu0 %v172
    %413 = vmatprep.subr.mxu0 0.0
    %414 = vmatpush1.msra.mxu0 %v173
    %415 = vmatprep.subr.mxu0 0.0
    %416 = vmatpush1.msra.mxu0 %v174
    %417 = vmatprep.subr.mxu0 0.0
    %418 = vmatpush1.msra.mxu0 %v175
    %419 = vmatprep.subr.mxu0 0.0
    %420 = vmatpush1.msra.mxu0 0.0
    %421 = vmatprep.subr.mxu0 0.0
    %422 = vmatpush1.msra.mxu0 0.0
    %423 = vmatprep.subr.mxu0 0.0
    %424 = vmatpush1.msra.mxu0 0.0
    %425 = vmatprep.subr.mxu0 0.0
    %426 = vmatpush1.msra.mxu0 0.0
    %427 = vmatprep.subr.mxu0 0.0
    %428 = vmatpush1.msra.mxu0 0.0
    %429 = vmatprep.subr.mxu0 0.0
    %430 = vmatpush1.msra.mxu0 0.0
    %431 = vmatprep.subr.mxu0 0.0
    %432 = vmatpush1.msra.mxu0 0.0
    %433 = vmatprep.subr.mxu0 0.0
    %434 = vmatpush1.msra.mxu0 0.0
    %435 = vmatprep.subr.mxu0 0.0
    %436 = vmatpush1.msra.mxu0 0.0
    %437 = vmatprep.subr.mxu0 0.0
    %438 = vmatpush1.msra.mxu0 0.0
    %439 = vmatprep.subr.mxu0 0.0
    %440 = vmatpush1.msra.mxu0 0.0
    %441 = vmatprep.subr.mxu0 0.0
    %442 = vmatpush1.msra.mxu0 0.0
    %443 = vmatprep.subr.mxu0 0.0
    %444 = vmatpush1.msra.mxu0 0.0
    %445 = vmatprep.subr.mxu0 0.0
    %446 = vmatpush1.msra.mxu0 0.0
    %447 = vmatprep.subr.mxu0 0.0
    %448 = vmatpush1.msra.mxu0 0.0
    %449 = vmatprep.subr.mxu0 0.0
    %450 = vmatpush1.msra.mxu0 0.0
    %451 = vmatprep.subr.mxu0 0.0
    %452 = vmatpush1.msra.mxu0 0.0
    %453 = vmatprep.subr.mxu0 0.0
    %454 = vmatpush1.msra.mxu0 0.0
    %455 = vmatprep.subr.mxu0 0.0
    %456 = vmatpush1.msra.mxu0 0.0
    %457 = vmatprep.subr.mxu0 0.0
    %458 = vmatpush1.msra.mxu0 0.0
    %459 = vmatprep.subr.mxu0 0.0
    %460 = vmatpush1.msra.mxu0 0.0
    %461 = vmatprep.subr.mxu0 0.0
    %462 = vmatpush1.msra.mxu0 0.0
    %463 = vmatprep.subr.mxu0 0.0
    %464 = vmatpush1.msra.mxu0 0.0
    %465 = vmatprep.subr.mxu0 0.0
    %466 = vmatpush1.msra.mxu0 0.0
    %467 = vmatprep.subr.mxu0 0.0
    %468 = vmatpush1.msra.mxu0 0.0
    %469 = vmatprep.subr.mxu0 0.0
    %470 = vmatpush1.msra.mxu0 0.0
    %471 = vmatprep.subr.mxu0 0.0
    %472 = vmatpush1.msra.mxu0 0.0
    %473 = vmatprep.subr.mxu0 0.0
    %474 = vmatpush1.msra.mxu0 0.0
    %475 = vmatprep.mubr.f32.mxu0 0.0
    %476 = vmatmul.mubr.f32.gmra.mrb[0].mxu0 %v409
    %v477 = vpop.f32.mrb[0].mxu0
    %v478 = vadd.f32 0.0, %v477
    %v479 = vpop.f32.mrb[0].mxu0
    %480 = vdwg.mxu0
    %v482 = vrot.slane %v478, 7
    %v485 = vadd.f32 %v257, %v482
    %v486 = vadd.f32 %v262, %v478
    %v487 = vxor.u32 %v485, 2147483648
    %v488 = vxor.u32 %v486, 2147483648
    %v489 = vmul.f32 %v487, 1.442695
    %v490 = vpow.pop %v489
    %v491 = vmul.f32 %v488, 1.442695
    %v492 = vpow.pop %v491
    %v493 = vadd.f32 %v490, 1.0
    %v494 = vadd.f32 %v492, 1.0
    %v495 = vrcp.pop %v493
    %v496 = vmul.f32 1.0, %v495
    %v497 = vrcp.pop %v494
    %v498 = vmul.f32 1.0, %v497
    %v499 = vtanh.pop %v485
    %v500 = vtanh.pop %v486
    %v503 = vrot.slane %v379, 7
    %v504 = vrot.slane %v380, 7
    %v507 = vmul.f32 %v496, %v503
    %v508 = vmul.f32 %v498, %v504
    %511 = vrot.lane.b32.xlu0 %v499, 64
    %v512 = vpop.permute.xlu0 %511
    %513 = vrot.lane.b32.xlu0 %v500, 64
    %v514 = vpop.permute.xlu0 %513
    %v517 = vmul.f32 %v496, %v512
    %v518 = vmul.f32 %v498, %v514
    %521 = vrot.lane.b32.xlu0 %v517, 32
    %v522 = vpop.permute.xlu0 %521
    %523 = vrot.lane.b32.xlu0 %v518, 32
    %v524 = vpop.permute.xlu0 %523
    %v527 = vadd.f32 %v507, %v522
    %v528 = vadd.f32 %v508, %v524
    %v529 = vtanh.pop %v527
    %v530 = vtanh.pop %v528
    %533 = vrot.lane.b32.xlu0 %v529, 64
    %v534 = vpop.permute.xlu0 %533
    %535 = vrot.lane.b32.xlu0 %v530, 64
    %v536 = vpop.permute.xlu0 %535
    %v539 = vmul.f32 %v496, %v534
    %v540 = vmul.f32 %v498, %v536
    %543 = vrot.lane.b32.xlu0 %v539, 32
    %v544 = vpop.permute.xlu0 %543
    %545 = vrot.lane.b32.xlu0 %v540, 32
    %v546 = vpop.permute.xlu0 %545
    %vm549 = vcmask 254977
    %550 = vst.msk [vmem:[#allocation2] sm:$0x2] %vm549, %v544
    %551 = vst.msk [vmem:[#allocation2 + $0x8] sm:$0x2] %vm549, %v546
    %v552 = vrot.slane %v539, 1
    %v553 = vsel %vm405, %v540, %v552
    %554 = vrot.lane.b32.xlu0 %v553, 32
    %v555 = vpop.permute.xlu0 %554
    %v556 = vsel %vm265, %v555, 0
    %558 = vmatprep.subr.mxu0 0.0
    %559 = vmatpush1.msra.mxu0 %v172
    %560 = vmatprep.subr.mxu0 0.0
    %561 = vmatpush1.msra.mxu0 %v173
    %562 = vmatprep.subr.mxu0 0.0
    %563 = vmatpush1.msra.mxu0 %v174
    %564 = vmatprep.subr.mxu0 0.0
    %565 = vmatpush1.msra.mxu0 %v175
    %566 = vmatprep.subr.mxu0 0.0
    %567 = vmatpush1.msra.mxu0 0.0
    %568 = vmatprep.subr.mxu0 0.0
    %569 = vmatpush1.msra.mxu0 0.0
    %570 = vmatprep.subr.mxu0 0.0
    %571 = vmatpush1.msra.mxu0 0.0
    %572 = vmatprep.subr.mxu0 0.0
    %573 = vmatpush1.msra.mxu0 0.0
    %574 = vmatprep.subr.mxu0 0.0
    %575 = vmatpush1.msra.mxu0 0.0
    %576 = vmatprep.subr.mxu0 0.0
    %577 = vmatpush1.msra.mxu0 0.0
    %578 = vmatprep.subr.mxu0 0.0
    %579 = vmatpush1.msra.mxu0 0.0
    %580 = vmatprep.subr.mxu0 0.0
    %581 = vmatpush1.msra.mxu0 0.0
    %582 = vmatprep.subr.mxu0 0.0
    %583 = vmatpush1.msra.mxu0 0.0
    %584 = vmatprep.subr.mxu0 0.0
    %585 = vmatpush1.msra.mxu0 0.0
    %586 = vmatprep.subr.mxu0 0.0
    %587 = vmatpush1.msra.mxu0 0.0
    %588 = vmatprep.subr.mxu0 0.0
    %589 = vmatpush1.msra.mxu0 0.0
    %590 = vmatprep.subr.mxu0 0.0
    %591 = vmatpush1.msra.mxu0 0.0
    %592 = vmatprep.subr.mxu0 0.0
    %593 = vmatpush1.msra.mxu0 0.0
    %594 = vmatprep.subr.mxu0 0.0
    %595 = vmatpush1.msra.mxu0 0.0
    %596 = vmatprep.subr.mxu0 0.0
    %597 = vmatpush1.msra.mxu0 0.0
    %598 = vmatprep.subr.mxu0 0.0
    %599 = vmatpush1.msra.mxu0 0.0
    %600 = vmatprep.subr.mxu0 0.0
    %601 = vmatpush1.msra.mxu0 0.0
    %602 = vmatprep.subr.mxu0 0.0
    %603 = vmatpush1.msra.mxu0 0.0
    %604 = vmatprep.subr.mxu0 0.0
    %605 = vmatpush1.msra.mxu0 0.0
    %606 = vmatprep.subr.mxu0 0.0
    %607 = vmatpush1.msra.mxu0 0.0
    %608 = vmatprep.subr.mxu0 0.0
    %609 = vmatpush1.msra.mxu0 0.0
    %610 = vmatprep.subr.mxu0 0.0
    %611 = vmatpush1.msra.mxu0 0.0
    %612 = vmatprep.subr.mxu0 0.0
    %613 = vmatpush1.msra.mxu0 0.0
    %614 = vmatprep.subr.mxu0 0.0
    %615 = vmatpush1.msra.mxu0 0.0
    %616 = vmatprep.subr.mxu0 0.0
    %617 = vmatpush1.msra.mxu0 0.0
    %618 = vmatprep.subr.mxu0 0.0
    %619 = vmatpush1.msra.mxu0 0.0
    %620 = vmatprep.subr.mxu0 0.0
    %621 = vmatpush1.msra.mxu0 0.0
    %622 = vmatprep.mubr.f32.mxu0 0.0
    %623 = vmatmul.mubr.f32.gmra.mrb[0].mxu0 %v556
    %v624 = vpop.f32.mrb[0].mxu0
    %v625 = vadd.f32 0.0, %v624
    %v626 = vpop.f32.mrb[0].mxu0
    %627 = vdwg.mxu0
    %v629 = vrot.slane %v625, 6
    %v630 = vrot.slane %v625, 7
    %v633 = vadd.f32 %v257, %v629
    %v634 = vadd.f32 %v262, %v630
    %v635 = vxor.u32 %v633, 2147483648
    %v636 = vxor.u32 %v634, 2147483648
    %v637 = vmul.f32 %v635, 1.442695
    %v638 = vpow.pop %v637
    %v639 = vmul.f32 %v636, 1.442695
    %v640 = vpow.pop %v639
    %v641 = vadd.f32 %v638, 1.0
    %v642 = vadd.f32 %v640, 1.0
    %v643 = vrcp.pop %v641
    %v644 = vmul.f32 1.0, %v643
    %v645 = vrcp.pop %v642
    %v646 = vmul.f32 1.0, %v645
    %v647 = vtanh.pop %v633
    %v648 = vtanh.pop %v634
    %v651 = vrot.slane %v527, 7
    %v652 = vrot.slane %v528, 7
    %v655 = vmul.f32 %v644, %v651
    %v656 = vmul.f32 %v646, %v652
    %659 = vrot.lane.b32.xlu0 %v647, 64
    %v660 = vpop.permute.xlu0 %659
    %661 = vrot.lane.b32.xlu0 %v648, 64
    %v662 = vpop.permute.xlu0 %661
    %v665 = vmul.f32 %v644, %v660
    %v666 = vmul.f32 %v646, %v662
    %669 = vrot.lane.b32.xlu0 %v665, 32
    %v670 = vpop.permute.xlu0 %669
    %671 = vrot.lane.b32.xlu0 %v666, 32
    %v672 = vpop.permute.xlu0 %671
    %v675 = vadd.f32 %v655, %v670
    %v676 = vadd.f32 %v656, %v672
    %v677 = vtanh.pop %v675
    %v678 = vtanh.pop %v676
    %681 = vrot.lane.b32.xlu0 %v677, 64
    %v682 = vpop.permute.xlu0 %681
    %683 = vrot.lane.b32.xlu0 %v678, 64
    %v684 = vpop.permute.xlu0 %683
    %v687 = vmul.f32 %v644, %v682
    %v688 = vmul.f32 %v646, %v684
    %691 = vrot.lane.b32.xlu0 %v687, 32
    %v692 = vpop.permute.xlu0 %691
    %693 = vrot.lane.b32.xlu0 %v688, 32
    %v694 = vpop.permute.xlu0 %693
    %vm697 = vcmask 256002
    %698 = vst.msk [vmem:[#allocation2] sm:$0x4] %vm697, %v692
    %699 = vst.msk [vmem:[#allocation2 + $0x8] sm:$0x4] %vm697, %v694
    %v700 = vrot.slane %v687, 2
    %v701 = vrot.slane %v688, 1
    %v702 = vsel %vm405, %v701, %v700
    %703 = vrot.lane.b32.xlu0 %v702, 32
    %v704 = vpop.permute.xlu0 %703
    %v705 = vsel %vm265, %v704, 0
    %707 = vmatprep.subr.mxu0 0.0
    %708 = vmatpush1.msra.mxu0 %v172
    %709 = vmatprep.subr.mxu0 0.0
    %710 = vmatpush1.msra.mxu0 %v173
    %711 = vmatprep.subr.mxu0 0.0
    %712 = vmatpush1.msra.mxu0 %v174
    %713 = vmatprep.subr.mxu0 0.0
    %714 = vmatpush1.msra.mxu0 %v175
    %715 = vmatprep.subr.mxu0 0.0
    %716 = vmatpush1.msra.mxu0 0.0
    %717 = vmatprep.subr.mxu0 0.0
    %718 = vmatpush1.msra.mxu0 0.0
    %719 = vmatprep.subr.mxu0 0.0
    %720 = vmatpush1.msra.mxu0 0.0
    %721 = vmatprep.subr.mxu0 0.0
    %722 = vmatpush1.msra.mxu0 0.0
    %723 = vmatprep.subr.mxu0 0.0
    %724 = vmatpush1.msra.mxu0 0.0
    %725 = vmatprep.subr.mxu0 0.0
    %726 = vmatpush1.msra.mxu0 0.0
    %727 = vmatprep.subr.mxu0 0.0
    %728 = vmatpush1.msra.mxu0 0.0
    %729 = vmatprep.subr.mxu0 0.0
    %730 = vmatpush1.msra.mxu0 0.0
    %731 = vmatprep.subr.mxu0 0.0
    %732 = vmatpush1.msra.mxu0 0.0
    %733 = vmatprep.subr.mxu0 0.0
    %734 = vmatpush1.msra.mxu0 0.0
    %735 = vmatprep.subr.mxu0 0.0
    %736 = vmatpush1.msra.mxu0 0.0
    %737 = vmatprep.subr.mxu0 0.0
    %738 = vmatpush1.msra.mxu0 0.0
    %739 = vmatprep.subr.mxu0 0.0
    %740 = vmatpush1.msra.mxu0 0.0
    %741 = vmatprep.subr.mxu0 0.0
    %742 = vmatpush1.msra.mxu0 0.0
    %743 = vmatprep.subr.mxu0 0.0
    %744 = vmatpush1.msra.mxu0 0.0
    %745 = vmatprep.subr.mxu0 0.0
    %746 = vmatpush1.msra.mxu0 0.0
    %747 = vmatprep.subr.mxu0 0.0
    %748 = vmatpush1.msra.mxu0 0.0
    %749 = vmatprep.subr.mxu0 0.0
    %750 = vmatpush1.msra.mxu0 0.0
    %751 = vmatprep.subr.mxu0 0.0
    %752 = vmatpush1.msra.mxu0 0.0
    %753 = vmatprep.subr.mxu0 0.0
    %754 = vmatpush1.msra.mxu0 0.0
    %755 = vmatprep.subr.mxu0 0.0
    %756 = vmatpush1.msra.mxu0 0.0
    %757 = vmatprep.subr.mxu0 0.0
    %758 = vmatpush1.msra.mxu0 0.0
    %759 = vmatprep.subr.mxu0 0.0
    %760 = vmatpush1.msra.mxu0 0.0
    %761 = vmatprep.subr.mxu0 0.0
    %762 = vmatpush1.msra.mxu0 0.0
    %763 = vmatprep.subr.mxu0 0.0
    %764 = vmatpush1.msra.mxu0 0.0
    %765 = vmatprep.subr.mxu0 0.0
    %766 = vmatpush1.msra.mxu0 0.0
    %767 = vmatprep.subr.mxu0 0.0
    %768 = vmatpush1.msra.mxu0 0.0
    %769 = vmatprep.subr.mxu0 0.0
    %770 = vmatpush1.msra.mxu0 0.0
    %771 = vmatprep.mubr.f32.mxu0 0.0
    %772 = vmatmul.mubr.f32.gmra.mrb[0].mxu0 %v705
    %v773 = vpop.f32.mrb[0].mxu0
    %v774 = vadd.f32 0.0, %v773
    %v775 = vpop.f32.mrb[0].mxu0
    %776 = vdwg.mxu0
    %v778 = vrot.slane %v774, 5
    %v779 = vrot.slane %v774, 6
    %v782 = vadd.f32 %v257, %v778
    %v783 = vadd.f32 %v262, %v779
    %v784 = vxor.u32 %v782, 2147483648
    %v785 = vxor.u32 %v783, 2147483648
    %v786 = vmul.f32 %v784, 1.442695
    %v787 = vpow.pop %v786
    %v788 = vmul.f32 %v785, 1.442695
    %v789 = vpow.pop %v788
    %v790 = vadd.f32 %v787, 1.0
    %v791 = vadd.f32 %v789, 1.0
    %v792 = vrcp.pop %v790
    %v793 = vmul.f32 1.0, %v792
    %v794 = vrcp.pop %v791
    %v795 = vmul.f32 1.0, %v794
    %v796 = vtanh.pop %v782
    %v797 = vtanh.pop %v783
    %v800 = vrot.slane %v675, 7
    %v801 = vrot.slane %v676, 7
    %v804 = vmul.f32 %v793, %v800
    %v805 = vmul.f32 %v795, %v801
    %808 = vrot.lane.b32.xlu0 %v796, 64
    %v809 = vpop.permute.xlu0 %808
    %810 = vrot.lane.b32.xlu0 %v797, 64
    %v811 = vpop.permute.xlu0 %810
    %v814 = vmul.f32 %v793, %v809
    %v815 = vmul.f32 %v795, %v811
    %818 = vrot.lane.b32.xlu0 %v814, 32
    %v819 = vpop.permute.xlu0 %818
    %820 = vrot.lane.b32.xlu0 %v815, 32
    %v821 = vpop.permute.xlu0 %820
    %v824 = vadd.f32 %v804, %v819
    %v825 = vadd.f32 %v805, %v821
    %v826 = vtanh.pop %v824
    %v827 = vtanh.pop %v825
    %830 = vrot.lane.b32.xlu0 %v826, 64
    %v831 = vpop.permute.xlu0 %830
    %832 = vrot.lane.b32.xlu0 %v827, 64
    %v833 = vpop.permute.xlu0 %832
    %v836 = vmul.f32 %v793, %v831
    %v837 = vmul.f32 %v795, %v833
    %840 = vrot.lane.b32.xlu0 %v836, 32
    %v841 = vpop.permute.xlu0 %840
    %842 = vrot.lane.b32.xlu0 %v837, 32
    %v843 = vpop.permute.xlu0 %842
    %vm846 = vcmask 257027
    %847 = vst.msk [vmem:[#allocation2] sm:$0x8] %vm846, %v841
    %848 = vst.msk [vmem:[#allocation2 + $0x8] sm:$0x8] %vm846, %v843
    %v849 = vrot.slane %v836, 3
    %v850 = vrot.slane %v837, 2
    %v851 = vsel %vm405, %v850, %v849
    %852 = vrot.lane.b32.xlu0 %v851, 32
    %v853 = vpop.permute.xlu0 %852
    %v854 = vsel %vm265, %v853, 0
    %856 = vmatprep.subr.mxu0 0.0
    %857 = vmatpush1.msra.mxu0 %v172
    %858 = vmatprep.subr.mxu0 0.0
    %859 = vmatpush1.msra.mxu0 %v173
    %860 = vmatprep.subr.mxu0 0.0
    %861 = vmatpush1.msra.mxu0 %v174
    %862 = vmatprep.subr.mxu0 0.0
    %863 = vmatpush1.msra.mxu0 %v175
    %864 = vmatprep.subr.mxu0 0.0
    %865 = vmatpush1.msra.mxu0 0.0
    %866 = vmatprep.subr.mxu0 0.0
    %867 = vmatpush1.msra.mxu0 0.0
    %868 = vmatprep.subr.mxu0 0.0
    %869 = vmatpush1.msra.mxu0 0.0
    %870 = vmatprep.subr.mxu0 0.0
    %871 = vmatpush1.msra.mxu0 0.0
    %872 = vmatprep.subr.mxu0 0.0
    %873 = vmatpush1.msra.mxu0 0.0
    %874 = vmatprep.subr.mxu0 0.0
    %875 = vmatpush1.msra.mxu0 0.0
    %876 = vmatprep.subr.mxu0 0.0
    %877 = vmatpush1.msra.mxu0 0.0
    %878 = vmatprep.subr.mxu0 0.0
    %879 = vmatpush1.msra.mxu0 0.0
    %880 = vmatprep.subr.mxu0 0.0
    %881 = vmatpush1.msra.mxu0 0.0
    %882 = vmatprep.subr.mxu0 0.0
    %883 = vmatpush1.msra.mxu0 0.0
    %884 = vmatprep.subr.mxu0 0.0
    %885 = vmatpush1.msra.mxu0 0.0
    %886 = vmatprep.subr.mxu0 0.0
    %887 = vmatpush1.msra.mxu0 0.0
    %888 = vmatprep.subr.mxu0 0.0
    %889 = vmatpush1.msra.mxu0 0.0
    %890 = vmatprep.subr.mxu0 0.0
    %891 = vmatpush1.msra.mxu0 0.0
    %892 = vmatprep.subr.mxu0 0.0
    %893 = vmatpush1.msra.mxu0 0.0
    %894 = vmatprep.subr.mxu0 0.0
    %895 = vmatpush1.msra.mxu0 0.0
    %896 = vmatprep.subr.mxu0 0.0
    %897 = vmatpush1.msra.mxu0 0.0
    %898 = vmatprep.subr.mxu0 0.0
    %899 = vmatpush1.msra.mxu0 0.0
    %900 = vmatprep.subr.mxu0 0.0
    %901 = vmatpush1.msra.mxu0 0.0
    %902 = vmatprep.subr.mxu0 0.0
    %903 = vmatpush1.msra.mxu0 0.0
    %904 = vmatprep.subr.mxu0 0.0
    %905 = vmatpush1.msra.mxu0 0.0
    %906 = vmatprep.subr.mxu0 0.0
    %907 = vmatpush1.msra.mxu0 0.0
    %908 = vmatprep.subr.mxu0 0.0
    %909 = vmatpush1.msra.mxu0 0.0
    %910 = vmatprep.subr.mxu0 0.0
    %911 = vmatpush1.msra.mxu0 0.0
    %912 = vmatprep.subr.mxu0 0.0
    %913 = vmatpush1.msra.mxu0 0.0
    %914 = vmatprep.subr.mxu0 0.0
    %915 = vmatpush1.msra.mxu0 0.0
    %916 = vmatprep.subr.mxu0 0.0
    %917 = vmatpush1.msra.mxu0 0.0
    %918 = vmatprep.subr.mxu0 0.0
    %919 = vmatpush1.msra.mxu0 0.0
    %920 = vmatprep.mubr.f32.mxu0 0.0
    %921 = vmatmul.mubr.f32.gmra.mrb[0].mxu0 %v854
    %v922 = vpop.f32.mrb[0].mxu0
    %v923 = vadd.f32 0.0, %v922
    %v924 = vpop.f32.mrb[0].mxu0
    %925 = vdwg.mxu0
    %v927 = vrot.slane %v923, 4
    %v928 = vrot.slane %v923, 5
    %v931 = vadd.f32 %v257, %v927
    %v932 = vadd.f32 %v262, %v928
    %v933 = vxor.u32 %v931, 2147483648
    %v934 = vxor.u32 %v932, 2147483648
    %v935 = vmul.f32 %v933, 1.442695
    %v936 = vpow.pop %v935
    %v937 = vmul.f32 %v934, 1.442695
    %v938 = vpow.pop %v937
    %v939 = vadd.f32 %v936, 1.0
    %v940 = vadd.f32 %v938, 1.0
    %v941 = vrcp.pop %v939
    %v942 = vmul.f32 1.0, %v941
    %v943 = vrcp.pop %v940
    %v944 = vmul.f32 1.0, %v943
    %v945 = vtanh.pop %v931
    %v946 = vtanh.pop %v932
    %v949 = vrot.slane %v824, 7
    %v950 = vrot.slane %v825, 7
    %v953 = vmul.f32 %v942, %v949
    %v954 = vmul.f32 %v944, %v950
    %957 = vrot.lane.b32.xlu0 %v945, 64
    %v958 = vpop.permute.xlu0 %957
    %959 = vrot.lane.b32.xlu0 %v946, 64
    %v960 = vpop.permute.xlu0 %959
    %v963 = vmul.f32 %v942, %v958
    %v964 = vmul.f32 %v944, %v960
    %967 = vrot.lane.b32.xlu0 %v963, 32
    %v968 = vpop.permute.xlu0 %967
    %969 = vrot.lane.b32.xlu0 %v964, 32
    %v970 = vpop.permute.xlu0 %969
    %v973 = vadd.f32 %v953, %v968
    %v974 = vadd.f32 %v954, %v970
    %v975 = vtanh.pop %v973
    %v976 = vtanh.pop %v974
    %979 = vrot.lane.b32.xlu0 %v975, 64
    %v980 = vpop.permute.xlu0 %979
    %981 = vrot.lane.b32.xlu0 %v976, 64
    %v982 = vpop.permute.xlu0 %981
    %v985 = vmul.f32 %v942, %v980
    %v986 = vmul.f32 %v944, %v982
    %989 = vrot.lane.b32.xlu0 %v985, 32
    %v990 = vpop.permute.xlu0 %989
    %991 = vrot.lane.b32.xlu0 %v986, 32
    %v992 = vpop.permute.xlu0 %991
    %vm995 = vcmask 258052
    %996 = vst.msk [vmem:[#allocation2] sm:$0x10] %vm995, %v990
    %997 = vst.msk [vmem:[#allocation2 + $0x8] sm:$0x10] %vm995, %v992
    %v998 = vrot.slane %v985, 4
    %v999 = vrot.slane %v986, 3
    %v1000 = vsel %vm405, %v999, %v998
    %1001 = vrot.lane.b32.xlu0 %v1000, 32
    %v1002 = vpop.permute.xlu0 %1001
    %v1003 = vsel %vm265, %v1002, 0
    %1005 = vmatprep.subr.mxu0 0.0
    %1006 = vmatpush1.msra.mxu0 %v172
    %1007 = vmatprep.subr.mxu0 0.0
    %1008 = vmatpush1.msra.mxu0 %v173
    %1009 = vmatprep.subr.mxu0 0.0
    %1010 = vmatpush1.msra.mxu0 %v174
    %1011 = vmatprep.subr.mxu0 0.0
    %1012 = vmatpush1.msra.mxu0 %v175
    %1013 = vmatprep.subr.mxu0 0.0
    %1014 = vmatpush1.msra.mxu0 0.0
    %1015 = vmatprep.subr.mxu0 0.0
    %1016 = vmatpush1.msra.mxu0 0.0
    %1017 = vmatprep.subr.mxu0 0.0
    %1018 = vmatpush1.msra.mxu0 0.0
    %1019 = vmatprep.subr.mxu0 0.0
    %1020 = vmatpush1.msra.mxu0 0.0
    %1021 = vmatprep.subr.mxu0 0.0
    %1022 = vmatpush1.msra.mxu0 0.0
    %1023 = vmatprep.subr.mxu0 0.0
    %1024 = vmatpush1.msra.mxu0 0.0
    %1025 = vmatprep.subr.mxu0 0.0
    %1026 = vmatpush1.msra.mxu0 0.0
    %1027 = vmatprep.subr.mxu0 0.0
    %1028 = vmatpush1.msra.mxu0 0.0
    %1029 = vmatprep.subr.mxu0 0.0
    %1030 = vmatpush1.msra.mxu0 0.0
    %1031 = vmatprep.subr.mxu0 0.0
    %1032 = vmatpush1.msra.mxu0 0.0
    %1033 = vmatprep.subr.mxu0 0.0
    %1034 = vmatpush1.msra.mxu0 0.0
    %1035 = vmatprep.subr.mxu0 0.0
    %1036 = vmatpush1.msra.mxu0 0.0
    %1037 = vmatprep.subr.mxu0 0.0
    %1038 = vmatpush1.msra.mxu0 0.0
    %1039 = vmatprep.subr.mxu0 0.0
    %1040 = vmatpush1.msra.mxu0 0.0
    %1041 = vmatprep.subr.mxu0 0.0
    %1042 = vmatpush1.msra.mxu0 0.0
    %1043 = vmatprep.subr.mxu0 0.0
    %1044 = vmatpush1.msra.mxu0 0.0
    %1045 = vmatprep.subr.mxu0 0.0
    %1046 = vmatpush1.msra.mxu0 0.0
    %1047 = vmatprep.subr.mxu0 0.0
    %1048 = vmatpush1.msra.mxu0 0.0
    %1049 = vmatprep.subr.mxu0 0.0
    %1050 = vmatpush1.msra.mxu0 0.0
    %1051 = vmatprep.subr.mxu0 0.0
    %1052 = vmatpush1.msra.mxu0 0.0
    %1053 = vmatprep.subr.mxu0 0.0
    %1054 = vmatpush1.msra.mxu0 0.0
    %1055 = vmatprep.subr.mxu0 0.0
    %1056 = vmatpush1.msra.mxu0 0.0
    %1057 = vmatprep.subr.mxu0 0.0
    %1058 = vmatpush1.msra.mxu0 0.0
    %1059 = vmatprep.subr.mxu0 0.0
    %1060 = vmatpush1.msra.mxu0 0.0
    %1061 = vmatprep.subr.mxu0 0.0
    %1062 = vmatpush1.msra.mxu0 0.0
    %1063 = vmatprep.subr.mxu0 0.0
    %1064 = vmatpush1.msra.mxu0 0.0
    %1065 = vmatprep.subr.mxu0 0.0
    %1066 = vmatpush1.msra.mxu0 0.0
    %1067 = vmatprep.subr.mxu0 0.0
    %1068 = vmatpush1.msra.mxu0 0.0
    %1069 = vmatprep.mubr.f32.mxu0 0.0
    %1070 = vmatmul.mubr.f32.gmra.mrb[0].mxu0 %v1003
    %v1071 = vpop.f32.mrb[0].mxu0
    %v1072 = vadd.f32 0.0, %v1071
    %v1073 = vpop.f32.mrb[0].mxu0
    %1074 = vdwg.mxu0
    %v1076 = vrot.slane %v1072, 3
    %v1077 = vrot.slane %v1072, 4
    %v1080 = vadd.f32 %v257, %v1076
    %v1081 = vadd.f32 %v262, %v1077
    %v1082 = vxor.u32 %v1080, 2147483648
    %v1083 = vxor.u32 %v1081, 2147483648
    %v1084 = vmul.f32 %v1082, 1.442695
    %v1085 = vpow.pop %v1084
    %v1086 = vmul.f32 %v1083, 1.442695
    %v1087 = vpow.pop %v1086
    %v1088 = vadd.f32 %v1085, 1.0
    %v1089 = vadd.f32 %v1087, 1.0
    %v1090 = vrcp.pop %v1088
    %v1091 = vmul.f32 1.0, %v1090
    %v1092 = vrcp.pop %v1089
    %v1093 = vmul.f32 1.0, %v1092
    %v1094 = vtanh.pop %v1080
    %v1095 = vtanh.pop %v1081
    %v1098 = vrot.slane %v973, 7
    %v1099 = vrot.slane %v974, 7
    %v1102 = vmul.f32 %v1091, %v1098
    %v1103 = vmul.f32 %v1093, %v1099
    %1106 = vrot.lane.b32.xlu0 %v1094, 64
    %v1107 = vpop.permute.xlu0 %1106
    %1108 = vrot.lane.b32.xlu0 %v1095, 64
    %v1109 = vpop.permute.xlu0 %1108
    %v1112 = vmul.f32 %v1091, %v1107
    %v1113 = vmul.f32 %v1093, %v1109
    %1116 = vrot.lane.b32.xlu0 %v1112, 32
    %v1117 = vpop.permute.xlu0 %1116
    %1118 = vrot.lane.b32.xlu0 %v1113, 32
    %v1119 = vpop.permute.xlu0 %1118
    %v1122 = vadd.f32 %v1102, %v1117
    %v1123 = vadd.f32 %v1103, %v1119
    %v1124 = vtanh.pop %v1122
    %v1125 = vtanh.pop %v1123
    %1128 = vrot.lane.b32.xlu0 %v1124, 64
    %v1129 = vpop.permute.xlu0 %1128
    %1130 = vrot.lane.b32.xlu0 %v1125, 64
    %v1131 = vpop.permute.xlu0 %1130
    %v1134 = vmul.f32 %v1091, %v1129
    %v1135 = vmul.f32 %v1093, %v1131
    %1138 = vrot.lane.b32.xlu0 %v1134, 32
    %v1139 = vpop.permute.xlu0 %1138
    %1140 = vrot.lane.b32.xlu0 %v1135, 32
    %v1141 = vpop.permute.xlu0 %1140
    %vm1144 = vcmask 259077
    %1145 = vst.msk [vmem:[#allocation2] sm:$0x20] %vm1144, %v1139
    %1146 = vst.msk [vmem:[#allocation2 + $0x8] sm:$0x20] %vm1144, %v1141
    %v1147 = vrot.slane %v1134, 5
    %v1148 = vrot.slane %v1135, 4
    %v1149 = vsel %vm405, %v1148, %v1147
    %1150 = vrot.lane.b32.xlu0 %v1149, 32
    %v1151 = vpop.permute.xlu0 %1150
    %v1152 = vsel %vm265, %v1151, 0
    %1154 = vmatprep.subr.mxu0 0.0
    %1155 = vmatpush1.msra.mxu0 %v172
    %1156 = vmatprep.subr.mxu0 0.0
    %1157 = vmatpush1.msra.mxu0 %v173
    %1158 = vmatprep.subr.mxu0 0.0
    %1159 = vmatpush1.msra.mxu0 %v174
    %1160 = vmatprep.subr.mxu0 0.0
    %1161 = vmatpush1.msra.mxu0 %v175
    %1162 = vmatprep.subr.mxu0 0.0
    %1163 = vmatpush1.msra.mxu0 0.0
    %1164 = vmatprep.subr.mxu0 0.0
    %1165 = vmatpush1.msra.mxu0 0.0
    %1166 = vmatprep.subr.mxu0 0.0
    %1167 = vmatpush1.msra.mxu0 0.0
    %1168 = vmatprep.subr.mxu0 0.0
    %1169 = vmatpush1.msra.mxu0 0.0
    %1170 = vmatprep.subr.mxu0 0.0
    %1171 = vmatpush1.msra.mxu0 0.0
    %1172 = vmatprep.subr.mxu0 0.0
    %1173 = vmatpush1.msra.mxu0 0.0
    %1174 = vmatprep.subr.mxu0 0.0
    %1175 = vmatpush1.msra.mxu0 0.0
    %1176 = vmatprep.subr.mxu0 0.0
    %1177 = vmatpush1.msra.mxu0 0.0
    %1178 = vmatprep.subr.mxu0 0.0
    %1179 = vmatpush1.msra.mxu0 0.0
    %1180 = vmatprep.subr.mxu0 0.0
    %1181 = vmatpush1.msra.mxu0 0.0
    %1182 = vmatprep.subr.mxu0 0.0
    %1183 = vmatpush1.msra.mxu0 0.0
    %1184 = vmatprep.subr.mxu0 0.0
    %1185 = vmatpush1.msra.mxu0 0.0
    %1186 = vmatprep.subr.mxu0 0.0
    %1187 = vmatpush1.msra.mxu0 0.0
    %1188 = vmatprep.subr.mxu0 0.0
    %1189 = vmatpush1.msra.mxu0 0.0
    %1190 = vmatprep.subr.mxu0 0.0
    %1191 = vmatpush1.msra.mxu0 0.0
    %1192 = vmatprep.subr.mxu0 0.0
    %1193 = vmatpush1.msra.mxu0 0.0
    %1194 = vmatprep.subr.mxu0 0.0
    %1195 = vmatpush1.msra.mxu0 0.0
    %1196 = vmatprep.subr.mxu0 0.0
    %1197 = vmatpush1.msra.mxu0 0.0
    %1198 = vmatprep.subr.mxu0 0.0
    %1199 = vmatpush1.msra.mxu0 0.0
    %1200 = vmatprep.subr.mxu0 0.0
    %1201 = vmatpush1.msra.mxu0 0.0
    %1202 = vmatprep.subr.mxu0 0.0
    %1203 = vmatpush1.msra.mxu0 0.0
    %1204 = vmatprep.subr.mxu0 0.0
    %1205 = vmatpush1.msra.mxu0 0.0
    %1206 = vmatprep.subr.mxu0 0.0
    %1207 = vmatpush1.msra.mxu0 0.0
    %1208 = vmatprep.subr.mxu0 0.0
    %1209 = vmatpush1.msra.mxu0 0.0
    %1210 = vmatprep.subr.mxu0 0.0
    %1211 = vmatpush1.msra.mxu0 0.0
    %1212 = vmatprep.subr.mxu0 0.0
    %1213 = vmatpush1.msra.mxu0 0.0
    %1214 = vmatprep.subr.mxu0 0.0
    %1215 = vmatpush1.msra.mxu0 0.0
    %1216 = vmatprep.subr.mxu0 0.0
    %1217 = vmatpush1.msra.mxu0 0.0
    %1218 = vmatprep.mubr.f32.mxu0 0.0
    %1219 = vmatmul.mubr.f32.gmra.mrb[0].mxu0 %v1152
    %v1220 = vpop.f32.mrb[0].mxu0
    %v1221 = vadd.f32 0.0, %v1220
    %v1222 = vpop.f32.mrb[0].mxu0
    %1223 = vdwg.mxu0
    %v1225 = vrot.slane %v1221, 2
    %v1226 = vrot.slane %v1221, 3
    %v1229 = vadd.f32 %v257, %v1225
    %v1230 = vadd.f32 %v262, %v1226
    %v1231 = vxor.u32 %v1229, 2147483648
    %v1232 = vxor.u32 %v1230, 2147483648
    %v1233 = vmul.f32 %v1231, 1.442695
    %v1234 = vpow.pop %v1233
    %v1235 = vmul.f32 %v1232, 1.442695
    %v1236 = vpow.pop %v1235
    %v1237 = vadd.f32 %v1234, 1.0
    %v1238 = vadd.f32 %v1236, 1.0
    %v1239 = vrcp.pop %v1237
    %v1240 = vmul.f32 1.0, %v1239
    %v1241 = vrcp.pop %v1238
    %v1242 = vmul.f32 1.0, %v1241
    %v1243 = vtanh.pop %v1229
    %v1244 = vtanh.pop %v1230
    %v1247 = vrot.slane %v1122, 7
    %v1248 = vrot.slane %v1123, 7
    %v1251 = vmul.f32 %v1240, %v1247
    %v1252 = vmul.f32 %v1242, %v1248
    %1255 = vrot.lane.b32.xlu0 %v1243, 64
    %v1256 = vpop.permute.xlu0 %1255
    %1257 = vrot.lane.b32.xlu0 %v1244, 64
    %v1258 = vpop.permute.xlu0 %1257
    %v1261 = vmul.f32 %v1240, %v1256
    %v1262 = vmul.f32 %v1242, %v1258
    %1265 = vrot.lane.b32.xlu0 %v1261, 32
    %v1266 = vpop.permute.xlu0 %1265
    %1267 = vrot.lane.b32.xlu0 %v1262, 32
    %v1268 = vpop.permute.xlu0 %1267
    %v1271 = vadd.f32 %v1251, %v1266
    %v1272 = vadd.f32 %v1252, %v1268
    %v1273 = vtanh.pop %v1271
    %v1274 = vtanh.pop %v1272
    %1277 = vrot.lane.b32.xlu0 %v1273, 64
    %v1278 = vpop.permute.xlu0 %1277
    %1279 = vrot.lane.b32.xlu0 %v1274, 64
    %v1280 = vpop.permute.xlu0 %1279
    %v1283 = vmul.f32 %v1240, %v1278
    %v1284 = vmul.f32 %v1242, %v1280
    %1287 = vrot.lane.b32.xlu0 %v1283, 32
    %v1288 = vpop.permute.xlu0 %1287
    %1289 = vrot.lane.b32.xlu0 %v1284, 32
    %v1290 = vpop.permute.xlu0 %1289
    %vm1293 = vcmask 260102
    %1294 = vst.msk [vmem:[#allocation2] sm:$0x40] %vm1293, %v1288
    %1295 = vst.msk [vmem:[#allocation2 + $0x8] sm:$0x40] %vm1293, %v1290
    %v1296 = vrot.slane %v1283, 6
    %v1297 = vrot.slane %v1284, 5
    %v1298 = vsel %vm405, %v1297, %v1296
    %1299 = vrot.lane.b32.xlu0 %v1298, 32
    %v1300 = vpop.permute.xlu0 %1299
    %v1301 = vsel %vm265, %v1300, 0
    %1303 = vmatprep.subr.mxu0 0.0
    %1304 = vmatpush1.msra.mxu0 %v172
    %1305 = vmatprep.subr.mxu0 0.0
    %1306 = vmatpush1.msra.mxu0 %v173
    %1307 = vmatprep.subr.mxu0 0.0
    %1308 = vmatpush1.msra.mxu0 %v174
    %1309 = vmatprep.subr.mxu0 0.0
    %1310 = vmatpush1.msra.mxu0 %v175
    %1311 = vmatprep.subr.mxu0 0.0
    %1312 = vmatpush1.msra.mxu0 0.0
    %1313 = vmatprep.subr.mxu0 0.0
    %1314 = vmatpush1.msra.mxu0 0.0
    %1315 = vmatprep.subr.mxu0 0.0
    %1316 = vmatpush1.msra.mxu0 0.0
    %1317 = vmatprep.subr.mxu0 0.0
    %1318 = vmatpush1.msra.mxu0 0.0
    %1319 = vmatprep.subr.mxu0 0.0
    %1320 = vmatpush1.msra.mxu0 0.0
    %1321 = vmatprep.subr.mxu0 0.0
    %1322 = vmatpush1.msra.mxu0 0.0
    %1323 = vmatprep.subr.mxu0 0.0
    %1324 = vmatpush1.msra.mxu0 0.0
    %1325 = vmatprep.subr.mxu0 0.0
    %1326 = vmatpush1.msra.mxu0 0.0
    %1327 = vmatprep.subr.mxu0 0.0
    %1328 = vmatpush1.msra.mxu0 0.0
    %1329 = vmatprep.subr.mxu0 0.0
    %1330 = vmatpush1.msra.mxu0 0.0
    %1331 = vmatprep.subr.mxu0 0.0
    %1332 = vmatpush1.msra.mxu0 0.0
    %1333 = vmatprep.subr.mxu0 0.0
    %1334 = vmatpush1.msra.mxu0 0.0
    %1335 = vmatprep.subr.mxu0 0.0
    %1336 = vmatpush1.msra.mxu0 0.0
    %1337 = vmatprep.subr.mxu0 0.0
    %1338 = vmatpush1.msra.mxu0 0.0
    %1339 = vmatprep.subr.mxu0 0.0
    %1340 = vmatpush1.msra.mxu0 0.0
    %1341 = vmatprep.subr.mxu0 0.0
    %1342 = vmatpush1.msra.mxu0 0.0
    %1343 = vmatprep.subr.mxu0 0.0
    %1344 = vmatpush1.msra.mxu0 0.0
    %1345 = vmatprep.subr.mxu0 0.0
    %1346 = vmatpush1.msra.mxu0 0.0
    %1347 = vmatprep.subr.mxu0 0.0
    %1348 = vmatpush1.msra.mxu0 0.0
    %1349 = vmatprep.subr.mxu0 0.0
    %1350 = vmatpush1.msra.mxu0 0.0
    %1351 = vmatprep.subr.mxu0 0.0
    %1352 = vmatpush1.msra.mxu0 0.0
    %1353 = vmatprep.subr.mxu0 0.0
    %1354 = vmatpush1.msra.mxu0 0.0
    %1355 = vmatprep.subr.mxu0 0.0
    %1356 = vmatpush1.msra.mxu0 0.0
    %1357 = vmatprep.subr.mxu0 0.0
    %1358 = vmatpush1.msra.mxu0 0.0
    %1359 = vmatprep.subr.mxu0 0.0
    %1360 = vmatpush1.msra.mxu0 0.0
    %1361 = vmatprep.subr.mxu0 0.0
    %1362 = vmatpush1.msra.mxu0 0.0
    %1363 = vmatprep.subr.mxu0 0.0
    %1364 = vmatpush1.msra.mxu0 0.0
    %1365 = vmatprep.subr.mxu0 0.0
    %1366 = vmatpush1.msra.mxu0 0.0
    %1367 = vmatprep.mubr.f32.mxu0 0.0
    %1368 = vmatmul.mubr.f32.gmra.mrb[0].mxu0 %v1301
    %v1369 = vpop.f32.mrb[0].mxu0
    %v1370 = vadd.f32 0.0, %v1369
    %v1371 = vpop.f32.mrb[0].mxu0
    %1372 = vdwg.mxu0
    %v1374 = vrot.slane %v1370, 1
    %v1375 = vrot.slane %v1370, 2
    %v1378 = vadd.f32 %v257, %v1374
    %v1379 = vadd.f32 %v262, %v1375
    %v1380 = vxor.u32 %v1378, 2147483648
    %v1381 = vxor.u32 %v1379, 2147483648
    %v1382 = vmul.f32 %v1380, 1.442695
    %v1383 = vpow.pop %v1382
    %v1384 = vmul.f32 %v1381, 1.442695
    %v1385 = vpow.pop %v1384
    %v1386 = vadd.f32 %v1383, 1.0
    %v1387 = vadd.f32 %v1385, 1.0
    %v1388 = vrcp.pop %v1386
    %v1389 = vmul.f32 1.0, %v1388
    %v1390 = vrcp.pop %v1387
    %v1391 = vmul.f32 1.0, %v1390
    %v1392 = vtanh.pop %v1378
    %v1393 = vtanh.pop %v1379
    %v1396 = vrot.slane %v1271, 7
    %v1397 = vrot.slane %v1272, 7
    %v1400 = vmul.f32 %v1389, %v1396
    %v1401 = vmul.f32 %v1391, %v1397
    %1404 = vrot.lane.b32.xlu0 %v1392, 64
    %v1405 = vpop.permute.xlu0 %1404
    %1406 = vrot.lane.b32.xlu0 %v1393, 64
    %v1407 = vpop.permute.xlu0 %1406
    %v1410 = vmul.f32 %v1389, %v1405
    %v1411 = vmul.f32 %v1391, %v1407
    %1414 = vrot.lane.b32.xlu0 %v1410, 32
    %v1415 = vpop.permute.xlu0 %1414
    %1416 = vrot.lane.b32.xlu0 %v1411, 32
    %v1417 = vpop.permute.xlu0 %1416
    %v1420 = vadd.f32 %v1400, %v1415
    %v1421 = vadd.f32 %v1401, %v1417
    %v1422 = vtanh.pop %v1420
    %v1423 = vtanh.pop %v1421
    %1426 = vrot.lane.b32.xlu0 %v1422, 64
    %v1427 = vpop.permute.xlu0 %1426
    %1428 = vrot.lane.b32.xlu0 %v1423, 64
    %v1429 = vpop.permute.xlu0 %1428
    %v1432 = vmul.f32 %v1389, %v1427
    %v1433 = vmul.f32 %v1391, %v1429
    %1436 = vrot.lane.b32.xlu0 %v1432, 32
    %v1437 = vpop.permute.xlu0 %1436
    %1438 = vrot.lane.b32.xlu0 %v1433, 32
    %v1439 = vpop.permute.xlu0 %1438
    %vm1442 = vcmask 261127
    %1443 = vst.msk [vmem:[#allocation2] sm:$0x80] %vm1442, %v1437
    %1444 = vst.msk [vmem:[#allocation2 + $0x8] sm:$0x80] %vm1442, %v1439
    %v1445 = vld [vmem:[#allocation2] sm:$0xff]
    %v1446 = vld [vmem:[#allocation2 + $0x8] sm:$0xff]
    %v1447 = vld [vmem:[%s4] sm:$0xff]
    %v1448 = vld [vmem:[%s4 + $0x8] sm:$0xff]
    %v1449 = vld [vmem:[%s4 + $0x10] sm:$0xff]
    %v1450 = vld [vmem:[%s4 + $0x18] sm:$0xff]
    %v1451 = vld [vmem:[#allocation8] sm:$0xff]
    %v1452 = vld [vmem:[#allocation8 + $0x8] sm:$0xff]
    %v1453 = vld [vmem:[#allocation8 + $0x10] sm:$0xff]
    %v1454 = vld [vmem:[#allocation8 + $0x18] sm:$0xff]
    %v1455 = vld [vmem:[#allocation9] sm:$0x1]
    %v1457 = vlaneseq
    %v1458 = vshrl.u32 %v1457, 7
    %v1459 = vsub.s32 0, %v1458
    %v1460 = vrot.slane %v1455, %v1459
    %v1463 = vsel %vm265, %v1445, 0
    %v1466 = vsel %vm265, %v1446, 0
    %1468 = vmatprep.subr.mxu0 0.0
    %1469 = vmatpush1.msra.mxu0 %v1447
    %1470 = vmatprep.subr.mxu0 0.0
    %1471 = vmatpush1.msra.mxu0 %v1448
    %1472 = vmatprep.subr.mxu0 0.0
    %1473 = vmatpush1.msra.mxu0 %v1449
    %1474 = vmatprep.subr.mxu0 0.0
    %1475 = vmatpush1.msra.mxu0 %v1450
    %1476 = vmatprep.subr.mxu0 0.0
    %1477 = vmatpush1.msra.mxu0 0.0
    %1478 = vmatprep.subr.mxu0 0.0
    %1479 = vmatpush1.msra.mxu0 0.0
    %1480 = vmatprep.subr.mxu0 0.0
    %1481 = vmatpush1.msra.mxu0 0.0
    %1482 = vmatprep.subr.mxu0 0.0
    %1483 = vmatpush1.msra.mxu0 0.0
    %1484 = vmatprep.subr.mxu0 0.0
    %1485 = vmatpush1.msra.mxu0 0.0
    %1486 = vmatprep.subr.mxu0 0.0
    %1487 = vmatpush1.msra.mxu0 0.0
    %1488 = vmatprep.subr.mxu0 0.0
    %1489 = vmatpush1.msra.mxu0 0.0
    %1490 = vmatprep.subr.mxu0 0.0
    %1491 = vmatpush1.msra.mxu0 0.0
    %1492 = vmatprep.subr.mxu0 0.0
    %1493 = vmatpush1.msra.mxu0 0.0
    %1494 = vmatprep.subr.mxu0 0.0
    %1495 = vmatpush1.msra.mxu0 0.0
    %1496 = vmatprep.subr.mxu0 0.0
    %1497 = vmatpush1.msra.mxu0 0.0
    %1498 = vmatprep.subr.mxu0 0.0
    %1499 = vmatpush1.msra.mxu0 0.0
    %1500 = vmatprep.subr.mxu0 0.0
    %1501 = vmatpush1.msra.mxu0 0.0
    %1502 = vmatprep.subr.mxu0 0.0
    %1503 = vmatpush1.msra.mxu0 0.0
    %1504 = vmatprep.subr.mxu0 0.0
    %1505 = vmatpush1.msra.mxu0 0.0
    %1506 = vmatprep.subr.mxu0 0.0
    %1507 = vmatpush1.msra.mxu0 0.0
    %1508 = vmatprep.subr.mxu0 0.0
    %1509 = vmatpush1.msra.mxu0 0.0
    %1510 = vmatprep.subr.mxu0 0.0
    %1511 = vmatpush1.msra.mxu0 0.0
    %1512 = vmatprep.subr.mxu0 0.0
    %1513 = vmatpush1.msra.mxu0 0.0
    %1514 = vmatprep.subr.mxu0 0.0
    %1515 = vmatpush1.msra.mxu0 0.0
    %1516 = vmatprep.subr.mxu0 0.0
    %1517 = vmatpush1.msra.mxu0 0.0
    %1518 = vmatprep.subr.mxu0 0.0
    %1519 = vmatpush1.msra.mxu0 0.0
    %1520 = vmatprep.subr.mxu0 0.0
    %1521 = vmatpush1.msra.mxu0 0.0
    %1522 = vmatprep.subr.mxu0 0.0
    %1523 = vmatpush1.msra.mxu0 0.0
    %1524 = vmatprep.subr.mxu0 0.0
    %1525 = vmatpush1.msra.mxu0 0.0
    %1526 = vmatprep.subr.mxu0 0.0
    %1527 = vmatpush1.msra.mxu0 0.0
    %1528 = vmatprep.subr.mxu0 0.0
    %1529 = vmatpush1.msra.mxu0 0.0
    %1530 = vmatprep.subr.mxu0 0.0
    %1531 = vmatpush1.msra.mxu0 0.0
    %1532 = vmatprep.mubr.f32.mxu0 0.0
    %1533 = vmatmul.mubr.f32.gmra.mrb[0].mxu0 %v1463
    %v1534 = vpop.f32.mrb[0].mxu0
    %v1535 = vadd.f32 %v1460, %v1534
    %v1536 = vpop.f32.mrb[0].mxu0
    %1537 = vmatprep.mubr.f32.mxu0 0.0
    %1538 = vmatmul.mubr.f32.gmra.mrb[0].mxu0 %v1466
    %v1539 = vpop.f32.mrb[0].mxu0
    %v1540 = vadd.f32 %v1460, %v1539
    %v1541 = vpop.f32.mrb[0].mxu0
    %1542 = vdwg.mxu0
    %1543 = vmatprep.subr.mxu0 0.0
    %1544 = vmatpush1.msra.mxu0 %v1451
    %1545 = vmatprep.subr.mxu0 0.0
    %1546 = vmatpush1.msra.mxu0 %v1452
    %1547 = vmatprep.subr.mxu0 0.0
    %1548 = vmatpush1.msra.mxu0 %v1453
    %1549 = vmatprep.subr.mxu0 0.0
    %1550 = vmatpush1.msra.mxu0 %v1454
    %1551 = vmatprep.subr.mxu0 0.0
    %1552 = vmatpush1.msra.mxu0 0.0
    %1553 = vmatprep.subr.mxu0 0.0
    %1554 = vmatpush1.msra.mxu0 0.0
    %1555 = vmatprep.subr.mxu0 0.0
    %1556 = vmatpush1.msra.mxu0 0.0
    %1557 = vmatprep.subr.mxu0 0.0
    %1558 = vmatpush1.msra.mxu0 0.0
    %1559 = vmatprep.subr.mxu0 0.0
    %1560 = vmatpush1.msra.mxu0 0.0
    %1561 = vmatprep.subr.mxu0 0.0
    %1562 = vmatpush1.msra.mxu0 0.0
    %1563 = vmatprep.subr.mxu0 0.0
    %1564 = vmatpush1.msra.mxu0 0.0
    %1565 = vmatprep.subr.mxu0 0.0
    %1566 = vmatpush1.msra.mxu0 0.0
    %1567 = vmatprep.subr.mxu0 0.0
    %1568 = vmatpush1.msra.mxu0 0.0
    %1569 = vmatprep.subr.mxu0 0.0
    %1570 = vmatpush1.msra.mxu0 0.0
    %1571 = vmatprep.subr.mxu0 0.0
    %1572 = vmatpush1.msra.mxu0 0.0
    %1573 = vmatprep.subr.mxu0 0.0
    %1574 = vmatpush1.msra.mxu0 0.0
    %1575 = vmatprep.subr.mxu0 0.0
    %1576 = vmatpush1.msra.mxu0 0.0
    %1577 = vmatprep.subr.mxu0 0.0
    %1578 = vmatpush1.msra.mxu0 0.0
    %1579 = vmatprep.subr.mxu0 0.0
    %1580 = vmatpush1.msra.mxu0 0.0
    %1581 = vmatprep.subr.mxu0 0.0
    %1582 = vmatpush1.msra.mxu0 0.0
    %1583 = vmatprep.subr.mxu0 0.0
    %1584 = vmatpush1.msra.mxu0 0.0
    %1585 = vmatprep.subr.mxu0 0.0
    %1586 = vmatpush1.msra.mxu0 0.0
    %1587 = vmatprep.subr.mxu0 0.0
    %1588 = vmatpush1.msra.mxu0 0.0
    %1589 = vmatprep.subr.mxu0 0.0
    %1590 = vmatpush1.msra.mxu0 0.0
    %1591 = vmatprep.subr.mxu0 0.0
    %1592 = vmatpush1.msra.mxu0 0.0
    %1593 = vmatprep.subr.mxu0 0.0
    %1594 = vmatpush1.msra.mxu0 0.0
    %1595 = vmatprep.subr.mxu0 0.0
    %1596 = vmatpush1.msra.mxu0 0.0
    %1597 = vmatprep.subr.mxu0 0.0
    %1598 = vmatpush1.msra.mxu0 0.0
    %1599 = vmatprep.subr.mxu0 0.0
    %1600 = vmatpush1.msra.mxu0 0.0
    %1601 = vmatprep.subr.mxu0 0.0
    %1602 = vmatpush1.msra.mxu0 0.0
    %1603 = vmatprep.subr.mxu0 0.0
    %1604 = vmatpush1.msra.mxu0 0.0
    %1605 = vmatprep.subr.mxu0 0.0
    %1606 = vmatpush1.msra.mxu0 0.0
    %1607 = vmatprep.mubr.f32.mxu0 0.0
    %1608 = vmatmul.mubr.f32.gmra.mrb[0].mxu0 %v267
    %v1609 = vpop.f32.mrb[0].mxu0
    %v1610 = vadd.f32 0.0, %v1609
    %v1611 = vpop.f32.mrb[0].mxu0
    %1612 = vdwg.mxu0
    %v1614 = vrot.slane %v1610, 1
    %v1617 = vadd.f32 %v1535, %v1610
    %v1618 = vadd.f32 %v1540, %v1614
    %v1619 = vxor.u32 %v1617, 2147483648
    %v1620 = vxor.u32 %v1618, 2147483648
    %v1621 = vmul.f32 %v1619, 1.442695
    %v1622 = vpow.pop %v1621
    %v1623 = vmul.f32 %v1620, 1.442695
    %v1624 = vpow.pop %v1623
    %v1625 = vadd.f32 %v1622, 1.0
    %v1626 = vadd.f32 %v1624, 1.0
    %v1627 = vrcp.pop %v1625
    %v1628 = vmul.f32 1.0, %v1627
    %v1629 = vrcp.pop %v1626
    %v1630 = vmul.f32 1.0, %v1629
    %v1631 = vtanh.pop %v1617
    %v1632 = vtanh.pop %v1618
    %v1633 = vmul.f32 %v1628, 0.0
    %v1634 = vmul.f32 %v1630, 0.0
    %1637 = vrot.lane.b32.xlu0 %v1631, 64
    %v1638 = vpop.permute.xlu0 %1637
    %1639 = vrot.lane.b32.xlu0 %v1632, 64
    %v1640 = vpop.permute.xlu0 %1639
    %v1643 = vmul.f32 %v1628, %v1638
    %v1644 = vmul.f32 %v1630, %v1640
    %1647 = vrot.lane.b32.xlu0 %v1643, 32
    %v1648 = vpop.permute.xlu0 %1647
    %1649 = vrot.lane.b32.xlu0 %v1644, 32
    %v1650 = vpop.permute.xlu0 %1649
    %v1653 = vadd.f32 %v1633, %v1648
    %v1654 = vadd.f32 %v1634, %v1650
    %v1655 = vtanh.pop %v1653
    %v1656 = vtanh.pop %v1654
    %1659 = vrot.lane.b32.xlu0 %v1655, 64
    %v1660 = vpop.permute.xlu0 %1659
    %1661 = vrot.lane.b32.xlu0 %v1656, 64
    %v1662 = vpop.permute.xlu0 %1661
    %v1665 = vmul.f32 %v1628, %v1660
    %v1666 = vmul.f32 %v1630, %v1662
    %1669 = vrot.lane.b32.xlu0 %v1665, 32
    %v1670 = vpop.permute.xlu0 %1669
    %1671 = vrot.lane.b32.xlu0 %v1666, 32
    %v1672 = vpop.permute.xlu0 %1671
    %1675 = vst.msk [vmem:[#allocation2] sm:$0x1] %vm401, %v1670
    %1676 = vst.msk [vmem:[#allocation2 + $0x8] sm:$0x1] %vm401, %v1672
    %v1677 = vrot.slane %v1666, 7
    %v1678 = vsel %vm405, %v1677, %v1665
    %1679 = vrot.lane.b32.xlu0 %v1678, 32
    %v1680 = vpop.permute.xlu0 %1679
    %v1681 = vsel %vm265, %v1680, 0
    %1683 = vmatprep.subr.mxu0 0.0
    %1684 = vmatpush1.msra.mxu0 %v1451
    %1685 = vmatprep.subr.mxu0 0.0
    %1686 = vmatpush1.msra.mxu0 %v1452
    %1687 = vmatprep.subr.mxu0 0.0
    %1688 = vmatpush1.msra.mxu0 %v1453
    %1689 = vmatprep.subr.mxu0 0.0
    %1690 = vmatpush1.msra.mxu0 %v1454
    %1691 = vmatprep.subr.mxu0 0.0
    %1692 = vmatpush1.msra.mxu0 0.0
    %1693 = vmatprep.subr.mxu0 0.0
    %1694 = vmatpush1.msra.mxu0 0.0
    %1695 = vmatprep.subr.mxu0 0.0
    %1696 = vmatpush1.msra.mxu0 0.0
    %1697 = vmatprep.subr.mxu0 0.0
    %1698 = vmatpush1.msra.mxu0 0.0
    %1699 = vmatprep.subr.mxu0 0.0
    %1700 = vmatpush1.msra.mxu0 0.0
    %1701 = vmatprep.subr.mxu0 0.0
    %1702 = vmatpush1.msra.mxu0 0.0
    %1703 = vmatprep.subr.mxu0 0.0
    %1704 = vmatpush1.msra.mxu0 0.0
    %1705 = vmatprep.subr.mxu0 0.0
    %1706 = vmatpush1.msra.mxu0 0.0
    %1707 = vmatprep.subr.mxu0 0.0
    %1708 = vmatpush1.msra.mxu0 0.0
    %1709 = vmatprep.subr.mxu0 0.0
    %1710 = vmatpush1.msra.mxu0 0.0
    %1711 = vmatprep.subr.mxu0 0.0
    %1712 = vmatpush1.msra.mxu0 0.0
    %1713 = vmatprep.subr.mxu0 0.0
    %1714 = vmatpush1.msra.mxu0 0.0
    %1715 = vmatprep.subr.mxu0 0.0
    %1716 = vmatpush1.msra.mxu0 0.0
    %1717 = vmatprep.subr.mxu0 0.0
    %1718 = vmatpush1.msra.mxu0 0.0
    %1719 = vmatprep.subr.mxu0 0.0
    %1720 = vmatpush1.msra.mxu0 0.0
    %1721 = vmatprep.subr.mxu0 0.0
    %1722 = vmatpush1.msra.mxu0 0.0
    %1723 = vmatprep.subr.mxu0 0.0
    %1724 = vmatpush1.msra.mxu0 0.0
    %1725 = vmatprep.subr.mxu0 0.0
    %1726 = vmatpush1.msra.mxu0 0.0
    %1727 = vmatprep.subr.mxu0 0.0
    %1728 = vmatpush1.msra.mxu0 0.0
    %1729 = vmatprep.subr.mxu0 0.0
    %1730 = vmatpush1.msra.mxu0 0.0
    %1731 = vmatprep.subr.mxu0 0.0
    %1732 = vmatpush1.msra.mxu0 0.0
    %1733 = vmatprep.subr.mxu0 0.0
    %1734 = vmatpush1.msra.mxu0 0.0
    %1735 = vmatprep.subr.mxu0 0.0
    %1736 = vmatpush1.msra.mxu0 0.0
    %1737 = vmatprep.subr.mxu0 0.0
    %1738 = vmatpush1.msra.mxu0 0.0
    %1739 = vmatprep.subr.mxu0 0.0
    %1740 = vmatpush1.msra.mxu0 0.0
    %1741 = vmatprep.subr.mxu0 0.0
    %1742 = vmatpush1.msra.mxu0 0.0
    %1743 = vmatprep.subr.mxu0 0.0
    %1744 = vmatpush1.msra.mxu0 0.0
    %1745 = vmatprep.subr.mxu0 0.0
    %1746 = vmatpush1.msra.mxu0 0.0
    %1747 = vmatprep.mubr.f32.mxu0 0.0
    %1748 = vmatmul.mubr.f32.gmra.mrb[0].mxu0 %v1681
    %v1749 = vpop.f32.mrb[0].mxu0
    %v1750 = vadd.f32 0.0, %v1749
    %v1751 = vpop.f32.mrb[0].mxu0
    %1752 = vdwg.mxu0
    %v1754 = vrot.slane %v1750, 7
    %v1757 = vadd.f32 %v1535, %v1754
    %v1758 = vadd.f32 %v1540, %v1750
    %v1759 = vxor.u32 %v1757, 2147483648
    %v1760 = vxor.u32 %v1758, 2147483648
    %v1761 = vmul.f32 %v1759, 1.442695
    %v1762 = vpow.pop %v1761
    %v1763 = vmul.f32 %v1760, 1.442695
    %v1764 = vpow.pop %v1763
    %v1765 = vadd.f32 %v1762, 1.0
    %v1766 = vadd.f32 %v1764, 1.0
    %v1767 = vrcp.pop %v1765
    %v1768 = vmul.f32 1.0, %v1767
    %v1769 = vrcp.pop %v1766
    %v1770 = vmul.f32 1.0, %v1769
    %v1771 = vtanh.pop %v1757
    %v1772 = vtanh.pop %v1758
    %v1775 = vrot.slane %v1653, 7
    %v1776 = vrot.slane %v1654, 7
    %v1779 = vmul.f32 %v1768, %v1775
    %v1780 = vmul.f32 %v1770, %v1776
    %1783 = vrot.lane.b32.xlu0 %v1771, 64
    %v1784 = vpop.permute.xlu0 %1783
    %1785 = vrot.lane.b32.xlu0 %v1772, 64
    %v1786 = vpop.permute.xlu0 %1785
    %v1789 = vmul.f32 %v1768, %v1784
    %v1790 = vmul.f32 %v1770, %v1786
    %1793 = vrot.lane.b32.xlu0 %v1789, 32
    %v1794 = vpop.permute.xlu0 %1793
    %1795 = vrot.lane.b32.xlu0 %v1790, 32
    %v1796 = vpop.permute.xlu0 %1795
    %v1799 = vadd.f32 %v1779, %v1794
    %v1800 = vadd.f32 %v1780, %v1796
    %v1801 = vtanh.pop %v1799
    %v1802 = vtanh.pop %v1800
    %1805 = vrot.lane.b32.xlu0 %v1801, 64
    %v1806 = vpop.permute.xlu0 %1805
    %1807 = vrot.lane.b32.xlu0 %v1802, 64
    %v1808 = vpop.permute.xlu0 %1807
    %v1811 = vmul.f32 %v1768, %v1806
    %v1812 = vmul.f32 %v1770, %v1808
    %1815 = vrot.lane.b32.xlu0 %v1811, 32
    %v1816 = vpop.permute.xlu0 %1815
    %1817 = vrot.lane.b32.xlu0 %v1812, 32
    %v1818 = vpop.permute.xlu0 %1817
    %1821 = vst.msk [vmem:[#allocation2] sm:$0x2] %vm549, %v1816
    %1822 = vst.msk [vmem:[#allocation2 + $0x8] sm:$0x2] %vm549, %v1818
    %v1823 = vrot.slane %v1811, 1
    %v1824 = vsel %vm405, %v1812, %v1823
    %1825 = vrot.lane.b32.xlu0 %v1824, 32
    %v1826 = vpop.permute.xlu0 %1825
    %v1827 = vsel %vm265, %v1826, 0
    %1829 = vmatprep.subr.mxu0 0.0
    %1830 = vmatpush1.msra.mxu0 %v1451
    %1831 = vmatprep.subr.mxu0 0.0
    %1832 = vmatpush1.msra.mxu0 %v1452
    %1833 = vmatprep.subr.mxu0 0.0
    %1834 = vmatpush1.msra.mxu0 %v1453
    %1835 = vmatprep.subr.mxu0 0.0
    %1836 = vmatpush1.msra.mxu0 %v1454
    %1837 = vmatprep.subr.mxu0 0.0
    %1838 = vmatpush1.msra.mxu0 0.0
    %1839 = vmatprep.subr.mxu0 0.0
    %1840 = vmatpush1.msra.mxu0 0.0
    %1841 = vmatprep.subr.mxu0 0.0
    %1842 = vmatpush1.msra.mxu0 0.0
    %1843 = vmatprep.subr.mxu0 0.0
    %1844 = vmatpush1.msra.mxu0 0.0
    %1845 = vmatprep.subr.mxu0 0.0
    %1846 = vmatpush1.msra.mxu0 0.0
    %1847 = vmatprep.subr.mxu0 0.0
    %1848 = vmatpush1.msra.mxu0 0.0
    %1849 = vmatprep.subr.mxu0 0.0
    %1850 = vmatpush1.msra.mxu0 0.0
    %1851 = vmatprep.subr.mxu0 0.0
    %1852 = vmatpush1.msra.mxu0 0.0
    %1853 = vmatprep.subr.mxu0 0.0
    %1854 = vmatpush1.msra.mxu0 0.0
    %1855 = vmatprep.subr.mxu0 0.0
    %1856 = vmatpush1.msra.mxu0 0.0
    %1857 = vmatprep.subr.mxu0 0.0
    %1858 = vmatpush1.msra.mxu0 0.0
    %1859 = vmatprep.subr.mxu0 0.0
    %1860 = vmatpush1.msra.mxu0 0.0
    %1861 = vmatprep.subr.mxu0 0.0
    %1862 = vmatpush1.msra.mxu0 0.0
    %1863 = vmatprep.subr.mxu0 0.0
    %1864 = vmatpush1.msra.mxu0 0.0
    %1865 = vmatprep.subr.mxu0 0.0
    %1866 = vmatpush1.msra.mxu0 0.0
    %1867 = vmatprep.subr.mxu0 0.0
    %1868 = vmatpush1.msra.mxu0 0.0
    %1869 = vmatprep.subr.mxu0 0.0
    %1870 = vmatpush1.msra.mxu0 0.0
    %1871 = vmatprep.subr.mxu0 0.0
    %1872 = vmatpush1.msra.mxu0 0.0
    %1873 = vmatprep.subr.mxu0 0.0
    %1874 = vmatpush1.msra.mxu0 0.0
    %1875 = vmatprep.subr.mxu0 0.0
    %1876 = vmatpush1.msra.mxu0 0.0
    %1877 = vmatprep.subr.mxu0 0.0
    %1878 = vmatpush1.msra.mxu0 0.0
    %1879 = vmatprep.subr.mxu0 0.0
    %1880 = vmatpush1.msra.mxu0 0.0
    %1881 = vmatprep.subr.mxu0 0.0
    %1882 = vmatpush1.msra.mxu0 0.0
    %1883 = vmatprep.subr.mxu0 0.0
    %1884 = vmatpush1.msra.mxu0 0.0
    %1885 = vmatprep.subr.mxu0 0.0
    %1886 = vmatpush1.msra.mxu0 0.0
    %1887 = vmatprep.subr.mxu0 0.0
    %1888 = vmatpush1.msra.mxu0 0.0
    %1889 = vmatprep.subr.mxu0 0.0
    %1890 = vmatpush1.msra.mxu0 0.0
    %1891 = vmatprep.subr.mxu0 0.0
    %1892 = vmatpush1.msra.mxu0 0.0
    %1893 = vmatprep.mubr.f32.mxu0 0.0
    %1894 = vmatmul.mubr.f32.gmra.mrb[0].mxu0 %v1827
    %v1895 = vpop.f32.mrb[0].mxu0
    %v1896 = vadd.f32 0.0, %v1895
    %v1897 = vpop.f32.mrb[0].mxu0
    %1898 = vdwg.mxu0
    %v1900 = vrot.slane %v1896, 6
    %v1901 = vrot.slane %v1896, 7
    %v1904 = vadd.f32 %v1535, %v1900
    %v1905 = vadd.f32 %v1540, %v1901
    %v1906 = vxor.u32 %v1904, 2147483648
    %v1907 = vxor.u32 %v1905, 2147483648
    %v1908 = vmul.f32 %v1906, 1.442695
    %v1909 = vpow.pop %v1908
    %v1910 = vmul.f32 %v1907, 1.442695
    %v1911 = vpow.pop %v1910
    %v1912 = vadd.f32 %v1909, 1.0
    %v1913 = vadd.f32 %v1911, 1.0
    %v1914 = vrcp.pop %v1912
    %v1915 = vmul.f32 1.0, %v1914
    %v1916 = vrcp.pop %v1913
    %v1917 = vmul.f32 1.0, %v1916
    %v1918 = vtanh.pop %v1904
    %v1919 = vtanh.pop %v1905
    %v1922 = vrot.slane %v1799, 7
    %v1923 = vrot.slane %v1800, 7
    %v1926 = vmul.f32 %v1915, %v1922
    %v1927 = vmul.f32 %v1917, %v1923
    %1930 = vrot.lane.b32.xlu0 %v1918, 64
    %v1931 = vpop.permute.xlu0 %1930
    %1932 = vrot.lane.b32.xlu0 %v1919, 64
    %v1933 = vpop.permute.xlu0 %1932
    %v1936 = vmul.f32 %v1915, %v1931
    %v1937 = vmul.f32 %v1917, %v1933
    %1940 = vrot.lane.b32.xlu0 %v1936, 32
    %v1941 = vpop.permute.xlu0 %1940
    %1942 = vrot.lane.b32.xlu0 %v1937, 32
    %v1943 = vpop.permute.xlu0 %1942
    %v1946 = vadd.f32 %v1926, %v1941
    %v1947 = vadd.f32 %v1927, %v1943
    %v1948 = vtanh.pop %v1946
    %v1949 = vtanh.pop %v1947
    %1952 = vrot.lane.b32.xlu0 %v1948, 64
    %v1953 = vpop.permute.xlu0 %1952
    %1954 = vrot.lane.b32.xlu0 %v1949, 64
    %v1955 = vpop.permute.xlu0 %1954
    %v1958 = vmul.f32 %v1915, %v1953
    %v1959 = vmul.f32 %v1917, %v1955
    %1962 = vrot.lane.b32.xlu0 %v1958, 32
    %v1963 = vpop.permute.xlu0 %1962
    %1964 = vrot.lane.b32.xlu0 %v1959, 32
    %v1965 = vpop.permute.xlu0 %1964
    %1968 = vst.msk [vmem:[#allocation2] sm:$0x4] %vm697, %v1963
    %1969 = vst.msk [vmem:[#allocation2 + $0x8] sm:$0x4] %vm697, %v1965
    %v1970 = vrot.slane %v1958, 2
    %v1971 = vrot.slane %v1959, 1
    %v1972 = vsel %vm405, %v1971, %v1970
    %1973 = vrot.lane.b32.xlu0 %v1972, 32
    %v1974 = vpop.permute.xlu0 %1973
    %v1975 = vsel %vm265, %v1974, 0
    %1977 = vmatprep.subr.mxu0 0.0
    %1978 = vmatpush1.msra.mxu0 %v1451
    %1979 = vmatprep.subr.mxu0 0.0
    %1980 = vmatpush1.msra.mxu0 %v1452
    %1981 = vmatprep.subr.mxu0 0.0
    %1982 = vmatpush1.msra.mxu0 %v1453
    %1983 = vmatprep.subr.mxu0 0.0
    %1984 = vmatpush1.msra.mxu0 %v1454
    %1985 = vmatprep.subr.mxu0 0.0
    %1986 = vmatpush1.msra.mxu0 0.0
    %1987 = vmatprep.subr.mxu0 0.0
    %1988 = vmatpush1.msra.mxu0 0.0
    %1989 = vmatprep.subr.mxu0 0.0
    %1990 = vmatpush1.msra.mxu0 0.0
    %1991 = vmatprep.subr.mxu0 0.0
    %1992 = vmatpush1.msra.mxu0 0.0
    %1993 = vmatprep.subr.mxu0 0.0
    %1994 = vmatpush1.msra.mxu0 0.0
    %1995 = vmatprep.subr.mxu0 0.0
    %1996 = vmatpush1.msra.mxu0 0.0
    %1997 = vmatprep.subr.mxu0 0.0
    %1998 = vmatpush1.msra.mxu0 0.0
    %1999 = vmatprep.subr.mxu0 0.0
    %2000 = vmatpush1.msra.mxu0 0.0
    %2001 = vmatprep.subr.mxu0 0.0
    %2002 = vmatpush1.msra.mxu0 0.0
    %2003 = vmatprep.subr.mxu0 0.0
    %2004 = vmatpush1.msra.mxu0 0.0
    %2005 = vmatprep.subr.mxu0 0.0
    %2006 = vmatpush1.msra.mxu0 0.0
    %2007 = vmatprep.subr.mxu0 0.0
    %2008 = vmatpush1.msra.mxu0 0.0
    %2009 = vmatprep.subr.mxu0 0.0
    %2010 = vmatpush1.msra.mxu0 0.0
    %2011 = vmatprep.subr.mxu0 0.0
    %2012 = vmatpush1.msra.mxu0 0.0
    %2013 = vmatprep.subr.mxu0 0.0
    %2014 = vmatpush1.msra.mxu0 0.0
    %2015 = vmatprep.subr.mxu0 0.0
    %2016 = vmatpush1.msra.mxu0 0.0
    %2017 = vmatprep.subr.mxu0 0.0
    %2018 = vmatpush1.msra.mxu0 0.0
    %2019 = vmatprep.subr.mxu0 0.0
    %2020 = vmatpush1.msra.mxu0 0.0
    %2021 = vmatprep.subr.mxu0 0.0
    %2022 = vmatpush1.msra.mxu0 0.0
    %2023 = vmatprep.subr.mxu0 0.0
    %2024 = vmatpush1.msra.mxu0 0.0
    %2025 = vmatprep.subr.mxu0 0.0
    %2026 = vmatpush1.msra.mxu0 0.0
    %2027 = vmatprep.subr.mxu0 0.0
    %2028 = vmatpush1.msra.mxu0 0.0
    %2029 = vmatprep.subr.mxu0 0.0
    %2030 = vmatpush1.msra.mxu0 0.0
    %2031 = vmatprep.subr.mxu0 0.0
    %2032 = vmatpush1.msra.mxu0 0.0
    %2033 = vmatprep.subr.mxu0 0.0
    %2034 = vmatpush1.msra.mxu0 0.0
    %2035 = vmatprep.subr.mxu0 0.0
    %2036 = vmatpush1.msra.mxu0 0.0
    %2037 = vmatprep.subr.mxu0 0.0
    %2038 = vmatpush1.msra.mxu0 0.0
    %2039 = vmatprep.subr.mxu0 0.0
    %2040 = vmatpush1.msra.mxu0 0.0
    %2041 = vmatprep.mubr.f32.mxu0 0.0
    %2042 = vmatmul.mubr.f32.gmra.mrb[0].mxu0 %v1975
    %v2043 = vpop.f32.mrb[0].mxu0
    %v2044 = vadd.f32 0.0, %v2043
    %v2045 = vpop.f32.mrb[0].mxu0
    %2046 = vdwg.mxu0
    %v2048 = vrot.slane %v2044, 5
    %v2049 = vrot.slane %v2044, 6
    %v2052 = vadd.f32 %v1535, %v2048
    %v2053 = vadd.f32 %v1540, %v2049
    %v2054 = vxor.u32 %v2052, 2147483648
    %v2055 = vxor.u32 %v2053, 2147483648
    %v2056 = vmul.f32 %v2054, 1.442695
    %v2057 = vpow.pop %v2056
    %v2058 = vmul.f32 %v2055, 1.442695
    %v2059 = vpow.pop %v2058
    %v2060 = vadd.f32 %v2057, 1.0
    %v2061 = vadd.f32 %v2059, 1.0
    %v2062 = vrcp.pop %v2060
    %v2063 = vmul.f32 1.0, %v2062
    %v2064 = vrcp.pop %v2061
    %v2065 = vmul.f32 1.0, %v2064
    %v2066 = vtanh.pop %v2052
    %v2067 = vtanh.pop %v2053
    %v2070 = vrot.slane %v1946, 7
    %v2071 = vrot.slane %v1947, 7
    %v2074 = vmul.f32 %v2063, %v2070
    %v2075 = vmul.f32 %v2065, %v2071
    %2078 = vrot.lane.b32.xlu0 %v2066, 64
    %v2079 = vpop.permute.xlu0 %2078
    %2080 = vrot.lane.b32.xlu0 %v2067, 64
    %v2081 = vpop.permute.xlu0 %2080
    %v2084 = vmul.f32 %v2063, %v2079
    %v2085 = vmul.f32 %v2065, %v2081
    %2088 = vrot.lane.b32.xlu0 %v2084, 32
    %v2089 = vpop.permute.xlu0 %2088
    %2090 = vrot.lane.b32.xlu0 %v2085, 32
    %v2091 = vpop.permute.xlu0 %2090
    %v2094 = vadd.f32 %v2074, %v2089
    %v2095 = vadd.f32 %v2075, %v2091
    %v2096 = vtanh.pop %v2094
    %v2097 = vtanh.pop %v2095
    %2100 = vrot.lane.b32.xlu0 %v2096, 64
    %v2101 = vpop.permute.xlu0 %2100
    %2102 = vrot.lane.b32.xlu0 %v2097, 64
    %v2103 = vpop.permute.xlu0 %2102
    %v2106 = vmul.f32 %v2063, %v2101
    %v2107 = vmul.f32 %v2065, %v2103
    %2110 = vrot.lane.b32.xlu0 %v2106, 32
    %v2111 = vpop.permute.xlu0 %2110
    %2112 = vrot.lane.b32.xlu0 %v2107, 32
    %v2113 = vpop.permute.xlu0 %2112
    %2116 = vst.msk [vmem:[#allocation2] sm:$0x8] %vm846, %v2111
    %2117 = vst.msk [vmem:[#allocation2 + $0x8] sm:$0x8] %vm846, %v2113
    %v2118 = vrot.slane %v2106, 3
    %v2119 = vrot.slane %v2107, 2
    %v2120 = vsel %vm405, %v2119, %v2118
    %2121 = vrot.lane.b32.xlu0 %v2120, 32
    %v2122 = vpop.permute.xlu0 %2121
    %v2123 = vsel %vm265, %v2122, 0
    %2125 = vmatprep.subr.mxu0 0.0
    %2126 = vmatpush1.msra.mxu0 %v1451
    %2127 = vmatprep.subr.mxu0 0.0
    %2128 = vmatpush1.msra.mxu0 %v1452
    %2129 = vmatprep.subr.mxu0 0.0
    %2130 = vmatpush1.msra.mxu0 %v1453
    %2131 = vmatprep.subr.mxu0 0.0
    %2132 = vmatpush1.msra.mxu0 %v1454
    %2133 = vmatprep.subr.mxu0 0.0
    %2134 = vmatpush1.msra.mxu0 0.0
    %2135 = vmatprep.subr.mxu0 0.0
    %2136 = vmatpush1.msra.mxu0 0.0
    %2137 = vmatprep.subr.mxu0 0.0
    %2138 = vmatpush1.msra.mxu0 0.0
    %2139 = vmatprep.subr.mxu0 0.0
    %2140 = vmatpush1.msra.mxu0 0.0
    %2141 = vmatprep.subr.mxu0 0.0
    %2142 = vmatpush1.msra.mxu0 0.0
    %2143 = vmatprep.subr.mxu0 0.0
    %2144 = vmatpush1.msra.mxu0 0.0
    %2145 = vmatprep.subr.mxu0 0.0
    %2146 = vmatpush1.msra.mxu0 0.0
    %2147 = vmatprep.subr.mxu0 0.0
    %2148 = vmatpush1.msra.mxu0 0.0
    %2149 = vmatprep.subr.mxu0 0.0
    %2150 = vmatpush1.msra.mxu0 0.0
    %2151 = vmatprep.subr.mxu0 0.0
    %2152 = vmatpush1.msra.mxu0 0.0
    %2153 = vmatprep.subr.mxu0 0.0
    %2154 = vmatpush1.msra.mxu0 0.0
    %2155 = vmatprep.subr.mxu0 0.0
    %2156 = vmatpush1.msra.mxu0 0.0
    %2157 = vmatprep.subr.mxu0 0.0
    %2158 = vmatpush1.msra.mxu0 0.0
    %2159 = vmatprep.subr.mxu0 0.0
    %2160 = vmatpush1.msra.mxu0 0.0
    %2161 = vmatprep.subr.mxu0 0.0
    %2162 = vmatpush1.msra.mxu0 0.0
    %2163 = vmatprep.subr.mxu0 0.0
    %2164 = vmatpush1.msra.mxu0 0.0
    %2165 = vmatprep.subr.mxu0 0.0
    %2166 = vmatpush1.msra.mxu0 0.0
    %2167 = vmatprep.subr.mxu0 0.0
    %2168 = vmatpush1.msra.mxu0 0.0
    %2169 = vmatprep.subr.mxu0 0.0
    %2170 = vmatpush1.msra.mxu0 0.0
    %2171 = vmatprep.subr.mxu0 0.0
    %2172 = vmatpush1.msra.mxu0 0.0
    %2173 = vmatprep.subr.mxu0 0.0
    %2174 = vmatpush1.msra.mxu0 0.0
    %2175 = vmatprep.subr.mxu0 0.0
    %2176 = vmatpush1.msra.mxu0 0.0
    %2177 = vmatprep.subr.mxu0 0.0
    %2178 = vmatpush1.msra.mxu0 0.0
    %2179 = vmatprep.subr.mxu0 0.0
    %2180 = vmatpush1.msra.mxu0 0.0
    %2181 = vmatprep.subr.mxu0 0.0
    %2182 = vmatpush1.msra.mxu0 0.0
    %2183 = vmatprep.subr.mxu0 0.0
    %2184 = vmatpush1.msra.mxu0 0.0
    %2185 = vmatprep.subr.mxu0 0.0
    %2186 = vmatpush1.msra.mxu0 0.0
    %2187 = vmatprep.subr.mxu0 0.0
    %2188 = vmatpush1.msra.mxu0 0.0
    %2189 = vmatprep.mubr.f32.mxu0 0.0
    %2190 = vmatmul.mubr.f32.gmra.mrb[0].mxu0 %v2123
    %v2191 = vpop.f32.mrb[0].mxu0
    %v2192 = vadd.f32 0.0, %v2191
    %v2193 = vpop.f32.mrb[0].mxu0
    %2194 = vdwg.mxu0
    %v2196 = vrot.slane %v2192, 4
    %v2197 = vrot.slane %v2192, 5
    %v2200 = vadd.f32 %v1535, %v2196
    %v2201 = vadd.f32 %v1540, %v2197
    %v2202 = vxor.u32 %v2200, 2147483648
    %v2203 = vxor.u32 %v2201, 2147483648
    %v2204 = vmul.f32 %v2202, 1.442695
    %v2205 = vpow.pop %v2204
    %v2206 = vmul.f32 %v2203, 1.442695
    %v2207 = vpow.pop %v2206
    %v2208 = vadd.f32 %v2205, 1.0
    %v2209 = vadd.f32 %v2207, 1.0
    %v2210 = vrcp.pop %v2208
    %v2211 = vmul.f32 1.0, %v2210
    %v2212 = vrcp.pop %v2209
    %v2213 = vmul.f32 1.0, %v2212
    %v2214 = vtanh.pop %v2200
    %v2215 = vtanh.pop %v2201
    %v2218 = vrot.slane %v2094, 7
    %v2219 = vrot.slane %v2095, 7
    %v2222 = vmul.f32 %v2211, %v2218
    %v2223 = vmul.f32 %v2213, %v2219
    %2226 = vrot.lane.b32.xlu0 %v2214, 64
    %v2227 = vpop.permute.xlu0 %2226
    %2228 = vrot.lane.b32.xlu0 %v2215, 64
    %v2229 = vpop.permute.xlu0 %2228
    %v2232 = vmul.f32 %v2211, %v2227
    %v2233 = vmul.f32 %v2213, %v2229
    %2236 = vrot.lane.b32.xlu0 %v2232, 32
    %v2237 = vpop.permute.xlu0 %2236
    %2238 = vrot.lane.b32.xlu0 %v2233, 32
    %v2239 = vpop.permute.xlu0 %2238
    %v2242 = vadd.f32 %v2222, %v2237
    %v2243 = vadd.f32 %v2223, %v2239
    %v2244 = vtanh.pop %v2242
    %v2245 = vtanh.pop %v2243
    %2248 = vrot.lane.b32.xlu0 %v2244, 64
    %v2249 = vpop.permute.xlu0 %2248
    %2250 = vrot.lane.b32.xlu0 %v2245, 64
    %v2251 = vpop.permute.xlu0 %2250
    %v2254 = vmul.f32 %v2211, %v2249
    %v2255 = vmul.f32 %v2213, %v2251
    %2258 = vrot.lane.b32.xlu0 %v2254, 32
    %v2259 = vpop.permute.xlu0 %2258
    %2260 = vrot.lane.b32.xlu0 %v2255, 32
    %v2261 = vpop.permute.xlu0 %2260
    %2264 = vst.msk [vmem:[#allocation2] sm:$0x10] %vm995, %v2259
    %2265 = vst.msk [vmem:[#allocation2 + $0x8] sm:$0x10] %vm995, %v2261
    %v2266 = vrot.slane %v2254, 4
    %v2267 = vrot.slane %v2255, 3
    %v2268 = vsel %vm405, %v2267, %v2266
    %2269 = vrot.lane.b32.xlu0 %v2268, 32
    %v2270 = vpop.permute.xlu0 %2269
    %v2271 = vsel %vm265, %v2270, 0
    %2273 = vmatprep.subr.mxu0 0.0
    %2274 = vmatpush1.msra.mxu0 %v1451
    %2275 = vmatprep.subr.mxu0 0.0
    %2276 = vmatpush1.msra.mxu0 %v1452
    %2277 = vmatprep.subr.mxu0 0.0
    %2278 = vmatpush1.msra.mxu0 %v1453
    %2279 = vmatprep.subr.mxu0 0.0
    %2280 = vmatpush1.msra.mxu0 %v1454
    %2281 = vmatprep.subr.mxu0 0.0
    %2282 = vmatpush1.msra.mxu0 0.0
    %2283 = vmatprep.subr.mxu0 0.0
    %2284 = vmatpush1.msra.mxu0 0.0
    %2285 = vmatprep.subr.mxu0 0.0
    %2286 = vmatpush1.msra.mxu0 0.0
    %2287 = vmatprep.subr.mxu0 0.0
    %2288 = vmatpush1.msra.mxu0 0.0
    %2289 = vmatprep.subr.mxu0 0.0
    %2290 = vmatpush1.msra.mxu0 0.0
    %2291 = vmatprep.subr.mxu0 0.0
    %2292 = vmatpush1.msra.mxu0 0.0
    %2293 = vmatprep.subr.mxu0 0.0
    %2294 = vmatpush1.msra.mxu0 0.0
    %2295 = vmatprep.subr.mxu0 0.0
    %2296 = vmatpush1.msra.mxu0 0.0
    %2297 = vmatprep.subr.mxu0 0.0
    %2298 = vmatpush1.msra.mxu0 0.0
    %2299 = vmatprep.subr.mxu0 0.0
    %2300 = vmatpush1.msra.mxu0 0.0
    %2301 = vmatprep.subr.mxu0 0.0
    %2302 = vmatpush1.msra.mxu0 0.0
    %2303 = vmatprep.subr.mxu0 0.0
    %2304 = vmatpush1.msra.mxu0 0.0
    %2305 = vmatprep.subr.mxu0 0.0
    %2306 = vmatpush1.msra.mxu0 0.0
    %2307 = vmatprep.subr.mxu0 0.0
    %2308 = vmatpush1.msra.mxu0 0.0
    %2309 = vmatprep.subr.mxu0 0.0
    %2310 = vmatpush1.msra.mxu0 0.0
    %2311 = vmatprep.subr.mxu0 0.0
    %2312 = vmatpush1.msra.mxu0 0.0
    %2313 = vmatprep.subr.mxu0 0.0
    %2314 = vmatpush1.msra.mxu0 0.0
    %2315 = vmatprep.subr.mxu0 0.0
    %2316 = vmatpush1.msra.mxu0 0.0
    %2317 = vmatprep.subr.mxu0 0.0
    %2318 = vmatpush1.msra.mxu0 0.0
    %2319 = vmatprep.subr.mxu0 0.0
    %2320 = vmatpush1.msra.mxu0 0.0
    %2321 = vmatprep.subr.mxu0 0.0
    %2322 = vmatpush1.msra.mxu0 0.0
    %2323 = vmatprep.subr.mxu0 0.0
    %2324 = vmatpush1.msra.mxu0 0.0
    %2325 = vmatprep.subr.mxu0 0.0
    %2326 = vmatpush1.msra.mxu0 0.0
    %2327 = vmatprep.subr.mxu0 0.0
    %2328 = vmatpush1.msra.mxu0 0.0
    %2329 = vmatprep.subr.mxu0 0.0
    %2330 = vmatpush1.msra.mxu0 0.0
    %2331 = vmatprep.subr.mxu0 0.0
    %2332 = vmatpush1.msra.mxu0 0.0
    %2333 = vmatprep.subr.mxu0 0.0
    %2334 = vmatpush1.msra.mxu0 0.0
    %2335 = vmatprep.subr.mxu0 0.0
    %2336 = vmatpush1.msra.mxu0 0.0
    %2337 = vmatprep.mubr.f32.mxu0 0.0
    %2338 = vmatmul.mubr.f32.gmra.mrb[0].mxu0 %v2271
    %v2339 = vpop.f32.mrb[0].mxu0
    %v2340 = vadd.f32 0.0, %v2339
    %v2341 = vpop.f32.mrb[0].mxu0
    %2342 = vdwg.mxu0
    %v2344 = vrot.slane %v2340, 3
    %v2345 = vrot.slane %v2340, 4
    %v2348 = vadd.f32 %v1535, %v2344
    %v2349 = vadd.f32 %v1540, %v2345
    %v2350 = vxor.u32 %v2348, 2147483648
    %v2351 = vxor.u32 %v2349, 2147483648
    %v2352 = vmul.f32 %v2350, 1.442695
    %v2353 = vpow.pop %v2352
    %v2354 = vmul.f32 %v2351, 1.442695
    %v2355 = vpow.pop %v2354
    %v2356 = vadd.f32 %v2353, 1.0
    %v2357 = vadd.f32 %v2355, 1.0
    %v2358 = vrcp.pop %v2356
    %v2359 = vmul.f32 1.0, %v2358
    %v2360 = vrcp.pop %v2357
    %v2361 = vmul.f32 1.0, %v2360
    %v2362 = vtanh.pop %v2348
    %v2363 = vtanh.pop %v2349
    %v2366 = vrot.slane %v2242, 7
    %v2367 = vrot.slane %v2243, 7
    %v2370 = vmul.f32 %v2359, %v2366
    %v2371 = vmul.f32 %v2361, %v2367
    %2374 = vrot.lane.b32.xlu0 %v2362, 64
    %v2375 = vpop.permute.xlu0 %2374
    %2376 = vrot.lane.b32.xlu0 %v2363, 64
    %v2377 = vpop.permute.xlu0 %2376
    %v2380 = vmul.f32 %v2359, %v2375
    %v2381 = vmul.f32 %v2361, %v2377
    %2384 = vrot.lane.b32.xlu0 %v2380, 32
    %v2385 = vpop.permute.xlu0 %2384
    %2386 = vrot.lane.b32.xlu0 %v2381, 32
    %v2387 = vpop.permute.xlu0 %2386
    %v2390 = vadd.f32 %v2370, %v2385
    %v2391 = vadd.f32 %v2371, %v2387
    %v2392 = vtanh.pop %v2390
    %v2393 = vtanh.pop %v2391
    %2396 = vrot.lane.b32.xlu0 %v2392, 64
    %v2397 = vpop.permute.xlu0 %2396
    %2398 = vrot.lane.b32.xlu0 %v2393, 64
    %v2399 = vpop.permute.xlu0 %2398
    %v2402 = vmul.f32 %v2359, %v2397
    %v2403 = vmul.f32 %v2361, %v2399
    %2406 = vrot.lane.b32.xlu0 %v2402, 32
    %v2407 = vpop.permute.xlu0 %2406
    %2408 = vrot.lane.b32.xlu0 %v2403, 32
    %v2409 = vpop.permute.xlu0 %2408
    %2412 = vst.msk [vmem:[#allocation2] sm:$0x20] %vm1144, %v2407
    %2413 = vst.msk [vmem:[#allocation2 + $0x8] sm:$0x20] %vm1144, %v2409
    %v2414 = vrot.slane %v2402, 5
    %v2415 = vrot.slane %v2403, 4
    %v2416 = vsel %vm405, %v2415, %v2414
    %2417 = vrot.lane.b32.xlu0 %v2416, 32
    %v2418 = vpop.permute.xlu0 %2417
    %v2419 = vsel %vm265, %v2418, 0
    %2421 = vmatprep.subr.mxu0 0.0
    %2422 = vmatpush1.msra.mxu0 %v1451
    %2423 = vmatprep.subr.mxu0 0.0
    %2424 = vmatpush1.msra.mxu0 %v1452
    %2425 = vmatprep.subr.mxu0 0.0
    %2426 = vmatpush1.msra.mxu0 %v1453
    %2427 = vmatprep.subr.mxu0 0.0
    %2428 = vmatpush1.msra.mxu0 %v1454
    %2429 = vmatprep.subr.mxu0 0.0
    %2430 = vmatpush1.msra.mxu0 0.0
    %2431 = vmatprep.subr.mxu0 0.0
    %2432 = vmatpush1.msra.mxu0 0.0
    %2433 = vmatprep.subr.mxu0 0.0
    %2434 = vmatpush1.msra.mxu0 0.0
    %2435 = vmatprep.subr.mxu0 0.0
    %2436 = vmatpush1.msra.mxu0 0.0
    %2437 = vmatprep.subr.mxu0 0.0
    %2438 = vmatpush1.msra.mxu0 0.0
    %2439 = vmatprep.subr.mxu0 0.0
    %2440 = vmatpush1.msra.mxu0 0.0
    %2441 = vmatprep.subr.mxu0 0.0
    %2442 = vmatpush1.msra.mxu0 0.0
    %2443 = vmatprep.subr.mxu0 0.0
    %2444 = vmatpush1.msra.mxu0 0.0
    %2445 = vmatprep.subr.mxu0 0.0
    %2446 = vmatpush1.msra.mxu0 0.0
    %2447 = vmatprep.subr.mxu0 0.0
    %2448 = vmatpush1.msra.mxu0 0.0
    %2449 = vmatprep.subr.mxu0 0.0
    %2450 = vmatpush1.msra.mxu0 0.0
    %2451 = vmatprep.subr.mxu0 0.0
    %2452 = vmatpush1.msra.mxu0 0.0
    %2453 = vmatprep.subr.mxu0 0.0
    %2454 = vmatpush1.msra.mxu0 0.0
    %2455 = vmatprep.subr.mxu0 0.0
    %2456 = vmatpush1.msra.mxu0 0.0
    %2457 = vmatprep.subr.mxu0 0.0
    %2458 = vmatpush1.msra.mxu0 0.0
    %2459 = vmatprep.subr.mxu0 0.0
    %2460 = vmatpush1.msra.mxu0 0.0
    %2461 = vmatprep.subr.mxu0 0.0
    %2462 = vmatpush1.msra.mxu0 0.0
    %2463 = vmatprep.subr.mxu0 0.0
    %2464 = vmatpush1.msra.mxu0 0.0
    %2465 = vmatprep.subr.mxu0 0.0
    %2466 = vmatpush1.msra.mxu0 0.0
    %2467 = vmatprep.subr.mxu0 0.0
    %2468 = vmatpush1.msra.mxu0 0.0
    %2469 = vmatprep.subr.mxu0 0.0
    %2470 = vmatpush1.msra.mxu0 0.0
    %2471 = vmatprep.subr.mxu0 0.0
    %2472 = vmatpush1.msra.mxu0 0.0
    %2473 = vmatprep.subr.mxu0 0.0
    %2474 = vmatpush1.msra.mxu0 0.0
    %2475 = vmatprep.subr.mxu0 0.0
    %2476 = vmatpush1.msra.mxu0 0.0
    %2477 = vmatprep.subr.mxu0 0.0
    %2478 = vmatpush1.msra.mxu0 0.0
    %2479 = vmatprep.subr.mxu0 0.0
    %2480 = vmatpush1.msra.mxu0 0.0
    %2481 = vmatprep.subr.mxu0 0.0
    %2482 = vmatpush1.msra.mxu0 0.0
    %2483 = vmatprep.subr.mxu0 0.0
    %2484 = vmatpush1.msra.mxu0 0.0
    %2485 = vmatprep.mubr.f32.mxu0 0.0
    %2486 = vmatmul.mubr.f32.gmra.mrb[0].mxu0 %v2419
    %v2487 = vpop.f32.mrb[0].mxu0
    %v2488 = vadd.f32 0.0, %v2487
    %v2489 = vpop.f32.mrb[0].mxu0
    %2490 = vdwg.mxu0
    %v2492 = vrot.slane %v2488, 2
    %v2493 = vrot.slane %v2488, 3
    %v2496 = vadd.f32 %v1535, %v2492
    %v2497 = vadd.f32 %v1540, %v2493
    %v2498 = vxor.u32 %v2496, 2147483648
    %v2499 = vxor.u32 %v2497, 2147483648
    %v2500 = vmul.f32 %v2498, 1.442695
    %v2501 = vpow.pop %v2500
    %v2502 = vmul.f32 %v2499, 1.442695
    %v2503 = vpow.pop %v2502
    %v2504 = vadd.f32 %v2501, 1.0
    %v2505 = vadd.f32 %v2503, 1.0
    %v2506 = vrcp.pop %v2504
    %v2507 = vmul.f32 1.0, %v2506
    %v2508 = vrcp.pop %v2505
    %v2509 = vmul.f32 1.0, %v2508
    %v2510 = vtanh.pop %v2496
    %v2511 = vtanh.pop %v2497
    %v2514 = vrot.slane %v2390, 7
    %v2515 = vrot.slane %v2391, 7
    %v2518 = vmul.f32 %v2507, %v2514
    %v2519 = vmul.f32 %v2509, %v2515
    %2522 = vrot.lane.b32.xlu0 %v2510, 64
    %v2523 = vpop.permute.xlu0 %2522
    %2524 = vrot.lane.b32.xlu0 %v2511, 64
    %v2525 = vpop.permute.xlu0 %2524
    %v2528 = vmul.f32 %v2507, %v2523
    %v2529 = vmul.f32 %v2509, %v2525
    %2532 = vrot.lane.b32.xlu0 %v2528, 32
    %v2533 = vpop.permute.xlu0 %2532
    %2534 = vrot.lane.b32.xlu0 %v2529, 32
    %v2535 = vpop.permute.xlu0 %2534
    %v2538 = vadd.f32 %v2518, %v2533
    %v2539 = vadd.f32 %v2519, %v2535
    %v2540 = vtanh.pop %v2538
    %v2541 = vtanh.pop %v2539
    %2544 = vrot.lane.b32.xlu0 %v2540, 64
    %v2545 = vpop.permute.xlu0 %2544
    %2546 = vrot.lane.b32.xlu0 %v2541, 64
    %v2547 = vpop.permute.xlu0 %2546
    %v2550 = vmul.f32 %v2507, %v2545
    %v2551 = vmul.f32 %v2509, %v2547
    %2554 = vrot.lane.b32.xlu0 %v2550, 32
    %v2555 = vpop.permute.xlu0 %2554
    %2556 = vrot.lane.b32.xlu0 %v2551, 32
    %v2557 = vpop.permute.xlu0 %2556
    %2560 = vst.msk [vmem:[#allocation2] sm:$0x40] %vm1293, %v2555
    %2561 = vst.msk [vmem:[#allocation2 + $0x8] sm:$0x40] %vm1293, %v2557
    %v2562 = vrot.slane %v2550, 6
    %v2563 = vrot.slane %v2551, 5
    %v2564 = vsel %vm405, %v2563, %v2562
    %2565 = vrot.lane.b32.xlu0 %v2564, 32
    %v2566 = vpop.permute.xlu0 %2565
    %v2567 = vsel %vm265, %v2566, 0
    %2569 = vmatprep.subr.mxu0 0.0
    %2570 = vmatpush1.msra.mxu0 %v1451
    %2571 = vmatprep.subr.mxu0 0.0
    %2572 = vmatpush1.msra.mxu0 %v1452
    %2573 = vmatprep.subr.mxu0 0.0
    %2574 = vmatpush1.msra.mxu0 %v1453
    %2575 = vmatprep.subr.mxu0 0.0
    %2576 = vmatpush1.msra.mxu0 %v1454
    %2577 = vmatprep.subr.mxu0 0.0
    %2578 = vmatpush1.msra.mxu0 0.0
    %2579 = vmatprep.subr.mxu0 0.0
    %2580 = vmatpush1.msra.mxu0 0.0
    %2581 = vmatprep.subr.mxu0 0.0
    %2582 = vmatpush1.msra.mxu0 0.0
    %2583 = vmatprep.subr.mxu0 0.0
    %2584 = vmatpush1.msra.mxu0 0.0
    %2585 = vmatprep.subr.mxu0 0.0
    %2586 = vmatpush1.msra.mxu0 0.0
    %2587 = vmatprep.subr.mxu0 0.0
    %2588 = vmatpush1.msra.mxu0 0.0
    %2589 = vmatprep.subr.mxu0 0.0
    %2590 = vmatpush1.msra.mxu0 0.0
    %2591 = vmatprep.subr.mxu0 0.0
    %2592 = vmatpush1.msra.mxu0 0.0
    %2593 = vmatprep.subr.mxu0 0.0
    %2594 = vmatpush1.msra.mxu0 0.0
    %2595 = vmatprep.subr.mxu0 0.0
    %2596 = vmatpush1.msra.mxu0 0.0
    %2597 = vmatprep.subr.mxu0 0.0
    %2598 = vmatpush1.msra.mxu0 0.0
    %2599 = vmatprep.subr.mxu0 0.0
    %2600 = vmatpush1.msra.mxu0 0.0
    %2601 = vmatprep.subr.mxu0 0.0
    %2602 = vmatpush1.msra.mxu0 0.0
    %2603 = vmatprep.subr.mxu0 0.0
    %2604 = vmatpush1.msra.mxu0 0.0
    %2605 = vmatprep.subr.mxu0 0.0
    %2606 = vmatpush1.msra.mxu0 0.0
    %2607 = vmatprep.subr.mxu0 0.0
    %2608 = vmatpush1.msra.mxu0 0.0
    %2609 = vmatprep.subr.mxu0 0.0
    %2610 = vmatpush1.msra.mxu0 0.0
    %2611 = vmatprep.subr.mxu0 0.0
    %2612 = vmatpush1.msra.mxu0 0.0
    %2613 = vmatprep.subr.mxu0 0.0
    %2614 = vmatpush1.msra.mxu0 0.0
    %2615 = vmatprep.subr.mxu0 0.0
    %2616 = vmatpush1.msra.mxu0 0.0
    %2617 = vmatprep.subr.mxu0 0.0
    %2618 = vmatpush1.msra.mxu0 0.0
    %2619 = vmatprep.subr.mxu0 0.0
    %2620 = vmatpush1.msra.mxu0 0.0
    %2621 = vmatprep.subr.mxu0 0.0
    %2622 = vmatpush1.msra.mxu0 0.0
    %2623 = vmatprep.subr.mxu0 0.0
    %2624 = vmatpush1.msra.mxu0 0.0
    %2625 = vmatprep.subr.mxu0 0.0
    %2626 = vmatpush1.msra.mxu0 0.0
    %2627 = vmatprep.subr.mxu0 0.0
    %2628 = vmatpush1.msra.mxu0 0.0
    %2629 = vmatprep.subr.mxu0 0.0
    %2630 = vmatpush1.msra.mxu0 0.0
    %2631 = vmatprep.subr.mxu0 0.0
    %2632 = vmatpush1.msra.mxu0 0.0
    %2633 = vmatprep.mubr.f32.mxu0 0.0
    %2634 = vmatmul.mubr.f32.gmra.mrb[0].mxu0 %v2567
    %v2635 = vpop.f32.mrb[0].mxu0
    %v2636 = vadd.f32 0.0, %v2635
    %v2637 = vpop.f32.mrb[0].mxu0
    %2638 = vdwg.mxu0
    %v2640 = vrot.slane %v2636, 1
    %v2641 = vrot.slane %v2636, 2
    %v2644 = vadd.f32 %v1535, %v2640
    %v2645 = vadd.f32 %v1540, %v2641
    %v2646 = vxor.u32 %v2644, 2147483648
    %v2647 = vxor.u32 %v2645, 2147483648
    %v2648 = vmul.f32 %v2646, 1.442695
    %v2649 = vpow.pop %v2648
    %v2650 = vmul.f32 %v2647, 1.442695
    %v2651 = vpow.pop %v2650
    %v2652 = vadd.f32 %v2649, 1.0
    %v2653 = vadd.f32 %v2651, 1.0
    %v2654 = vrcp.pop %v2652
    %v2655 = vmul.f32 1.0, %v2654
    %v2656 = vrcp.pop %v2653
    %v2657 = vmul.f32 1.0, %v2656
    %v2658 = vtanh.pop %v2644
    %v2659 = vtanh.pop %v2645
    %v2662 = vrot.slane %v2538, 7
    %v2663 = vrot.slane %v2539, 7
    %v2666 = vmul.f32 %v2655, %v2662
    %v2667 = vmul.f32 %v2657, %v2663
    %2670 = vrot.lane.b32.xlu0 %v2658, 64
    %v2671 = vpop.permute.xlu0 %2670
    %2672 = vrot.lane.b32.xlu0 %v2659, 64
    %v2673 = vpop.permute.xlu0 %2672
    %v2676 = vmul.f32 %v2655, %v2671
    %v2677 = vmul.f32 %v2657, %v2673
    %2680 = vrot.lane.b32.xlu0 %v2676, 32
    %v2681 = vpop.permute.xlu0 %2680
    %2682 = vrot.lane.b32.xlu0 %v2677, 32
    %v2683 = vpop.permute.xlu0 %2682
    %v2686 = vadd.f32 %v2666, %v2681
    %v2687 = vadd.f32 %v2667, %v2683
    %v2688 = vtanh.pop %v2686
    %v2689 = vtanh.pop %v2687
    %2692 = vrot.lane.b32.xlu0 %v2688, 64
    %v2693 = vpop.permute.xlu0 %2692
    %2694 = vrot.lane.b32.xlu0 %v2689, 64
    %v2695 = vpop.permute.xlu0 %2694
    %v2698 = vmul.f32 %v2655, %v2693
    %v2699 = vmul.f32 %v2657, %v2695
    %2702 = vrot.lane.b32.xlu0 %v2698, 32
    %v2703 = vpop.permute.xlu0 %2702
    %2704 = vrot.lane.b32.xlu0 %v2699, 32
    %v2705 = vpop.permute.xlu0 %2704
    %2708 = vst.msk [vmem:[#allocation2] sm:$0x80] %vm1442, %v2703
    %2709 = vst.msk [vmem:[#allocation2 + $0x8] sm:$0x80] %vm1442, %v2705
    %v2710 = vld [vmem:[#allocation2] sm:$0xff]
    %v2711 = vld [vmem:[#allocation2 + $0x8] sm:$0xff]
    %v2712 = vld [vmem:[%s7] sm:$0xff]
    %v2713 = vld [vmem:[%s7 + $0x8] sm:$0xff]
    %v2714 = vld [vmem:[%s7 + $0x10] sm:$0xff]
    %v2715 = vld [vmem:[%s7 + $0x18] sm:$0xff]
    %v2716 = vld [vmem:[#allocation11] sm:$0xff]
    %v2717 = vld [vmem:[#allocation11 + $0x8] sm:$0xff]
    %v2718 = vld [vmem:[#allocation11 + $0x10] sm:$0xff]
    %v2719 = vld [vmem:[#allocation11 + $0x18] sm:$0xff]
    %v2720 = vld [vmem:[#allocation12] sm:$0xff]
    %v2721 = vld [vmem:[#allocation12 + $0x8] sm:$0xff]
    %v2722 = vld [vmem:[#allocation12 + $0x10] sm:$0xff]
    %v2723 = vld [vmem:[#allocation12 + $0x18] sm:$0xff]
    %v2724 = vld [vmem:[%s17] sm:$0xff]
    %v2725 = vld [vmem:[%s17 + $0x8] sm:$0xff]
    %v2726 = vld [vmem:[%s17 + $0x10] sm:$0xff]
    %v2727 = vld [vmem:[%s17 + $0x18] sm:$0xff]
    %v2728 = vld [vmem:[%s18] sm:$0xf]
    %v2729 = vld [vmem:[%s11] sm:$0x1]
    %v2731 = vlaneseq
    %v2732 = vshrl.u32 %v2731, 7
    %v2733 = vsub.s32 0, %v2732
    %v2734 = vrot.slane %v2729, %v2733
    %v2737 = vsel %vm265, %v2710, 0
    %v2740 = vsel %vm265, %v2711, 0
    %2742 = vmatprep.subr.mxu0 0.0
    %2743 = vmatpush1.msra.mxu0 %v2716
    %2744 = vmatprep.subr.mxu0 0.0
    %2745 = vmatpush1.msra.mxu0 %v2717
    %2746 = vmatprep.subr.mxu0 0.0
    %2747 = vmatpush1.msra.mxu0 %v2718
    %2748 = vmatprep.subr.mxu0 0.0
    %2749 = vmatpush1.msra.mxu0 %v2719
    %2750 = vmatprep.subr.mxu0 0.0
    %2751 = vmatpush1.msra.mxu0 0.0
    %2752 = vmatprep.subr.mxu0 0.0
    %2753 = vmatpush1.msra.mxu0 0.0
    %2754 = vmatprep.subr.mxu0 0.0
    %2755 = vmatpush1.msra.mxu0 0.0
    %2756 = vmatprep.subr.mxu0 0.0
    %2757 = vmatpush1.msra.mxu0 0.0
    %2758 = vmatprep.subr.mxu0 0.0
    %2759 = vmatpush1.msra.mxu0 0.0
    %2760 = vmatprep.subr.mxu0 0.0
    %2761 = vmatpush1.msra.mxu0 0.0
    %2762 = vmatprep.subr.mxu0 0.0
    %2763 = vmatpush1.msra.mxu0 0.0
    %2764 = vmatprep.subr.mxu0 0.0
    %2765 = vmatpush1.msra.mxu0 0.0
    %2766 = vmatprep.subr.mxu0 0.0
    %2767 = vmatpush1.msra.mxu0 0.0
    %2768 = vmatprep.subr.mxu0 0.0
    %2769 = vmatpush1.msra.mxu0 0.0
    %2770 = vmatprep.subr.mxu0 0.0
    %2771 = vmatpush1.msra.mxu0 0.0
    %2772 = vmatprep.subr.mxu0 0.0
    %2773 = vmatpush1.msra.mxu0 0.0
    %2774 = vmatprep.subr.mxu0 0.0
    %2775 = vmatpush1.msra.mxu0 0.0
    %2776 = vmatprep.subr.mxu0 0.0
    %2777 = vmatpush1.msra.mxu0 0.0
    %2778 = vmatprep.subr.mxu0 0.0
    %2779 = vmatpush1.msra.mxu0 0.0
    %2780 = vmatprep.subr.mxu0 0.0
    %2781 = vmatpush1.msra.mxu0 0.0
    %2782 = vmatprep.subr.mxu0 0.0
    %2783 = vmatpush1.msra.mxu0 0.0
    %2784 = vmatprep.subr.mxu0 0.0
    %2785 = vmatpush1.msra.mxu0 0.0
    %2786 = vmatprep.subr.mxu0 0.0
    %2787 = vmatpush1.msra.mxu0 0.0
    %2788 = vmatprep.subr.mxu0 0.0
    %2789 = vmatpush1.msra.mxu0 0.0
    %2790 = vmatprep.subr.mxu0 0.0
    %2791 = vmatpush1.msra.mxu0 0.0
    %2792 = vmatprep.subr.mxu0 0.0
    %2793 = vmatpush1.msra.mxu0 0.0
    %2794 = vmatprep.subr.mxu0 0.0
    %2795 = vmatpush1.msra.mxu0 0.0
    %2796 = vmatprep.subr.mxu0 0.0
    %2797 = vmatpush1.msra.mxu0 0.0
    %2798 = vmatprep.subr.mxu0 0.0
    %2799 = vmatpush1.msra.mxu0 0.0
    %2800 = vmatprep.subr.mxu0 0.0
    %2801 = vmatpush1.msra.mxu0 0.0
    %2802 = vmatprep.subr.mxu0 0.0
    %2803 = vmatpush1.msra.mxu0 0.0
    %2804 = vmatprep.subr.mxu0 0.0
    %2805 = vmatpush1.msra.mxu0 0.0
    %2806 = vmatprep.mubr.f32.mxu0 0.0
    %2807 = vmatmul.mubr.f32.gmra.mrb[0].mxu0 %v2737
    %v2808 = vpop.f32.mrb[0].mxu0
    %v2809 = vadd.f32 %v2734, %v2808
    %v2810 = vpop.f32.mrb[0].mxu0
    %2811 = vmatprep.mubr.f32.mxu0 0.0
    %2812 = vmatmul.mubr.f32.gmra.mrb[0].mxu0 %v2740
    %v2813 = vpop.f32.mrb[0].mxu0
    %v2814 = vadd.f32 %v2734, %v2813
    %v2815 = vpop.f32.mrb[0].mxu0
    %2816 = vdwg.mxu0
    %v2817 = vld [vmem:[%s12] sm:$0x1]
    %v2819 = vlaneseq
    %v2820 = vshrl.u32 %v2819, 7
    %v2821 = vsub.s32 0, %v2820
    %v2822 = vrot.slane %v2817, %v2821
    %2824 = vmatprep.subr.mxu0 0.0
    %2825 = vmatpush1.msra.mxu0 %v2720
    %2826 = vmatprep.subr.mxu0 0.0
    %2827 = vmatpush1.msra.mxu0 %v2721
    %2828 = vmatprep.subr.mxu0 0.0
    %2829 = vmatpush1.msra.mxu0 %v2722
    %2830 = vmatprep.subr.mxu0 0.0
    %2831 = vmatpush1.msra.mxu0 %v2723
    %2832 = vmatprep.subr.mxu0 0.0
    %2833 = vmatpush1.msra.mxu0 0.0
    %2834 = vmatprep.subr.mxu0 0.0
    %2835 = vmatpush1.msra.mxu0 0.0
    %2836 = vmatprep.subr.mxu0 0.0
    %2837 = vmatpush1.msra.mxu0 0.0
    %2838 = vmatprep.subr.mxu0 0.0
    %2839 = vmatpush1.msra.mxu0 0.0
    %2840 = vmatprep.subr.mxu0 0.0
    %2841 = vmatpush1.msra.mxu0 0.0
    %2842 = vmatprep.subr.mxu0 0.0
    %2843 = vmatpush1.msra.mxu0 0.0
    %2844 = vmatprep.subr.mxu0 0.0
    %2845 = vmatpush1.msra.mxu0 0.0
    %2846 = vmatprep.subr.mxu0 0.0
    %2847 = vmatpush1.msra.mxu0 0.0
    %2848 = vmatprep.subr.mxu0 0.0
    %2849 = vmatpush1.msra.mxu0 0.0
    %2850 = vmatprep.subr.mxu0 0.0
    %2851 = vmatpush1.msra.mxu0 0.0
    %2852 = vmatprep.subr.mxu0 0.0
    %2853 = vmatpush1.msra.mxu0 0.0
    %2854 = vmatprep.subr.mxu0 0.0
    %2855 = vmatpush1.msra.mxu0 0.0
    %2856 = vmatprep.subr.mxu0 0.0
    %2857 = vmatpush1.msra.mxu0 0.0
    %2858 = vmatprep.subr.mxu0 0.0
    %2859 = vmatpush1.msra.mxu0 0.0
    %2860 = vmatprep.subr.mxu0 0.0
    %2861 = vmatpush1.msra.mxu0 0.0
    %2862 = vmatprep.subr.mxu0 0.0
    %2863 = vmatpush1.msra.mxu0 0.0
    %2864 = vmatprep.subr.mxu0 0.0
    %2865 = vmatpush1.msra.mxu0 0.0
    %2866 = vmatprep.subr.mxu0 0.0
    %2867 = vmatpush1.msra.mxu0 0.0
    %2868 = vmatprep.subr.mxu0 0.0
    %2869 = vmatpush1.msra.mxu0 0.0
    %2870 = vmatprep.subr.mxu0 0.0
    %2871 = vmatpush1.msra.mxu0 0.0
    %2872 = vmatprep.subr.mxu0 0.0
    %2873 = vmatpush1.msra.mxu0 0.0
    %2874 = vmatprep.subr.mxu0 0.0
    %2875 = vmatpush1.msra.mxu0 0.0
    %2876 = vmatprep.subr.mxu0 0.0
    %2877 = vmatpush1.msra.mxu0 0.0
    %2878 = vmatprep.subr.mxu0 0.0
    %2879 = vmatpush1.msra.mxu0 0.0
    %2880 = vmatprep.subr.mxu0 0.0
    %2881 = vmatpush1.msra.mxu0 0.0
    %2882 = vmatprep.subr.mxu0 0.0
    %2883 = vmatpush1.msra.mxu0 0.0
    %2884 = vmatprep.subr.mxu0 0.0
    %2885 = vmatpush1.msra.mxu0 0.0
    %2886 = vmatprep.subr.mxu0 0.0
    %2887 = vmatpush1.msra.mxu0 0.0
    %2888 = vmatprep.mubr.f32.mxu0 0.0
    %2889 = vmatmul.mubr.f32.gmra.mrb[0].mxu0 %v2737
    %v2890 = vpop.f32.mrb[0].mxu0
    %v2891 = vadd.f32 %v2822, %v2890
    %v2892 = vpop.f32.mrb[0].mxu0
    %2893 = vmatprep.mubr.f32.mxu0 0.0
    %2894 = vmatmul.mubr.f32.gmra.mrb[0].mxu0 %v2740
    %v2895 = vpop.f32.mrb[0].mxu0
    %v2896 = vadd.f32 %v2822, %v2895
    %v2897 = vpop.f32.mrb[0].mxu0
    %2898 = vdwg.mxu0
    %v2899 = vld [vmem:[#allocation14] sm:$0x1]
    %v2901 = vlaneseq
    %v2902 = vshrl.u32 %v2901, 7
    %v2903 = vsub.s32 0, %v2902
    %v2904 = vrot.slane %v2899, %v2903
    %v2906 = vrot.slane %v2710, 7
    %v2907 = vrot.slane %v2711, 6
    %v2908 = vsel %vm405, %v2907, %v2906
    %v2909 = vsel %vm265, %v2908, 0
    %2911 = vmatprep.subr.mxu0 0.0
    %2912 = vmatpush1.msra.mxu0 %v2712
    %2913 = vmatprep.subr.mxu0 0.0
    %2914 = vmatpush1.msra.mxu0 %v2713
    %2915 = vmatprep.subr.mxu0 0.0
    %2916 = vmatpush1.msra.mxu0 %v2714
    %2917 = vmatprep.subr.mxu0 0.0
    %2918 = vmatpush1.msra.mxu0 %v2715
    %2919 = vmatprep.subr.mxu0 0.0
    %2920 = vmatpush1.msra.mxu0 0.0
    %2921 = vmatprep.subr.mxu0 0.0
    %2922 = vmatpush1.msra.mxu0 0.0
    %2923 = vmatprep.subr.mxu0 0.0
    %2924 = vmatpush1.msra.mxu0 0.0
    %2925 = vmatprep.subr.mxu0 0.0
    %2926 = vmatpush1.msra.mxu0 0.0
    %2927 = vmatprep.subr.mxu0 0.0
    %2928 = vmatpush1.msra.mxu0 0.0
    %2929 = vmatprep.subr.mxu0 0.0
    %2930 = vmatpush1.msra.mxu0 0.0
    %2931 = vmatprep.subr.mxu0 0.0
    %2932 = vmatpush1.msra.mxu0 0.0
    %2933 = vmatprep.subr.mxu0 0.0
    %2934 = vmatpush1.msra.mxu0 0.0
    %2935 = vmatprep.subr.mxu0 0.0
    %2936 = vmatpush1.msra.mxu0 0.0
    %2937 = vmatprep.subr.mxu0 0.0
    %2938 = vmatpush1.msra.mxu0 0.0
    %2939 = vmatprep.subr.mxu0 0.0
    %2940 = vmatpush1.msra.mxu0 0.0
    %2941 = vmatprep.subr.mxu0 0.0
    %2942 = vmatpush1.msra.mxu0 0.0
    %2943 = vmatprep.subr.mxu0 0.0
    %2944 = vmatpush1.msra.mxu0 0.0
    %2945 = vmatprep.subr.mxu0 0.0
    %2946 = vmatpush1.msra.mxu0 0.0
    %2947 = vmatprep.subr.mxu0 0.0
    %2948 = vmatpush1.msra.mxu0 0.0
    %2949 = vmatprep.subr.mxu0 0.0
    %2950 = vmatpush1.msra.mxu0 0.0
    %2951 = vmatprep.subr.mxu0 0.0
    %2952 = vmatpush1.msra.mxu0 0.0
    %2953 = vmatprep.subr.mxu0 0.0
    %2954 = vmatpush1.msra.mxu0 0.0
    %2955 = vmatprep.subr.mxu0 0.0
    %2956 = vmatpush1.msra.mxu0 0.0
    %2957 = vmatprep.subr.mxu0 0.0
    %2958 = vmatpush1.msra.mxu0 0.0
    %2959 = vmatprep.subr.mxu0 0.0
    %2960 = vmatpush1.msra.mxu0 0.0
    %2961 = vmatprep.subr.mxu0 0.0
    %2962 = vmatpush1.msra.mxu0 0.0
    %2963 = vmatprep.subr.mxu0 0.0
    %2964 = vmatpush1.msra.mxu0 0.0
    %2965 = vmatprep.subr.mxu0 0.0
    %2966 = vmatpush1.msra.mxu0 0.0
    %2967 = vmatprep.subr.mxu0 0.0
    %2968 = vmatpush1.msra.mxu0 0.0
    %2969 = vmatprep.subr.mxu0 0.0
    %2970 = vmatpush1.msra.mxu0 0.0
    %2971 = vmatprep.subr.mxu0 0.0
    %2972 = vmatpush1.msra.mxu0 0.0
    %2973 = vmatprep.subr.mxu0 0.0
    %2974 = vmatpush1.msra.mxu0 0.0
    %2975 = vmatprep.mubr.f32.mxu0 0.0
    %2976 = vmatmul.mubr.f32.gmra.mrb[0].mxu0 %v2909
    %v2977 = vpop.f32.mrb[0].mxu0
    %v2978 = vadd.f32 %v2904, %v2977
    %v2979 = vpop.f32.mrb[0].mxu0
    %2980 = vdwg.mxu0
    %v2981 = vmul.f32 %v2978, 0.35355338
    %v2984 = vunpack.c.l.s4 1966171168
    %v2985 = vunpack.c.0.s8 %v2984
    %v2986 = vlaneseq
    %v2987 = vshrl.u32 %v2986, 7
    %v2988 = vsub.s32 %v2985, %v2987
    %v2989 = vrot.slane %v2981, %v2988
    %v2990 = vcombine.high %v2989, %v2989
    %v2992 = vunpack.c.l.s4 1966171168
    %v2993 = vunpack.c.0.s8 %v2992
    %v2994 = vlaneseq
    %v2995 = vshrl.u32 %v2994, 7
    %v2996 = vsub.s32 %v2993, %v2995
    %v2997 = vrot.slane %v2989, %v2996
    %v2999 = vunpack.c.l.s4 1966171168
    %v3000 = vunpack.c.0.s8 %v2999
    %v3001 = vlaneseq
    %v3002 = vshrl.u32 %v3001, 7
    %v3003 = vsub.s32 %v3000, %v3002
    %v3004 = vrot.slane %v2990, %v3003
    %v3005 = vlaneseq
    %v3006 = vshrl.u32 %v3005, 7
    %v3007 = vsub.s32 0, %v3006
    %v3008 = vrot.slane %v2997, %v3007
    %v3009 = vlaneseq
    %v3010 = vshrl.u32 %v3009, 7
    %v3011 = vsub.s32 0, %v3010
    %v3012 = vrot.slane %v3004, %v3011
    %v3015 = vmul.f32 %v3008, %v2809
    %v3016 = vmul.f32 %v3012, %v2814
    %v3018 = vsel %vm265, %v3015, 0
    %v3021 = vsel %vm265, %v3016, 0
    %3023 = vmatprep.subr.mxu0 0.0
    %3024 = vmatpush1.msra.mxu0 %v2724
    %3025 = vmatprep.subr.mxu0 0.0
    %3026 = vmatpush1.msra.mxu0 %v2725
    %3027 = vmatprep.subr.mxu0 0.0
    %3028 = vmatpush1.msra.mxu0 %v2726
    %3029 = vmatprep.subr.mxu0 0.0
    %3030 = vmatpush1.msra.mxu0 %v2727
    %3031 = vmatprep.subr.mxu0 0.0
    %3032 = vmatpush1.msra.mxu0 0.0
    %3033 = vmatprep.subr.mxu0 0.0
    %3034 = vmatpush1.msra.mxu0 0.0
    %3035 = vmatprep.subr.mxu0 0.0
    %3036 = vmatpush1.msra.mxu0 0.0
    %3037 = vmatprep.subr.mxu0 0.0
    %3038 = vmatpush1.msra.mxu0 0.0
    %3039 = vmatprep.subr.mxu0 0.0
    %3040 = vmatpush1.msra.mxu0 0.0
    %3041 = vmatprep.subr.mxu0 0.0
    %3042 = vmatpush1.msra.mxu0 0.0
    %3043 = vmatprep.subr.mxu0 0.0
    %3044 = vmatpush1.msra.mxu0 0.0
    %3045 = vmatprep.subr.mxu0 0.0
    %3046 = vmatpush1.msra.mxu0 0.0
    %3047 = vmatprep.subr.mxu0 0.0
    %3048 = vmatpush1.msra.mxu0 0.0
    %3049 = vmatprep.subr.mxu0 0.0
    %3050 = vmatpush1.msra.mxu0 0.0
    %3051 = vmatprep.subr.mxu0 0.0
    %3052 = vmatpush1.msra.mxu0 0.0
    %3053 = vmatprep.subr.mxu0 0.0
    %3054 = vmatpush1.msra.mxu0 0.0
    %3055 = vmatprep.subr.mxu0 0.0
    %3056 = vmatpush1.msra.mxu0 0.0
    %3057 = vmatprep.subr.mxu0 0.0
    %3058 = vmatpush1.msra.mxu0 0.0
    %3059 = vmatprep.subr.mxu0 0.0
    %3060 = vmatpush1.msra.mxu0 0.0
    %3061 = vmatprep.subr.mxu0 0.0
    %3062 = vmatpush1.msra.mxu0 0.0
    %3063 = vmatprep.subr.mxu0 0.0
    %3064 = vmatpush1.msra.mxu0 0.0
    %3065 = vmatprep.subr.mxu0 0.0
    %3066 = vmatpush1.msra.mxu0 0.0
    %3067 = vmatprep.subr.mxu0 0.0
    %3068 = vmatpush1.msra.mxu0 0.0
    %3069 = vmatprep.subr.mxu0 0.0
    %3070 = vmatpush1.msra.mxu0 0.0
    %3071 = vmatprep.subr.mxu0 0.0
    %3072 = vmatpush1.msra.mxu0 0.0
    %3073 = vmatprep.subr.mxu0 0.0
    %3074 = vmatpush1.msra.mxu0 0.0
    %3075 = vmatprep.subr.mxu0 0.0
    %3076 = vmatpush1.msra.mxu0 0.0
    %3077 = vmatprep.subr.mxu0 0.0
    %3078 = vmatpush1.msra.mxu0 0.0
    %3079 = vmatprep.subr.mxu0 0.0
    %3080 = vmatpush1.msra.mxu0 0.0
    %3081 = vmatprep.subr.mxu0 0.0
    %3082 = vmatpush1.msra.mxu0 0.0
    %3083 = vmatprep.subr.mxu0 0.0
    %3084 = vmatpush1.msra.mxu0 0.0
    %3085 = vmatprep.subr.mxu0 0.0
    %3086 = vmatpush1.msra.mxu0 0.0
    %3087 = vmatprep.mubr.f32.mxu0 0.0
    %3088 = vmatmul.mubr.f32.gmra.mrb[0].mxu0 %v3018
    %v3089 = vpop.f32.mrb[0].mxu0
    %v3090 = vadd.f32 0.0, %v3089
    %v3091 = vpop.f32.mrb[0].mxu0
    %3092 = vmatprep.mubr.f32.mxu0 0.0
    %3093 = vmatmul.mubr.f32.gmra.mrb[0].mxu0 %v3021
    %v3094 = vpop.f32.mrb[0].mxu0
    %v3095 = vadd.f32 0.0, %v3094
    %v3096 = vpop.f32.mrb[0].mxu0
    %3097 = vdwg.mxu0
    %vm3098 = vcmask 31744
    %v3099 = vsel %vm3098, %v3090, -inf
    %v3100 = vrot.slane %v3099, 4
    %v3101 = vmax.f32 %v3099, %v3100
    %v3102 = vrot.slane %v3101, 2
    %v3103 = vmax.f32 %v3101, %v3102
    %v3104 = vrot.slane %v3103, 1
    %v3105 = vmax.f32 %v3103, %v3104
    %v3106 = vsel %vm3098, %v3095, -inf
    %v3107 = vrot.slane %v3106, 4
    %v3108 = vmax.f32 %v3106, %v3107
    %v3109 = vrot.slane %v3108, 2
    %v3110 = vmax.f32 %v3108, %v3109
    %v3111 = vrot.slane %v3110, 1
    %v3112 = vmax.f32 %v3110, %v3111
    %v3113 = vsub.f32 %v3090, %v3105
    %v3114 = vsub.f32 %v3095, %v3112
    %v3115 = vmul.f32 %v3113, 1.442695
    %v3116 = vpow.pop %v3115
    %v3117 = vmul.f32 %v3114, 1.442695
    %v3118 = vpow.pop %v3117
    %v3119 = vsel %vm3098, %v3116, 0.0
    %v3120 = vrot.slane %v3119, 4
    %v3121 = vadd.f32 %v3119, %v3120
    %v3122 = vrot.slane %v3121, 2
    %v3123 = vadd.f32 %v3121, %v3122
    %v3124 = vrot.slane %v3123, 1
    %v3125 = vadd.f32 %v3123, %v3124
    %v3126 = vsel %vm3098, %v3118, 0.0
    %v3127 = vrot.slane %v3126, 4
    %v3128 = vadd.f32 %v3126, %v3127
    %v3129 = vrot.slane %v3128, 2
    %v3130 = vadd.f32 %v3128, %v3129
    %v3131 = vrot.slane %v3130, 1
    %v3132 = vadd.f32 %v3130, %v3131
    %v3133 = vrcp.pop %v3125
    %v3134 = vmul.f32 %v3116, %v3133
    %v3135 = vrcp.pop %v3132
    %v3136 = vmul.f32 %v3118, %v3135
    %v3138 = vsel %vm3098, %v3134, 0
    %v3141 = vsel %vm3098, %v3136, 0
    %vm3143 = vcmask 1043456
    %v3145 = vsel %vm3143, %v2728, 0
    %3147 = vmatprep.subr.mxu0 0.0
    %3148 = vmatpush1.msra.mxu0 %v3145
    %3149 = vmatprep.subr.mxu0 0.0
    %3150 = vmatpush1.msra.mxu0 0.0
    %3151 = vmatprep.subr.mxu0 0.0
    %3152 = vmatpush1.msra.mxu0 0.0
    %3153 = vmatprep.subr.mxu0 0.0
    %3154 = vmatpush1.msra.mxu0 0.0
    %3155 = vmatprep.subr.mxu0 0.0
    %3156 = vmatpush1.msra.mxu0 0.0
    %3157 = vmatprep.subr.mxu0 0.0
    %3158 = vmatpush1.msra.mxu0 0.0
    %3159 = vmatprep.subr.mxu0 0.0
    %3160 = vmatpush1.msra.mxu0 0.0
    %3161 = vmatprep.subr.mxu0 0.0
    %3162 = vmatpush1.msra.mxu0 0.0
    %3163 = vmatprep.subr.mxu0 0.0
    %3164 = vmatpush1.msra.mxu0 0.0
    %3165 = vmatprep.subr.mxu0 0.0
    %3166 = vmatpush1.msra.mxu0 0.0
    %3167 = vmatprep.subr.mxu0 0.0
    %3168 = vmatpush1.msra.mxu0 0.0
    %3169 = vmatprep.subr.mxu0 0.0
    %3170 = vmatpush1.msra.mxu0 0.0
    %3171 = vmatprep.subr.mxu0 0.0
    %3172 = vmatpush1.msra.mxu0 0.0
    %3173 = vmatprep.subr.mxu0 0.0
    %3174 = vmatpush1.msra.mxu0 0.0
    %3175 = vmatprep.subr.mxu0 0.0
    %3176 = vmatpush1.msra.mxu0 0.0
    %3177 = vmatprep.subr.mxu0 0.0
    %3178 = vmatpush1.msra.mxu0 0.0
    %3179 = vmatprep.subr.mxu0 0.0
    %3180 = vmatpush1.msra.mxu0 0.0
    %3181 = vmatprep.subr.mxu0 0.0
    %3182 = vmatpush1.msra.mxu0 0.0
    %3183 = vmatprep.subr.mxu0 0.0
    %3184 = vmatpush1.msra.mxu0 0.0
    %3185 = vmatprep.subr.mxu0 0.0
    %3186 = vmatpush1.msra.mxu0 0.0
    %3187 = vmatprep.subr.mxu0 0.0
    %3188 = vmatpush1.msra.mxu0 0.0
    %3189 = vmatprep.subr.mxu0 0.0
    %3190 = vmatpush1.msra.mxu0 0.0
    %3191 = vmatprep.subr.mxu0 0.0
    %3192 = vmatpush1.msra.mxu0 0.0
    %3193 = vmatprep.subr.mxu0 0.0
    %3194 = vmatpush1.msra.mxu0 0.0
    %3195 = vmatprep.subr.mxu0 0.0
    %3196 = vmatpush1.msra.mxu0 0.0
    %3197 = vmatprep.subr.mxu0 0.0
    %3198 = vmatpush1.msra.mxu0 0.0
    %3199 = vmatprep.subr.mxu0 0.0
    %3200 = vmatpush1.msra.mxu0 0.0
    %3201 = vmatprep.subr.mxu0 0.0
    %3202 = vmatpush1.msra.mxu0 0.0
    %3203 = vmatprep.subr.mxu0 0.0
    %3204 = vmatpush1.msra.mxu0 0.0
    %3205 = vmatprep.subr.mxu0 0.0
    %3206 = vmatpush1.msra.mxu0 0.0
    %3207 = vmatprep.subr.mxu0 0.0
    %3208 = vmatpush1.msra.mxu0 0.0
    %3209 = vmatprep.subr.mxu0 0.0
    %3210 = vmatpush1.msra.mxu0 0.0
    %3211 = vmatprep.mubr.f32.mxu0 0.0
    %3212 = vmatmul.mubr.f32.gmra.mrb[0].mxu0 %v3138
    %v3213 = vpop.f32.mrb[0].mxu0
    %v3214 = vadd.f32 0.0, %v3213
    %v3215 = vpop.f32.mrb[0].mxu0
    %3216 = vmatprep.mubr.f32.mxu0 0.0
    %3217 = vmatmul.mubr.f32.gmra.mrb[0].mxu0 %v3141
    %v3218 = vpop.f32.mrb[0].mxu0
    %v3219 = vadd.f32 0.0, %v3218
    %v3220 = vpop.f32.mrb[0].mxu0
    %3221 = vdwg.mxu0
    %v3222 = vmul.f32 %v3214, %v2891
    %v3223 = vmul.f32 %v3219, %v2896
    %v3224 = vsel %vm265, %v3222, 0.0
    %v3225 = vrot.slane %v3224, 4
    %v3226 = vadd.f32 %v3224, %v3225
    %v3227 = vrot.slane %v3226, 2
    %v3228 = vadd.f32 %v3226, %v3227
    %v3229 = vrot.slane %v3228, 1
    %v3230 = vadd.f32 %v3228, %v3229
    %v3231 = vsel %vm265, %v3223, 0.0
    %v3232 = vrot.slane %v3231, 4
    %v3233 = vadd.f32 %v3231, %v3232
    %v3234 = vrot.slane %v3233, 2
    %v3235 = vadd.f32 %v3233, %v3234
    %v3236 = vrot.slane %v3235, 1
    %v3237 = vadd.f32 %v3235, %v3236
    %v3238 = vld [vmem:[#allocation15] sm:$0xff]
    %v3239 = vld [vmem:[#allocation15 + $0x8] sm:$0xff]
    %v3240 = vld [vmem:[#allocation15 + $0x10] sm:$0xff]
    %v3241 = vld [vmem:[#allocation15 + $0x18] sm:$0xff]
    %v3242 = vld [vmem:[%s14] sm:$0x1]
    %v3244 = vlaneseq
    %v3245 = vshrl.u32 %v3244, 7
    %v3246 = vsub.s32 0, %v3245
    %v3247 = vrot.slane %v3242, %v3246
    %v3251 = vsel %vm405, %v3237, %v3230
    %v3252 = vsel %vm265, %v3251, 0
    %3254 = vmatprep.subr.mxu0 0.0
    %3255 = vmatpush1.msra.mxu0 %v3238
    %3256 = vmatprep.subr.mxu0 0.0
    %3257 = vmatpush1.msra.mxu0 %v3239
    %3258 = vmatprep.subr.mxu0 0.0
    %3259 = vmatpush1.msra.mxu0 %v3240
    %3260 = vmatprep.subr.mxu0 0.0
    %3261 = vmatpush1.msra.mxu0 %v3241
    %3262 = vmatprep.subr.mxu0 0.0
    %3263 = vmatpush1.msra.mxu0 0.0
    %3264 = vmatprep.subr.mxu0 0.0
    %3265 = vmatpush1.msra.mxu0 0.0
    %3266 = vmatprep.subr.mxu0 0.0
    %3267 = vmatpush1.msra.mxu0 0.0
    %3268 = vmatprep.subr.mxu0 0.0
    %3269 = vmatpush1.msra.mxu0 0.0
    %3270 = vmatprep.subr.mxu0 0.0
    %3271 = vmatpush1.msra.mxu0 0.0
    %3272 = vmatprep.subr.mxu0 0.0
    %3273 = vmatpush1.msra.mxu0 0.0
    %3274 = vmatprep.subr.mxu0 0.0
    %3275 = vmatpush1.msra.mxu0 0.0
    %3276 = vmatprep.subr.mxu0 0.0
    %3277 = vmatpush1.msra.mxu0 0.0
    %3278 = vmatprep.subr.mxu0 0.0
    %3279 = vmatpush1.msra.mxu0 0.0
    %3280 = vmatprep.subr.mxu0 0.0
    %3281 = vmatpush1.msra.mxu0 0.0
    %3282 = vmatprep.subr.mxu0 0.0
    %3283 = vmatpush1.msra.mxu0 0.0
    %3284 = vmatprep.subr.mxu0 0.0
    %3285 = vmatpush1.msra.mxu0 0.0
    %3286 = vmatprep.subr.mxu0 0.0
    %3287 = vmatpush1.msra.mxu0 0.0
    %3288 = vmatprep.subr.mxu0 0.0
    %3289 = vmatpush1.msra.mxu0 0.0
    %3290 = vmatprep.subr.mxu0 0.0
    %3291 = vmatpush1.msra.mxu0 0.0
    %3292 = vmatprep.subr.mxu0 0.0
    %3293 = vmatpush1.msra.mxu0 0.0
    %3294 = vmatprep.subr.mxu0 0.0
    %3295 = vmatpush1.msra.mxu0 0.0
    %3296 = vmatprep.subr.mxu0 0.0
    %3297 = vmatpush1.msra.mxu0 0.0
    %3298 = vmatprep.subr.mxu0 0.0
    %3299 = vmatpush1.msra.mxu0 0.0
    %3300 = vmatprep.subr.mxu0 0.0
    %3301 = vmatpush1.msra.mxu0 0.0
    %3302 = vmatprep.subr.mxu0 0.0
    %3303 = vmatpush1.msra.mxu0 0.0
    %3304 = vmatprep.subr.mxu0 0.0
    %3305 = vmatpush1.msra.mxu0 0.0
    %3306 = vmatprep.subr.mxu0 0.0
    %3307 = vmatpush1.msra.mxu0 0.0
    %3308 = vmatprep.subr.mxu0 0.0
    %3309 = vmatpush1.msra.mxu0 0.0
    %3310 = vmatprep.subr.mxu0 0.0
    %3311 = vmatpush1.msra.mxu0 0.0
    %3312 = vmatprep.subr.mxu0 0.0
    %3313 = vmatpush1.msra.mxu0 0.0
    %3314 = vmatprep.subr.mxu0 0.0
    %3315 = vmatpush1.msra.mxu0 0.0
    %3316 = vmatprep.subr.mxu0 0.0
    %3317 = vmatpush1.msra.mxu0 0.0
    %3318 = vmatprep.mubr.f32.mxu0 0.0
    %3319 = vmatmul.mubr.f32.gmra.mrb[0].mxu0 %v3252
    %v3320 = vpop.f32.mrb[0].mxu0
    %v3321 = vadd.f32 %v3247, %v3320
    %v3322 = vpop.f32.mrb[0].mxu0
    %3323 = vdwg.mxu0
    %v3324 = vld [vmem:[%s15] sm:$0xff]
    %v3325 = vld [vmem:[%s15 + $0x8] sm:$0xff]
    %v3326 = vld [vmem:[%s15 + $0x10] sm:$0xff]
    %v3327 = vld [vmem:[%s15 + $0x18] sm:$0xff]
    %v3328 = vld [vmem:[%s16] sm:$0x1]
    %v3330 = vlaneseq
    %v3331 = vshrl.u32 %v3330, 7
    %v3332 = vsub.s32 0, %v3331
    %v3333 = vrot.slane %v3328, %v3332
    %v3336 = vsel %vm265, %v3321, 0
    %3338 = vmatprep.subr.mxu0 0.0
    %3339 = vmatpush1.msra.mxu0 %v3324
    %3340 = vmatprep.subr.mxu0 0.0
    %3341 = vmatpush1.msra.mxu0 %v3325
    %3342 = vmatprep.subr.mxu0 0.0
    %3343 = vmatpush1.msra.mxu0 %v3326
    %3344 = vmatprep.subr.mxu0 0.0
    %3345 = vmatpush1.msra.mxu0 %v3327
    %3346 = vmatprep.subr.mxu0 0.0
    %3347 = vmatpush1.msra.mxu0 0.0
    %3348 = vmatprep.subr.mxu0 0.0
    %3349 = vmatpush1.msra.mxu0 0.0
    %3350 = vmatprep.subr.mxu0 0.0
    %3351 = vmatpush1.msra.mxu0 0.0
    %3352 = vmatprep.subr.mxu0 0.0
    %3353 = vmatpush1.msra.mxu0 0.0
    %3354 = vmatprep.subr.mxu0 0.0
    %3355 = vmatpush1.msra.mxu0 0.0
    %3356 = vmatprep.subr.mxu0 0.0
    %3357 = vmatpush1.msra.mxu0 0.0
    %3358 = vmatprep.subr.mxu0 0.0
    %3359 = vmatpush1.msra.mxu0 0.0
    %3360 = vmatprep.subr.mxu0 0.0
    %3361 = vmatpush1.msra.mxu0 0.0
    %3362 = vmatprep.subr.mxu0 0.0
    %3363 = vmatpush1.msra.mxu0 0.0
    %3364 = vmatprep.subr.mxu0 0.0
    %3365 = vmatpush1.msra.mxu0 0.0
    %3366 = vmatprep.subr.mxu0 0.0
    %3367 = vmatpush1.msra.mxu0 0.0
    %3368 = vmatprep.subr.mxu0 0.0
    %3369 = vmatpush1.msra.mxu0 0.0
    %3370 = vmatprep.subr.mxu0 0.0
    %3371 = vmatpush1.msra.mxu0 0.0
    %3372 = vmatprep.subr.mxu0 0.0
    %3373 = vmatpush1.msra.mxu0 0.0
    %3374 = vmatprep.subr.mxu0 0.0
    %3375 = vmatpush1.msra.mxu0 0.0
    %3376 = vmatprep.subr.mxu0 0.0
    %3377 = vmatpush1.msra.mxu0 0.0
    %3378 = vmatprep.subr.mxu0 0.0
    %3379 = vmatpush1.msra.mxu0 0.0
    %3380 = vmatprep.subr.mxu0 0.0
    %3381 = vmatpush1.msra.mxu0 0.0
    %3382 = vmatprep.subr.mxu0 0.0
    %3383 = vmatpush1.msra.mxu0 0.0
    %3384 = vmatprep.subr.mxu0 0.0
    %3385 = vmatpush1.msra.mxu0 0.0
    %3386 = vmatprep.subr.mxu0 0.0
    %3387 = vmatpush1.msra.mxu0 0.0
    %3388 = vmatprep.subr.mxu0 0.0
    %3389 = vmatpush1.msra.mxu0 0.0
    %3390 = vmatprep.subr.mxu0 0.0
    %3391 = vmatpush1.msra.mxu0 0.0
    %3392 = vmatprep.subr.mxu0 0.0
    %3393 = vmatpush1.msra.mxu0 0.0
    %3394 = vmatprep.subr.mxu0 0.0
    %3395 = vmatpush1.msra.mxu0 0.0
    %3396 = vmatprep.subr.mxu0 0.0
    %3397 = vmatpush1.msra.mxu0 0.0
    %3398 = vmatprep.subr.mxu0 0.0
    %3399 = vmatpush1.msra.mxu0 0.0
    %3400 = vmatprep.subr.mxu0 0.0
    %3401 = vmatpush1.msra.mxu0 0.0
    %3402 = vmatprep.mubr.f32.mxu0 0.0
    %3403 = vmatmul.mubr.f32.gmra.mrb[0].mxu0 %v3336
    %v3404 = vpop.f32.mrb[0].mxu0
    %v3405 = vadd.f32 %v3333, %v3404
    %v3406 = vpop.f32.mrb[0].mxu0
    %3407 = vdwg.mxu0
    %vm3408 = vcmask 58368
    %3409 = vst.msk [vmem:[#allocation17] sm:$0x3] %vm3408, %v3405
    // Predicated region
    $region110: #{tpu_custom_call.1} parent=1 // pred_check
      _
    $region111: #{tpu_custom_call.1} parent=1 // pred_check_branch
      %3411 = sbr.rel (0) target = $region113
    $region112: #{tpu_custom_call.1} parent=1 // pred_region
      %s3413 = ssub.s32 32, 32
      %3414 = vsyncadd [#allocation5], %s3413
      %s3416 = sshll.u32 [#allocation17], 4
      %s3417 = int_to_ptr.vmem [resolvable:$true] %s3416
      %3419 = dma.vmem_to_hbm [thread:$0]  %s3417, 32, %s19, [#allocation5]
    $region113: #{tpu_custom_call.1} parent=1 // pred_fallthru
      _
    // Predicated region
    $region114: #{tpu_custom_call.1} parent=1 // pred_check
      _
    $region115: #{tpu_custom_call.1} parent=1 // pred_check_branch
      %3421 = sbr.rel (0) target = $region117
    $region116: #{tpu_custom_call.1} parent=1 // pred_region
      %3422 = dma.done [#allocation5], 32
    $region117: #{tpu_custom_call.1} parent=1 // pred_fallthru
      _
    %3423 = vsyncpa [#allocation4], 1
    %3424 = vsyncpa [#allocation7], 1
    %3425 = vsyncpa [#allocation10], 1
    %3426 = vsyncpa [#allocation13], 1
    %3427 = vsyncpa [#allocation16], 1
    %3428 = vsyncpa [#allocation5], 1

</llo_original>
